<compile_context>
chip_gen: v7x
topology: tpu7x:2x2x1
jax: 0.10.0
libtpu: 0.0.40
codegen_flags: <defaults>
</compile_context>

<pallas_src>
import jax
import jax.numpy as jnp
from jax.experimental import pallas as pl
from jax.experimental.pallas import tpu as pltpu

# ---- module config (shapes implied by tts ConvNet) ----
CONV1_IN = 32        # config.conv1_input_size  (residual / LN width)
CONV1_OUT = 64       # config.conv1_output_size (== conv2_input_size)
CONV2_IN = 64
CONV2_OUT = 32       # config.conv2_output_size (must equal CONV1_IN)
KERNEL = 3           # config.conv_kernel (odd -> 'same' padding)
PAD = KERNEL // 2
LN_EPS = 1e-5        # nn.LayerNorm default

F_FOLD = 4           # timesteps folded into the lane dim: 4 * 32 = 128 lanes


def _fold_conv_weight(w, f):
    """w: (K, Cin, Cout) f32 -> (3, f*Cin, f*Cout) block-Toeplitz matrices.

    Output row r of the folded layout (f timesteps per row) is
        sum_{s in -1,0,+1}  row_{r+s}(input) @ A[s+1]
    which reproduces the k-tap 'same'-padded Conv1d exactly (pad <= f).
    """
    K, cin, cout = w.shape
    pad = K // 2
    mats = []
    for s in (-1, 0, 1):
        a = jnp.zeros((f * cin, f * cout), jnp.float32)
        for j in range(f):            # output timestep within the row
            for jp in range(f):       # input timestep within the source row
                k = f * s + jp - j + pad
                if 0 <= k < K:
                    a = a.at[jp * cin:(jp + 1) * cin,
                             j * cout:(j + 1) * cout].set(
                                 w[k].astype(jnp.float32))
        mats.append(a)
    return jnp.stack(mats)            # (3, f*Cin, f*Cout)


def convnet_kernel(x_ref, a1_ref, a2_ref, m_ref, vec_ref, out_ref):
    # x_ref   : (Bb, R, W0=128)  bf16/f32 activations, 4 timesteps x 32 ch per row
    # a1_ref  : (3, W0, W1=256)  bf16 folded conv1 weights (rows r-1, r, r+1)
    # a2_ref  : (3, W1, W0)      bf16 folded conv2 weights
    # m_ref   : (W0, W0)         f32 block-diagonal group-mean matrix (1/32)
    # vec_ref : (1, W1 + 3*W0)   f32 packed [b1_wide | b2_wide | gamma_w | beta_w]
    # out_ref : (Bb, R, W0)
    Bb, R, W0 = x_ref.shape
    W1 = a1_ref.shape[-1]
    rows = Bb * R

    x32 = x_ref[...].astype(jnp.float32)            # residual path (f32)
    xb = x32.astype(jnp.bfloat16)                   # MXU operand

    def shift(a, s):
        # row r of result = row r+s of a; zero outside [0, R) per batch element
        z = jnp.zeros((Bb, 1, a.shape[-1]), a.dtype)
        if s < 0:
            return jnp.concatenate([z, a[:, :R - 1, :]], axis=1)
        return jnp.concatenate([a[:, 1:, :], z], axis=1)

    def conv(inp, a_ref):
        # inp: (Bb, R, Win) bf16; a_ref: (3, Win, Wout) bf16 -> (rows, Wout) f32
        acc = jnp.dot(inp.reshape(rows, -1), a_ref[1],
                      preferred_element_type=jnp.float32)
        acc = acc + jnp.dot(shift(inp, -1).reshape(rows, -1), a_ref[0],
                            preferred_element_type=jnp.float32)
        acc = acc + jnp.dot(shift(inp, +1).reshape(rows, -1), a_ref[2],
                            preferred_element_type=jnp.float32)
        return acc

    b1w = vec_ref[0:1, 0:W1]                        # (1, 256)
    b2w = vec_ref[0:1, W1:W1 + W0]                  # (1, 128)
    gw = vec_ref[0:1, W1 + W0:W1 + 2 * W0]          # (1, 128)
    bw = vec_ref[0:1, W1 + 2 * W0:W1 + 3 * W0]      # (1, 128)

    # ---- conv1 + ReLU (f32 accumulation, bf16 operands) ----
    h = jnp.maximum(conv(xb, a1_ref) + b1w, 0.0)    # (rows, W1)
    h3 = h.astype(jnp.bfloat16).reshape(Bb, R, W1)

    # ---- conv2 + bias + residual ----
    # TODO(synk): nn.Dropout(config.dropout) is identity at inference; no
    # pltpu.prng_* mask is generated (would be needed for training mode).
    y = conv(h3, a2_ref) + b2w + x32.reshape(rows, W0)

    # ---- per-timestep LayerNorm over its 32 channels, kept lane-dense ----
    # m_ref has 1/32 in each 32x32 diagonal block, so y @ m broadcasts every
    # timestep's channel-mean to its own 32 lanes (MXU has plenty of slack).
    m = m_ref[...]
    mean = jnp.dot(y, m, preferred_element_type=jnp.float32)
    d = y - mean
    var = jnp.dot(d * d, m, preferred_element_type=jnp.float32)
    o = d * jax.lax.rsqrt(var + LN_EPS) * gw + bw
    out_ref[...] = o.reshape(Bb, R, W0).astype(out_ref.dtype)


def convnet_forward(x, w1_pt, b1, w2_pt, b2, gamma, beta, *, block_b=None):
    """ConvNet forward.

    x      : (B, T, CONV1_IN), ideally bf16 (kernel keeps LN math in f32).
    w1_pt  : (CONV1_OUT, CONV1_IN, K)  PyTorch Conv1d weight layout.
    w2_pt  : (CONV2_OUT, CONV2_IN, K)  PyTorch Conv1d weight layout.
    b1/b2  : (CONV1_OUT,), (CONV2_OUT,);  gamma/beta: (CONV2_OUT,).
    Returns (B, T, CONV2_OUT) in x.dtype.
    """
    B, T, C0 = x.shape
    assert C0 == CONV1_IN and CONV2_OUT == CONV1_IN and CONV1_OUT == CONV2_IN
    assert w1_pt.shape == (CONV1_OUT, CONV1_IN, KERNEL)
    assert w2_pt.shape == (CONV2_OUT, CONV2_IN, KERNEL)
    F = F_FOLD
    assert (F * C0) % 128 == 0 and PAD <= F
    # T is never tiled (full sequence per block), so no halo across grid steps.
    assert T % F == 0
    R = T // F
    W0 = F * C0                       # 128
    W1 = F * CONV1_OUT                # 256

    if block_b is None:
        # >= 2 grid steps (both v7x TensorCores get work), prefer >= 4 steps,
        # ~1-4k MXU rows (block_b*T) per step to amortize per-step overhead.
        block_b = max(1, min(B // 4 if B >= 4 else max(1, B // 2),
                             max(1, 2048 // T)))
        while B % block_b:
            block_b -= 1
    assert B % block_b == 0 and block_b >= 1

    # ---- wrapper-side parameter folding (PyTorch layout -> kernel layout) ----
    w1 = jnp.transpose(w1_pt, (2, 1, 0)).astype(jnp.float32)   # (K, Cin, Cout)
    w2 = jnp.transpose(w2_pt, (2, 1, 0)).astype(jnp.float32)
    a1 = _fold_conv_weight(w1, F).astype(jnp.bfloat16)         # (3, 128, 256)
    a2 = _fold_conv_weight(w2, F).astype(jnp.bfloat16)         # (3, 256, 128)
    m = jnp.kron(jnp.eye(F, dtype=jnp.float32),
                 jnp.full((C0, C0), 1.0 / C0, jnp.float32))    # (128, 128)
    vec = jnp.concatenate([
        jnp.tile(b1.astype(jnp.float32).reshape(-1), F),       # (256,)
        jnp.tile(b2.astype(jnp.float32).reshape(-1), F),       # (128,)
        jnp.tile(gamma.astype(jnp.float32).reshape(-1), F),    # (128,)
        jnp.tile(beta.astype(jnp.float32).reshape(-1), F),     # (128,)
    ])[None, :]                                                # (1, 640)

    # Lane-dense HBM presentation: contiguous reshape, free at the XLA level.
    xw = x.reshape(B, R, W0)

    out = pl.pallas_call(
        convnet_kernel,
        out_shape=jax.ShapeDtypeStruct((B, R, W0), x.dtype),
        grid_spec=pltpu.PrefetchScalarGridSpec(
            num_scalar_prefetch=0,
            grid=(B // block_b,),
            in_specs=[
                # NOTE: if profiling shows exposed DMA on x with long grids,
                # add pipeline_mode=pl.Buffered(3) here.
                pl.BlockSpec((block_b, R, W0), lambda b: (b, 0, 0)),
                pl.BlockSpec((3, W0, W1), lambda b: (0, 0, 0)),
                pl.BlockSpec((3, W1, W0), lambda b: (0, 0, 0)),
                pl.BlockSpec((W0, W0), lambda b: (0, 0)),
                pl.BlockSpec((1, W1 + 3 * W0), lambda b: (0, 0)),
            ],
            out_specs=pl.BlockSpec((block_b, R, W0), lambda b: (b, 0, 0)),
        ),
        compiler_params=pltpu.CompilerParams(
            dimension_semantics=("parallel",),
            # Explicit budget: above v5e's 16 MiB scoped default, well under
            # v7x's 64 MiB physical VMEM (actual per-step usage is < 2 MiB).
            vmem_limit_bytes=32 * 1024 * 1024),
    )(xw, a1, a2, m, vec)
    return out.reshape(B, T, C0)


def reference_forward(x, w1_pt, b1, w2_pt, b2, gamma, beta):
    """Pure-JAX f32 reference implementing the PyTorch module directly
    (Conv1d weights in torch layout (Cout, Cin, K), biases 1-D)."""
    x32 = x.astype(jnp.float32)
    T = x32.shape[1]

    def conv1d(inp, w_pt, b):
        K = w_pt.shape[-1]
        pad = K // 2
        xp = jnp.pad(inp, ((0, 0), (pad, pad), (0, 0)))
        out = b.astype(jnp.float32)[None, None, :]
        for k in range(K):
            out = out + jnp.einsum('btc,oc->bto', xp[:, k:k + T, :],
                                   w_pt[:, :, k].astype(jnp.float32),
                                   precision=jax.lax.Precision.HIGHEST)
        return out

    h = jnp.maximum(conv1d(x32, w1_pt, b1), 0.0)
    y = conv1d(h, w2_pt, b2) + x32
    mean = jnp.mean(y, -1, keepdims=True)
    var = jnp.mean((y - mean) ** 2, -1, keepdims=True)
    return (y - mean) * jax.lax.rsqrt(var + LN_EPS) * gamma + beta


if __name__ == "__main__":
    key = jax.random.PRNGKey(0)
    kx, k1, k2, k3, k4, k5, k6 = jax.random.split(key, 7)

    B, T = 16, 256   # 4 grid steps of block_b=4 -> 1024 MXU rows per step
    x = jax.random.normal(kx, (B, T, CONV1_IN), jnp.float32).astype(jnp.bfloat16)

    # Parameters in PyTorch layouts: Conv1d weight (Cout, Cin, K), bias (Cout,)
    w1 = 0.1 * jax.random.normal(k1, (CONV1_OUT, CONV1_IN, KERNEL), jnp.float32)
    b1 = 0.1 * jax.random.normal(k2, (CONV1_OUT,), jnp.float32)
    w2 = 0.1 * jax.random.normal(k3, (CONV2_OUT, CONV2_IN, KERNEL), jnp.float32)
    b2 = 0.1 * jax.random.normal(k4, (CONV2_OUT,), jnp.float32)
    gamma = 1.0 + 0.1 * jax.random.normal(k5, (CONV2_OUT,), jnp.float32)
    beta = 0.1 * jax.random.normal(k6, (CONV2_OUT,), jnp.float32)

    out = jax.block_until_ready(
        jax.jit(convnet_forward)(x, w1, b1, w2, b2, gamma, beta))

    # f32 reference from the same bf16 activations and bf16-rounded weights
    # (the kernel streams bf16 and feeds bf16 MXU operands; biases/LN stay f32).
    q = lambda a: a.astype(jnp.bfloat16).astype(jnp.float32)
    ref = jax.block_until_ready(
        reference_forward(x.astype(jnp.float32), q(w1), b1, q(w2), b2,
                          gamma, beta))

    assert out.shape == (B, T, CONV2_OUT)
    assert out.dtype == x.dtype
    err = float(jnp.max(jnp.abs(out.astype(jnp.float32) - ref)))
    assert jnp.allclose(out.astype(jnp.float32), ref, rtol=5e-2, atol=5e-2), err
    print("KERNEL_OK")
</pallas_src>

<mosaic_0001>
module attributes {stable_mosaic.version = 11 : i64} {
  func.func @convnet_kernel(%arg0: i32, %arg1: memref<4x64x128xbf16, #tpu.memory_space<vmem>>, %arg2: memref<3x128x256xbf16, #tpu.memory_space<vmem>>, %arg3: memref<3x256x128xbf16, #tpu.memory_space<vmem>>, %arg4: memref<128x128xf32, #tpu.memory_space<vmem>>, %arg5: memref<1x640xf32, #tpu.memory_space<vmem>>, %arg6: memref<4x64x128xbf16, #tpu.memory_space<vmem>>) attributes {dimension_semantics = [#tpu.dimension_semantics<parallel>], iteration_bounds = array<i64: 4>, scalar_prefetch = 0 : i64, scratch_operands = 0 : i64, tpu.core_type = #tpu.core_type<tc>, window_params = [{transform_indices = @transform_0, window_bounds = array<i64: 4, 64, 128>}, {pipeline_mode = #tpu.pipeline_mode<synchronous>, transform_indices = @transform_1, window_bounds = array<i64: 3, 128, 256>}, {pipeline_mode = #tpu.pipeline_mode<synchronous>, transform_indices = @transform_2, window_bounds = array<i64: 3, 256, 128>}, {pipeline_mode = #tpu.pipeline_mode<synchronous>, transform_indices = @transform_3, window_bounds = array<i64: 128, 128>}, {pipeline_mode = #tpu.pipeline_mode<synchronous>, transform_indices = @transform_4, window_bounds = array<i64: 1, 640>}, {transform_indices = @transform_5, window_bounds = array<i64: 4, 64, 128>}]} {
    %c0 = arith.constant 0 : index
    %c0_0 = arith.constant 0 : index
    %c0_1 = arith.constant 0 : index
    %0 = vector.load %arg1[%c0, %c0_0, %c0_1] : memref<4x64x128xbf16, #tpu.memory_space<vmem>>, vector<4x64x128xbf16>
    %1 = arith.extf %0 : vector<4x64x128xbf16> to vector<4x64x128xf32>
    %2 = arith.truncf %1 : vector<4x64x128xf32> to vector<4x64x128xbf16>
    %c0_2 = arith.constant 0 : index
    %c0_3 = arith.constant 0 : index
    %3 = vector.load %arg5[%c0_2, %c0_3] : memref<1x640xf32, #tpu.memory_space<vmem>>, vector<1x256xf32>
    %c0_4 = arith.constant 0 : index
    %c256 = arith.constant 256 : index
    %4 = vector.load %arg5[%c0_4, %c256] : memref<1x640xf32, #tpu.memory_space<vmem>>, vector<1x128xf32>
    %c0_5 = arith.constant 0 : index
    %c384 = arith.constant 384 : index
    %5 = vector.load %arg5[%c0_5, %c384] : memref<1x640xf32, #tpu.memory_space<vmem>>, vector<1x128xf32>
    %c0_6 = arith.constant 0 : index
    %c512 = arith.constant 512 : index
    %6 = vector.load %arg5[%c0_6, %c512] : memref<1x640xf32, #tpu.memory_space<vmem>>, vector<1x128xf32>
    %7 = vector.shape_cast %2 : vector<4x64x128xbf16> to vector<256x128xbf16>
    %c1 = arith.constant 1 : index
    %c0_7 = arith.constant 0 : index
    %c0_8 = arith.constant 0 : index
    %8 = vector.load %arg2[%c1, %c0_7, %c0_8] : memref<3x128x256xbf16, #tpu.memory_space<vmem>>, vector<1x128x256xbf16>
    %9 = vector.shape_cast %8 : vector<1x128x256xbf16> to vector<128x256xbf16>
    %cst = arith.constant dense<0.000000e+00> : vector<256x256xf32>
    %10 = tpu.matmul %7, %9, %cst {dimension_numbers = #tpu.dot_dimension_numbers<[1], [0], [0], [1], [0, 0, 1, 1], [], []>} : vector<256x128xbf16>, vector<128x256xbf16>, vector<256x256xf32> -> vector<256x256xf32>
    %cst_9 = arith.constant 0.000000e+00 : bf16
    %11 = vector.broadcast %cst_9 : bf16 to vector<4x1x128xbf16>
    %12 = vector.extract_strided_slice %2 {offsets = [0, 0, 0], sizes = [4, 63, 128], strides = [1, 1, 1]} : vector<4x64x128xbf16> to vector<4x63x128xbf16>
    %13 = tpu.concatenate %11, %12 in 1 : vector<4x1x128xbf16>, vector<4x63x128xbf16> -> vector<4x64x128xbf16>
    %14 = vector.shape_cast %13 : vector<4x64x128xbf16> to vector<256x128xbf16>
    %c0_10 = arith.constant 0 : index
    %c0_11 = arith.constant 0 : index
    %c0_12 = arith.constant 0 : index
    %15 = vector.load %arg2[%c0_10, %c0_11, %c0_12] : memref<3x128x256xbf16, #tpu.memory_space<vmem>>, vector<1x128x256xbf16>
    %16 = vector.shape_cast %15 : vector<1x128x256xbf16> to vector<128x256xbf16>
    %cst_13 = arith.constant dense<0.000000e+00> : vector<256x256xf32>
    %17 = tpu.matmul %14, %16, %cst_13 {dimension_numbers = #tpu.dot_dimension_numbers<[1], [0], [0], [1], [0, 0, 1, 1], [], []>} : vector<256x128xbf16>, vector<128x256xbf16>, vector<256x256xf32> -> vector<256x256xf32>
    %18 = arith.addf %10, %17 : vector<256x256xf32>
    %cst_14 = arith.constant 0.000000e+00 : bf16
    %19 = vector.broadcast %cst_14 : bf16 to vector<4x1x128xbf16>
    %20 = vector.extract_strided_slice %2 {offsets = [0, 1, 0], sizes = [4, 63, 128], strides = [1, 1, 1]} : vector<4x64x128xbf16> to vector<4x63x128xbf16>
    %21 = tpu.concatenate %20, %19 in 1 : vector<4x63x128xbf16>, vector<4x1x128xbf16> -> vector<4x64x128xbf16>
    %22 = vector.shape_cast %21 : vector<4x64x128xbf16> to vector<256x128xbf16>
    %c2 = arith.constant 2 : index
    %c0_15 = arith.constant 0 : index
    %c0_16 = arith.constant 0 : index
    %23 = vector.load %arg2[%c2, %c0_15, %c0_16] : memref<3x128x256xbf16, #tpu.memory_space<vmem>>, vector<1x128x256xbf16>
    %24 = vector.shape_cast %23 : vector<1x128x256xbf16> to vector<128x256xbf16>
    %cst_17 = arith.constant dense<0.000000e+00> : vector<256x256xf32>
    %25 = tpu.matmul %22, %24, %cst_17 {dimension_numbers = #tpu.dot_dimension_numbers<[1], [0], [0], [1], [0, 0, 1, 1], [], []>} : vector<256x128xbf16>, vector<128x256xbf16>, vector<256x256xf32> -> vector<256x256xf32>
    %26 = arith.addf %18, %25 : vector<256x256xf32>
    %27 = vector.broadcast %3 : vector<1x256xf32> to vector<256x256xf32>
    %28 = arith.addf %26, %27 : vector<256x256xf32>
    %cst_18 = arith.constant 0.000000e+00 : f32
    %29 = vector.broadcast %cst_18 : f32 to vector<256x256xf32>
    %30 = arith.maximumf %28, %29 : vector<256x256xf32>
    %31 = arith.truncf %30 : vector<256x256xf32> to vector<256x256xbf16>
    %32 = vector.shape_cast %31 : vector<256x256xbf16> to vector<4x64x256xbf16>
    %33 = vector.shape_cast %32 : vector<4x64x256xbf16> to vector<256x256xbf16>
    %c1_19 = arith.constant 1 : index
    %c0_20 = arith.constant 0 : index
    %c0_21 = arith.constant 0 : index
    %34 = vector.load %arg3[%c1_19, %c0_20, %c0_21] : memref<3x256x128xbf16, #tpu.memory_space<vmem>>, vector<1x256x128xbf16>
    %35 = vector.shape_cast %34 : vector<1x256x128xbf16> to vector<256x128xbf16>
    %cst_22 = arith.constant dense<0.000000e+00> : vector<256x128xf32>
    %36 = tpu.matmul %33, %35, %cst_22 {dimension_numbers = #tpu.dot_dimension_numbers<[1], [0], [0], [1], [0, 0, 1, 1], [], []>} : vector<256x256xbf16>, vector<256x128xbf16>, vector<256x128xf32> -> vector<256x128xf32>
    %cst_23 = arith.constant 0.000000e+00 : bf16
    %37 = vector.broadcast %cst_23 : bf16 to vector<4x1x256xbf16>
    %38 = vector.extract_strided_slice %32 {offsets = [0, 0, 0], sizes = [4, 63, 256], strides = [1, 1, 1]} : vector<4x64x256xbf16> to vector<4x63x256xbf16>
    %39 = tpu.concatenate %37, %38 in 1 : vector<4x1x256xbf16>, vector<4x63x256xbf16> -> vector<4x64x256xbf16>
    %40 = vector.shape_cast %39 : vector<4x64x256xbf16> to vector<256x256xbf16>
    %c0_24 = arith.constant 0 : index
    %c0_25 = arith.constant 0 : index
    %c0_26 = arith.constant 0 : index
    %41 = vector.load %arg3[%c0_24, %c0_25, %c0_26] : memref<3x256x128xbf16, #tpu.memory_space<vmem>>, vector<1x256x128xbf16>
    %42 = vector.shape_cast %41 : vector<1x256x128xbf16> to vector<256x128xbf16>
    %cst_27 = arith.constant dense<0.000000e+00> : vector<256x128xf32>
    %43 = tpu.matmul %40, %42, %cst_27 {dimension_numbers = #tpu.dot_dimension_numbers<[1], [0], [0], [1], [0, 0, 1, 1], [], []>} : vector<256x256xbf16>, vector<256x128xbf16>, vector<256x128xf32> -> vector<256x128xf32>
    %44 = arith.addf %36, %43 : vector<256x128xf32>
    %cst_28 = arith.constant 0.000000e+00 : bf16
    %45 = vector.broadcast %cst_28 : bf16 to vector<4x1x256xbf16>
    %46 = vector.extract_strided_slice %32 {offsets = [0, 1, 0], sizes = [4, 63, 256], strides = [1, 1, 1]} : vector<4x64x256xbf16> to vector<4x63x256xbf16>
    %47 = tpu.concatenate %46, %45 in 1 : vector<4x63x256xbf16>, vector<4x1x256xbf16> -> vector<4x64x256xbf16>
    %48 = vector.shape_cast %47 : vector<4x64x256xbf16> to vector<256x256xbf16>
    %c2_29 = arith.constant 2 : index
    %c0_30 = arith.constant 0 : index
    %c0_31 = arith.constant 0 : index
    %49 = vector.load %arg3[%c2_29, %c0_30, %c0_31] : memref<3x256x128xbf16, #tpu.memory_space<vmem>>, vector<1x256x128xbf16>
    %50 = vector.shape_cast %49 : vector<1x256x128xbf16> to vector<256x128xbf16>
    %cst_32 = arith.constant dense<0.000000e+00> : vector<256x128xf32>
    %51 = tpu.matmul %48, %50, %cst_32 {dimension_numbers = #tpu.dot_dimension_numbers<[1], [0], [0], [1], [0, 0, 1, 1], [], []>} : vector<256x256xbf16>, vector<256x128xbf16>, vector<256x128xf32> -> vector<256x128xf32>
    %52 = arith.addf %44, %51 : vector<256x128xf32>
    %53 = vector.broadcast %4 : vector<1x128xf32> to vector<256x128xf32>
    %54 = arith.addf %52, %53 : vector<256x128xf32>
    %55 = vector.shape_cast %1 : vector<4x64x128xf32> to vector<256x128xf32>
    %56 = arith.addf %54, %55 : vector<256x128xf32>
    %c0_33 = arith.constant 0 : index
    %c0_34 = arith.constant 0 : index
    %57 = vector.load %arg4[%c0_33, %c0_34] : memref<128x128xf32, #tpu.memory_space<vmem>>, vector<128x128xf32>
    %cst_35 = arith.constant dense<0.000000e+00> : vector<256x128xf32>
    %58 = tpu.matmul %56, %57, %cst_35 {dimension_numbers = #tpu.dot_dimension_numbers<[1], [0], [0], [1], [0, 0, 1, 1], [], []>} : vector<256x128xf32>, vector<128x128xf32>, vector<256x128xf32> -> vector<256x128xf32>
    %59 = arith.subf %56, %58 : vector<256x128xf32>
    %60 = arith.mulf %59, %59 : vector<256x128xf32>
    %cst_36 = arith.constant dense<0.000000e+00> : vector<256x128xf32>
    %61 = tpu.matmul %60, %57, %cst_36 {dimension_numbers = #tpu.dot_dimension_numbers<[1], [0], [0], [1], [0, 0, 1, 1], [], []>} : vector<256x128xf32>, vector<128x128xf32>, vector<256x128xf32> -> vector<256x128xf32>
    %cst_37 = arith.constant 9.99999974E-6 : f32
    %62 = vector.broadcast %cst_37 : f32 to vector<256x128xf32>
    %63 = arith.addf %61, %62 : vector<256x128xf32>
    %64 = math.rsqrt %63 : vector<256x128xf32>
    %65 = arith.mulf %59, %64 : vector<256x128xf32>
    %66 = vector.broadcast %5 : vector<1x128xf32> to vector<256x128xf32>
    %67 = arith.mulf %65, %66 : vector<256x128xf32>
    %68 = vector.broadcast %6 : vector<1x128xf32> to vector<256x128xf32>
    %69 = arith.addf %67, %68 : vector<256x128xf32>
    %70 = vector.shape_cast %69 : vector<256x128xf32> to vector<4x64x128xf32>
    %71 = arith.truncf %70 : vector<4x64x128xf32> to vector<4x64x128xbf16>
    %c0_38 = arith.constant 0 : index
    %c0_39 = arith.constant 0 : index
    %c0_40 = arith.constant 0 : index
    %72 = vector.load %arg6[%c0_38, %c0_39, %c0_40] : memref<4x64x128xbf16, #tpu.memory_space<vmem>>, vector<4x64x128xbf16>
    tpu.vector_store %arg6[%c0_38, %c0_39, %c0_40], %71 {strides = array<i32>} : memref<4x64x128xbf16, #tpu.memory_space<vmem>>, vector<4x64x128xbf16>,
    return
  }
  func.func @transform_0(%arg0: i32) -> (i32, i32, i32) {
    %c0_i32 = arith.constant 0 : i32
    %c0_i32_0 = arith.constant 0 : i32
    %c0_i32_1 = arith.constant 0 : i32
    return %arg0, %c0_i32, %c0_i32_0 : i32, i32, i32
  }
  func.func @transform_1(%arg0: i32) -> (i32, i32, i32) {
    %c0_i32 = arith.constant 0 : i32
    %c0_i32_0 = arith.constant 0 : i32
    %c0_i32_1 = arith.constant 0 : i32
    %c0_i32_2 = arith.constant 0 : i32
    return %c0_i32, %c0_i32_0, %c0_i32_1 : i32, i32, i32
  }
  func.func @transform_2(%arg0: i32) -> (i32, i32, i32) {
    %c0_i32 = arith.constant 0 : i32
    %c0_i32_0 = arith.constant 0 : i32
    %c0_i32_1 = arith.constant 0 : i32
    %c0_i32_2 = arith.constant 0 : i32
    return %c0_i32, %c0_i32_0, %c0_i32_1 : i32, i32, i32
  }
  func.func @transform_3(%arg0: i32) -> (i32, i32) {
    %c0_i32 = arith.constant 0 : i32
    %c0_i32_0 = arith.constant 0 : i32
    %c0_i32_1 = arith.constant 0 : i32
    return %c0_i32, %c0_i32_0 : i32, i32
  }
  func.func @transform_4(%arg0: i32) -> (i32, i32) {
    %c0_i32 = arith.constant 0 : i32
    %c0_i32_0 = arith.constant 0 : i32
    %c0_i32_1 = arith.constant 0 : i32
    return %c0_i32, %c0_i32_0 : i32, i32
  }
  func.func @transform_5(%arg0: i32) -> (i32, i32, i32) {
    %c0_i32 = arith.constant 0 : i32
    %c0_i32_0 = arith.constant 0 : i32
    %c0_i32_1 = arith.constant 0 : i32
    return %arg0, %c0_i32, %c0_i32_0 : i32, i32, i32
  }
}

</mosaic_0001>

<llo_original>
// kernel: tile.38
$region0: #{tile.38}
  #allocation0 [shape = 's32[1]{0}', space=sflag, size = 0x4, scoped, tag = 'scoped memory for tile.38']
  %s0 = inlined_call_operand.vmem [shape: f32[32], index: 0, kind: input, shape index: {}]
  %s1 = inlined_call_operand.vmem [shape: f32[4,32], index: 1, kind: output, shape index: {}]
  // Predicated region
  $region2: #{tile.38} parent=0 // pred_check
    _
  $region3: #{tile.38} parent=0 // pred_check_branch
    %3 = sbr.rel (0) target = $region5
  $region4: #{tile.38} parent=0 // pred_region
    _
  $region5: #{tile.38} parent=0 // pred_fallthru
    _
  %v4 = vld [vmem:[%s0] ss:$0 sm:$0xff]
  %5 = vst [vmem:[%s1] sm:$0xf] %v4

// kernel: tile.39
$region0: #{tile.39}
  %s0 = inlined_call_operand.vmem [shape: f32[4,32], index: 0, kind: input, shape index: {}]
  %s1 = inlined_call_operand.vmem [shape: f32[128], index: 1, kind: output, shape index: {}]
  $region1: #{tile.39} parent=0
    #allocation0 [shape = 'u8[4096]{0}', space=vmem, size = 0x1000, scoped, tag = 'scoped mem for output reshape']
    #allocation1 [shape = 'u8[4096]{0}', space=vmem, size = 0x1000, scoped, tag = 'scoped mem for input reshape']
    %s3 = sshllo.u32 0, 4
    %v4 = vld [vmem:[%s0] sm:%s3]
    %5 = vst [vmem:[#allocation1] sm:%s3] %v4
    %v6 = vld [vmem:[#allocation1] sm:$0x1]
    %vm7 = vcmask 261120
    %8 = vst.msk [vmem:[#allocation0] sm:$0x1] %vm7, %v6
    %s9 = scalar_lea.vmem [#allocation1], 3
    %v10 = vld [vmem:[%s9] sm:$0x1]
    %11 = vrot.lane.b32.xlu0 %v10, 96
    %v12 = vpop.permute.xlu0 %11
    %vm13 = vcmask 1048320
    %14 = vst.msk [vmem:[#allocation0] sm:$0x1] %vm13, %v12
    %s15 = scalar_lea.vmem [#allocation1], 2
    %v16 = vld [vmem:[%s15] sm:$0x1]
    %17 = vrot.lane.b32.xlu0 %v16, 64
    %v18 = vpop.permute.xlu0 %17
    %vm19 = vcmask 785920
    %20 = vst.msk [vmem:[#allocation0] sm:$0x1] %vm19, %v18
    %s21 = scalar_lea.vmem [#allocation1], 1
    %v22 = vld [vmem:[%s21] sm:$0x1]
    %23 = vrot.lane.b32.xlu0 %v22, 32
    %v24 = vpop.permute.xlu0 %23
    %vm25 = vcmask 523520
    %26 = vst.msk [vmem:[#allocation0] sm:$0x1] %vm25, %v24
    %s28 = sshllo.u32 0, 1
    %v30 = vld [vmem:[#allocation0] sm:%s28]
    %s31 = sshllo.u32 0, 1
    %32 = vst [vmem:[%s1] sm:%s31] %v30

// kernel: tile.23
$region0: #{tile.23}
  #allocation0 [shape = 's32[1]{0}', space=sflag, size = 0x4, scoped, tag = 'scoped memory for tile.23']
  %s0 = inlined_call_operand.vmem [shape: f32[64], index: 0, kind: input, shape index: {}]
  %s1 = inlined_call_operand.vmem [shape: f32[4,64], index: 1, kind: output, shape index: {}]
  // Predicated region
  $region2: #{tile.23} parent=0 // pred_check
    _
  $region3: #{tile.23} parent=0 // pred_check_branch
    %3 = sbr.rel (0) target = $region5
  $region4: #{tile.23} parent=0 // pred_region
    _
  $region5: #{tile.23} parent=0 // pred_fallthru
    _
  %v4 = vld [vmem:[%s0] ss:$0 sm:$0xff]
  %5 = vst [vmem:[%s1] sm:$0xf] %v4

// kernel: tile.24
$region0: #{tile.24}
  %s0 = inlined_call_operand.vmem [shape: f32[4,64], index: 0, kind: input, shape index: {}]
  %s1 = inlined_call_operand.vmem [shape: f32[256], index: 1, kind: output, shape index: {}]
  $region1: #{tile.24} parent=0
    #allocation0 [shape = 'u8[4096]{0}', space=vmem, size = 0x1000, scoped, tag = 'scoped mem for output reshape']
    #allocation1 [shape = 'u8[4096]{0}', space=vmem, size = 0x1000, scoped, tag = 'scoped mem for input reshape']
    %s3 = sshllo.u32 0, 4
    %v4 = vld [vmem:[%s0] sm:%s3]
    %5 = vst [vmem:[#allocation1] sm:%s3] %v4
    %s6 = smov 3
    %v7 = vld [vmem:[#allocation1] ss:$2 sm:%s6]
    %vm8 = vcmask 523264
    %9 = vst.msk [vmem:[#allocation0] sm:$0x3] %vm8, %v7
    %s10 = scalar_lea.vmem [#allocation1], 1
    %s11 = smov 3
    %v12 = vld [vmem:[%s10] ss:$2 sm:%s11]
    %13 = vrot.lane.b32.xlu0 %v12, 64
    %v14 = vpop.permute.xlu0 %13
    %vm15 = vcmask 1048064
    %16 = vst.msk [vmem:[#allocation0] sm:$0x3] %vm15, %v14
    %s18 = sshllo.u32 0, 2
    %v20 = vld [vmem:[#allocation0] sm:%s18]
    %s21 = sshllo.u32 0, 2
    %22 = vst [vmem:[%s1] sm:%s21] %v20

// kernel: convnet_forward.1
$region0: #{convnet_forward.1}
  #allocation0 [shape = 'u32[]', space=smem, size = 0x4, offset = 0x4, fixed_abs, tag = 'smem constant byte address 0x4 - core index']
  #allocation1 [shape = 'u32[144,128]{1,0:T(1,128)}', space=vmem, size = 0x12000, scoped, tag = 'internal scratch']
  %s0 = inlined_call_operand.vmem [shape: bf16[16,64,128], index: 0, kind: input, shape index: {}]
  %s1 = inlined_call_operand.vmem [shape: bf16[3,128,256], index: 1, kind: input, shape index: {}]
  %s2 = inlined_call_operand.vmem [shape: bf16[3,256,128], index: 2, kind: input, shape index: {}]
  %s3 = inlined_call_operand.vmem [shape: f32[128,128], index: 3, kind: input, shape index: {}]
  %s4 = inlined_call_operand.vmem [shape: f32[1,640], index: 4, kind: input, shape index: {}]
  %s5 = inlined_call_operand.vmem [shape: bf16[16,64,128], index: 5, kind: output, shape index: {}]
  %s6 = sld [smem:[#allocation0]]
  $region53: #{convnet_forward.1} parent=0
    _
  %s8 = ssub.s32 1, %s6
  %s9 = scalar_select 0, %s8, %s6
  loop: start=0, step=1, limit=6
  $region2: #{convnet_forward.1} parent=0 // loop_pre_header
    _
  $region3: #{convnet_forward.1} parent=0 // loop_header
    %s11 = sphi 0, %s15
    %p12 = scmp.ge.s32.totalorder %s11, 6
    %s21 = sphi 0, %s23
    %s24 = sphi 0, %s21
    %s25 = sphi 0, %s24
    %s41 = sphi 0, %s25
    %s45 = sphi 0, %s45
    %s47 = sphi 0, %s45
    %s48 = sphi 0, %s47
    %s62 = sphi 0, %s48
    %s66 = sphi 0, %s66
    %s68 = sphi 0, %s66
    %s69 = sphi 0, %s68
    %s83 = sphi 0, %s69
    %s87 = sphi 0, %s87
    %s89 = sphi 0, %s87
    %s90 = sphi 0, %s89
    %s104 = sphi 0, %s90
    %s108 = sphi 0, %s108
    %s110 = sphi 0, %s108
    %s111 = sphi 0, %s110
    %s125 = sphi 0, %s111
    %s131 = sphi 0, %s133
    %s134 = sphi 0, %s131
    %s135 = sphi 0, %s134
    %s151 = sphi 0, %s135
  $region4: #{convnet_forward.1} parent=0 // loop_header_branch
    %14 = sbr.rel (%p12) target = $region8
  $region5: #{convnet_forward.1} parent=0 // loop_body
    %s16 = ssub.s32 %s11, 1
    %s17 = ssub.s32 %s11, 2
    %s18 = sadd.s32 %s11, 1
    %s19 = ssub.s32 %s11, %s18
    %p20 = scmp.eq.s32.totalorder %s19, 0
    %s22 = sadd.s32 %s21, 1
    %s23 = scalar_select %p20, %s21, %s22
    %p26 = pneg %p20
    %p27 = scmp.eq.s32.totalorder %s11, 3
    %p28 = por %p26, %p27
    %p29 = scmp.ne.s32.totalorder %s21, %s24
    %p30 = scmp.eq.s32.totalorder %s11, 0
    %p31 = por %p29, %p30
    %p32 = scmp.ne.s32.totalorder %s21, %s24
    %p33 = scmp.eq.s32.totalorder %s16, 3
    %p34 = por %p32, %p33
    %p35 = scmp.ne.s32.totalorder %s24, %s25
    %p36 = scmp.eq.s32.totalorder %s16, 0
    %p37 = por %p35, %p36
    %p38 = scmp.ne.s32.totalorder %s24, %s25
    %p39 = scmp.eq.s32.totalorder %s17, 3
    %p40 = por %p38, %p39
    %p42 = scmp.ne.s32.totalorder %s25, %s41
    %p43 = scmp.eq.s32.totalorder %s17, 0
    %p44 = por %p42, %p43
    %s46 = sadd.s32 %s45, 1
    %p49 = scmp.eq.s32.totalorder %s11, 3
    %p50 = scmp.ne.s32.totalorder %s45, %s47
    %p51 = scmp.eq.s32.totalorder %s11, 0
    %p52 = por %p50, %p51
    %p53 = scmp.ne.s32.totalorder %s45, %s47
    %p54 = scmp.eq.s32.totalorder %s16, 3
    %p55 = por %p53, %p54
    %p56 = scmp.ne.s32.totalorder %s47, %s48
    %p57 = scmp.eq.s32.totalorder %s16, 0
    %p58 = por %p56, %p57
    %p59 = scmp.ne.s32.totalorder %s47, %s48
    %p60 = scmp.eq.s32.totalorder %s17, 3
    %p61 = por %p59, %p60
    %p63 = scmp.ne.s32.totalorder %s48, %s62
    %p64 = scmp.eq.s32.totalorder %s17, 0
    %p65 = por %p63, %p64
    %s67 = sadd.s32 %s66, 1
    %p70 = scmp.eq.s32.totalorder %s11, 3
    %p71 = scmp.ne.s32.totalorder %s66, %s68
    %p72 = scmp.eq.s32.totalorder %s11, 0
    %p73 = por %p71, %p72
    %p74 = scmp.ne.s32.totalorder %s66, %s68
    %p75 = scmp.eq.s32.totalorder %s16, 3
    %p76 = por %p74, %p75
    %p77 = scmp.ne.s32.totalorder %s68, %s69
    %p78 = scmp.eq.s32.totalorder %s16, 0
    %p79 = por %p77, %p78
    %p80 = scmp.ne.s32.totalorder %s68, %s69
    %p81 = scmp.eq.s32.totalorder %s17, 3
    %p82 = por %p80, %p81
    %p84 = scmp.ne.s32.totalorder %s69, %s83
    %p85 = scmp.eq.s32.totalorder %s17, 0
    %p86 = por %p84, %p85
    %s88 = sadd.s32 %s87, 1
    %p91 = scmp.eq.s32.totalorder %s11, 3
    %p92 = scmp.ne.s32.totalorder %s87, %s89
    %p93 = scmp.eq.s32.totalorder %s11, 0
    %p94 = por %p92, %p93
    %p95 = scmp.ne.s32.totalorder %s87, %s89
    %p96 = scmp.eq.s32.totalorder %s16, 3
    %p97 = por %p95, %p96
    %p98 = scmp.ne.s32.totalorder %s89, %s90
    %p99 = scmp.eq.s32.totalorder %s16, 0
    %p100 = por %p98, %p99
    %p101 = scmp.ne.s32.totalorder %s89, %s90
    %p102 = scmp.eq.s32.totalorder %s17, 3
    %p103 = por %p101, %p102
    %p105 = scmp.ne.s32.totalorder %s90, %s104
    %p106 = scmp.eq.s32.totalorder %s17, 0
    %p107 = por %p105, %p106
    %s109 = sadd.s32 %s108, 1
    %p112 = scmp.eq.s32.totalorder %s11, 3
    %p113 = scmp.ne.s32.totalorder %s108, %s110
    %p114 = scmp.eq.s32.totalorder %s11, 0
    %p115 = por %p113, %p114
    %p116 = scmp.ne.s32.totalorder %s108, %s110
    %p117 = scmp.eq.s32.totalorder %s16, 3
    %p118 = por %p116, %p117
    %p119 = scmp.ne.s32.totalorder %s110, %s111
    %p120 = scmp.eq.s32.totalorder %s16, 0
    %p121 = por %p119, %p120
    %p122 = scmp.ne.s32.totalorder %s110, %s111
    %p123 = scmp.eq.s32.totalorder %s17, 3
    %p124 = por %p122, %p123
    %p126 = scmp.ne.s32.totalorder %s111, %s125
    %p127 = scmp.eq.s32.totalorder %s17, 0
    %p128 = por %p126, %p127
    %s129 = ssub.s32 %s11, %s18
    %p130 = scmp.eq.s32.totalorder %s129, 0
    %s132 = sadd.s32 %s131, 1
    %s133 = scalar_select %p130, %s131, %s132
    %p136 = pneg %p130
    %p137 = scmp.eq.s32.totalorder %s11, 3
    %p138 = por %p136, %p137
    %p139 = scmp.ne.s32.totalorder %s131, %s134
    %p140 = scmp.eq.s32.totalorder %s11, 0
    %p141 = por %p139, %p140
    %p142 = scmp.ne.s32.totalorder %s131, %s134
    %p143 = scmp.eq.s32.totalorder %s16, 3
    %p144 = por %p142, %p143
    %p145 = scmp.ne.s32.totalorder %s134, %s135
    %p146 = scmp.eq.s32.totalorder %s16, 0
    %p147 = por %p145, %p146
    %p148 = scmp.ne.s32.totalorder %s134, %s135
    %p149 = scmp.eq.s32.totalorder %s17, 3
    %p150 = por %p148, %p149
    %p152 = scmp.ne.s32.totalorder %s135, %s151
    %p153 = scmp.eq.s32.totalorder %s17, 0
    %p154 = por %p152, %p153
    %p155 = scmp.le.s32.totalorder 1, %s11
    %p156 = scmp.lt.s32.totalorder %s11, 5
    %p157 = pnand %p155, %p156
    %p158 = pneg %p157
    // Predicated region
    $region9: #{convnet_forward.1} parent=5 // pred_check
      _
    $region10: #{convnet_forward.1} parent=5 // pred_check_branch
      %160 = sbr.rel (%p157) target = $region12
    $region11: #{convnet_forward.1} parent=5 // pred_region
      %s161 = ssub.s32 %s11, 1
      // Predicated region
      $region13: #{convnet_forward.1} parent=11 // pred_check
        %p162 = pneg %p58
      $region14: #{convnet_forward.1} parent=11 // pred_check_branch
        %164 = sbr.rel (%p162) target = $region16
      $region15: #{convnet_forward.1} parent=11 // pred_region
        _
      $region16: #{convnet_forward.1} parent=11 // pred_fallthru
        _
      // Predicated region
      $region17: #{convnet_forward.1} parent=11 // pred_check
        %p165 = pneg %p79
      $region18: #{convnet_forward.1} parent=11 // pred_check_branch
        %167 = sbr.rel (%p165) target = $region20
      $region19: #{convnet_forward.1} parent=11 // pred_region
        _
      $region20: #{convnet_forward.1} parent=11 // pred_fallthru
        _
      // Predicated region
      $region21: #{convnet_forward.1} parent=11 // pred_check
        %p168 = pneg %p100
      $region22: #{convnet_forward.1} parent=11 // pred_check_branch
        %170 = sbr.rel (%p168) target = $region24
      $region23: #{convnet_forward.1} parent=11 // pred_region
        _
      $region24: #{convnet_forward.1} parent=11 // pred_fallthru
        _
      // Predicated region
      $region25: #{convnet_forward.1} parent=11 // pred_check
        %p171 = pneg %p121
      $region26: #{convnet_forward.1} parent=11 // pred_check_branch
        %173 = sbr.rel (%p171) target = $region28
      $region27: #{convnet_forward.1} parent=11 // pred_region
        _
      $region28: #{convnet_forward.1} parent=11 // pred_fallthru
        _
    $region12: #{convnet_forward.1} parent=5 // pred_fallthru
      _
    %p174 = scmp.lt.s32.totalorder %s11, 4
    // Predicated region
    $region29: #{convnet_forward.1} parent=5 // pred_check
      %p175 = pneg %p174
    $region30: #{convnet_forward.1} parent=5 // pred_check_branch
      %177 = sbr.rel (%p175) target = $region32
    $region31: #{convnet_forward.1} parent=5 // pred_region
      // Predicated region
      $region33: #{convnet_forward.1} parent=31 // pred_check
        %p178 = pneg %p31
      $region34: #{convnet_forward.1} parent=31 // pred_check_branch
        %180 = sbr.rel (%p178) target = $region36
      $region35: #{convnet_forward.1} parent=31 // pred_region
        %s181 = smul.u32 4, %s11
        %p182 = scmp.lt.s32.totalorder %s181, 15
        %s183 = scalar_select %p182, %s181, 15
        %s184 = smul.addr %s183, 8
        %s185 = smul.addr %s184, 4
        %s186 = scalar_lea.vmem %s0, %s185
        %s187 = smul.u32 4, %s11
      $region36: #{convnet_forward.1} parent=31 // pred_fallthru
        _
    $region32: #{convnet_forward.1} parent=5 // pred_fallthru
      _
    %p188 = scmp.le.s32.totalorder 1, %s11
    %p189 = scmp.lt.s32.totalorder %s11, 5
    %p190 = pnand %p188, %p189
    %p191 = pneg %p190
    // Predicated region
    $region37: #{convnet_forward.1} parent=5 // pred_check
      _
    $region38: #{convnet_forward.1} parent=5 // pred_check_branch
      %193 = sbr.rel (%p190) target = $region40
    $region39: #{convnet_forward.1} parent=5 // pred_region
      %s194 = ssub.s32 %s11, 1
      %s195 = smul.u32 4, %s16
      %p196 = scmp.lt.s32.totalorder %s195, 15
      %s197 = scalar_select %p196, %s195, 15
      %s198 = smul.addr %s197, 8
      %s199 = smul.addr %s198, 4
      %s200 = scalar_lea.vmem %s0, %s199
      %p201 = pneg %p37
      %p202 = pneg %p34
      %p203 = pneg %p58
      %p204 = pneg %p55
      %p205 = pneg %p79
      %p206 = pneg %p76
      %p207 = pneg %p100
      %p208 = pneg %p97
      %p209 = pneg %p121
      %p210 = pneg %p118
      %p211 = pneg %p147
      %p212 = pneg %p144
      %s213 = smul.u32 4, %s16
      %p214 = scmp.lt.s32.totalorder %s213, 15
      %s215 = scalar_select %p214, %s213, 15
      %s216 = smul.addr %s215, 8
      %s217 = smul.addr %s216, 4
      %s218 = scalar_lea.vmem %s5, %s217
      %s219 = smul.u32 4, %s16
      %p220 = scmp.lt.s32.totalorder %s219, 15
      %s221 = scalar_select %p220, %s219, 15
      %s222 = smul.addr %s221, 8
      %s223 = smul.addr %s222, 4
      %s224 = scalar_lea.vmem %s0, %s223
      %s225 = smul.u32 4, %s16
      %s226 = smul.u32 4, %s16
      %p227 = scmp.lt.s32.totalorder %s226, 15
      %s228 = scalar_select %p227, %s226, 15
      %s229 = smul.addr %s228, 8
      %s230 = smul.addr %s229, 4
      %s231 = scalar_lea.vmem %s5, %s230
      %s232 = smul.u32 4, %s16
      %v234 = vld [vmem:[%s224] sm:$0xf]
      %v235 = vld [vmem:[%s224 + $0x4] sm:$0xf]
      %v236 = vld [vmem:[%s224 + $0x8] sm:$0xf]
      %v237 = vld [vmem:[%s224 + $0xc] sm:$0xf]
      %v238 = vld [vmem:[%s224 + $0x10] sm:$0xf]
      %v239 = vld [vmem:[%s224 + $0x14] sm:$0xf]
      %v240 = vld [vmem:[%s224 + $0x18] sm:$0xf]
      %v241 = vld [vmem:[%s224 + $0x1c] sm:$0xf]
      %v242 = vld [vmem:[%s224 + $0x20] sm:$0xf]
      %v243 = vld [vmem:[%s224 + $0x24] sm:$0xf]
      %v244 = vld [vmem:[%s224 + $0x28] sm:$0xf]
      %v245 = vld [vmem:[%s224 + $0x2c] sm:$0xf]
      %v246 = vld [vmem:[%s224 + $0x30] sm:$0xf]
      %v247 = vld [vmem:[%s224 + $0x34] sm:$0xf]
      %v248 = vld [vmem:[%s224 + $0x38] sm:$0xf]
      %v249 = vld [vmem:[%s224 + $0x3c] sm:$0xf]
      %v250 = vld [vmem:[%s224 + $0x40] sm:$0xf]
      %v251 = vld [vmem:[%s224 + $0x44] sm:$0xf]
      %v252 = vld [vmem:[%s224 + $0x48] sm:$0xf]
      %v253 = vld [vmem:[%s224 + $0x4c] sm:$0xf]
      %v254 = vld [vmem:[%s224 + $0x50] sm:$0xf]
      %v255 = vld [vmem:[%s224 + $0x54] sm:$0xf]
      %v256 = vld [vmem:[%s224 + $0x58] sm:$0xf]
      %v257 = vld [vmem:[%s224 + $0x5c] sm:$0xf]
      %v258 = vld [vmem:[%s224 + $0x60] sm:$0xf]
      %v259 = vld [vmem:[%s224 + $0x64] sm:$0xf]
      %v260 = vld [vmem:[%s224 + $0x68] sm:$0xf]
      %v261 = vld [vmem:[%s224 + $0x6c] sm:$0xf]
      %v262 = vld [vmem:[%s224 + $0x70] sm:$0xf]
      %v263 = vld [vmem:[%s224 + $0x74] sm:$0xf]
      %v264 = vld [vmem:[%s224 + $0x78] sm:$0xf]
      %v265 = vld [vmem:[%s224 + $0x7c] sm:$0xf]
      %v266 = vunpack.c.l.bf16 %v234
      %v267 = vunpack.c.l.bf16 %v235
      %v268 = vunpack.c.l.bf16 %v236
      %v269 = vunpack.c.l.bf16 %v237
      %v270 = vunpack.c.l.bf16 %v238
      %v271 = vunpack.c.l.bf16 %v239
      %v272 = vunpack.c.l.bf16 %v240
      %v273 = vunpack.c.l.bf16 %v241
      %v274 = vunpack.c.l.bf16 %v242
      %v275 = vunpack.c.l.bf16 %v243
      %v276 = vunpack.c.l.bf16 %v244
      %v277 = vunpack.c.l.bf16 %v245
      %v278 = vunpack.c.l.bf16 %v246
      %v279 = vunpack.c.l.bf16 %v247
      %v280 = vunpack.c.l.bf16 %v248
      %v281 = vunpack.c.l.bf16 %v249
      %v282 = vunpack.c.l.bf16 %v250
      %v283 = vunpack.c.l.bf16 %v251
      %v284 = vunpack.c.l.bf16 %v252
      %v285 = vunpack.c.l.bf16 %v253
      %v286 = vunpack.c.l.bf16 %v254
      %v287 = vunpack.c.l.bf16 %v255
      %v288 = vunpack.c.l.bf16 %v256
      %v289 = vunpack.c.l.bf16 %v257
      %v290 = vunpack.c.l.bf16 %v258
      %v291 = vunpack.c.l.bf16 %v259
      %v292 = vunpack.c.l.bf16 %v260
      %v293 = vunpack.c.l.bf16 %v261
      %v294 = vunpack.c.l.bf16 %v262
      %v295 = vunpack.c.l.bf16 %v263
      %v296 = vunpack.c.l.bf16 %v264
      %v297 = vunpack.c.l.bf16 %v265
      %v298 = vld [vmem:[%s4] sm:$0x3]
      %v299 = vld [vmem:[%s4 + $0x2] sm:$0x1]
      %v300 = vld [vmem:[%s4 + $0x3] sm:$0x1]
      %v301 = vld [vmem:[%s4 + $0x4] sm:$0x1]
      %s302 = scalar_lea.vmem %s1, 128
      %v303 = vld [vmem:[%s302] sm:$0xff]
      %v304 = vld [vmem:[%s302 + $0x8] sm:$0xff]
      %v305 = vld [vmem:[%s302 + $0x10] sm:$0xff]
      %v306 = vld [vmem:[%s302 + $0x18] sm:$0xff]
      %v307 = vld [vmem:[%s302 + $0x20] sm:$0xff]
      %v308 = vld [vmem:[%s302 + $0x28] sm:$0xff]
      %v309 = vld [vmem:[%s302 + $0x30] sm:$0xff]
      %v310 = vld [vmem:[%s302 + $0x38] sm:$0xff]
      %v311 = vld [vmem:[%s302 + $0x40] sm:$0xff]
      %v312 = vld [vmem:[%s302 + $0x48] sm:$0xff]
      %v313 = vld [vmem:[%s302 + $0x50] sm:$0xff]
      %v314 = vld [vmem:[%s302 + $0x58] sm:$0xff]
      %v315 = vld [vmem:[%s302 + $0x60] sm:$0xff]
      %v316 = vld [vmem:[%s302 + $0x68] sm:$0xff]
      %v317 = vld [vmem:[%s302 + $0x70] sm:$0xff]
      %v318 = vld [vmem:[%s302 + $0x78] sm:$0xff]
      %v351 = vunpack.c.l.b16 %v234
      %v352 = vunpack.c.l.b16 %v235
      %v353 = vunpack.c.l.b16 %v236
      %v354 = vunpack.c.l.b16 %v237
      %v355 = vunpack.c.l.b16 %v238
      %v356 = vunpack.c.l.b16 %v239
      %v357 = vunpack.c.l.b16 %v240
      %v358 = vunpack.c.l.b16 %v241
      %v359 = vunpack.c.l.b16 %v242
      %v360 = vunpack.c.l.b16 %v243
      %v361 = vunpack.c.l.b16 %v244
      %v362 = vunpack.c.l.b16 %v245
      %v363 = vunpack.c.l.b16 %v246
      %v364 = vunpack.c.l.b16 %v247
      %v365 = vunpack.c.l.b16 %v248
      %v366 = vunpack.c.l.b16 %v249
      %v367 = vunpack.c.l.b16 %v250
      %v368 = vunpack.c.l.b16 %v251
      %v369 = vunpack.c.l.b16 %v252
      %v370 = vunpack.c.l.b16 %v253
      %v371 = vunpack.c.l.b16 %v254
      %v372 = vunpack.c.l.b16 %v255
      %v373 = vunpack.c.l.b16 %v256
      %v374 = vunpack.c.l.b16 %v257
      %v375 = vunpack.c.l.b16 %v258
      %v376 = vunpack.c.l.b16 %v259
      %v377 = vunpack.c.l.b16 %v260
      %v378 = vunpack.c.l.b16 %v261
      %v379 = vunpack.c.l.b16 %v262
      %v380 = vunpack.c.l.b16 %v263
      %v381 = vunpack.c.l.b16 %v264
      %v382 = vunpack.c.l.b16 %v265
      %v383 = vpack.c.b16 %v352, %v351
      %v384 = vpack.c.b16 %v354, %v353
      %v385 = vpack.c.b16 %v356, %v355
      %v386 = vpack.c.b16 %v358, %v357
      %v387 = vpack.c.b16 %v360, %v359
      %v388 = vpack.c.b16 %v362, %v361
      %v389 = vpack.c.b16 %v364, %v363
      %v390 = vpack.c.b16 %v366, %v365
      %v391 = vpack.c.b16 %v368, %v367
      %v392 = vpack.c.b16 %v370, %v369
      %v393 = vpack.c.b16 %v372, %v371
      %v394 = vpack.c.b16 %v374, %v373
      %v395 = vpack.c.b16 %v376, %v375
      %v396 = vpack.c.b16 %v378, %v377
      %v397 = vpack.c.b16 %v380, %v379
      %v398 = vpack.c.b16 %v382, %v381
      %vm399 = vsmask.f32 256
      %v401 = vshrl.u32 %v383, 16
      %v403 = vrot.slane %v401, 7
      %v404 = vshll.u32 %v383, 16
      %v406 = vor.u32 %v403, %v404
      %v408 = vshrl.u32 %v384, 16
      %v410 = vrot.slane %v408, 7
      %v411 = vshll.u32 %v384, 16
      %v413 = vor.u32 %v410, %v411
      %v414 = vsel %vm399, %v403, %v413
      %v416 = vshrl.u32 %v385, 16
      %v418 = vrot.slane %v416, 7
      %v419 = vshll.u32 %v385, 16
      %v421 = vor.u32 %v418, %v419
      %v422 = vsel %vm399, %v410, %v421
      %v424 = vshrl.u32 %v386, 16
      %v426 = vrot.slane %v424, 7
      %v427 = vshll.u32 %v386, 16
      %v429 = vor.u32 %v426, %v427
      %v430 = vsel %vm399, %v418, %v429
      %v432 = vshrl.u32 %v387, 16
      %v434 = vrot.slane %v432, 7
      %v435 = vshll.u32 %v387, 16
      %v437 = vor.u32 %v434, %v435
      %v439 = vshrl.u32 %v388, 16
      %v441 = vrot.slane %v439, 7
      %v442 = vshll.u32 %v388, 16
      %v444 = vor.u32 %v441, %v442
      %v445 = vsel %vm399, %v434, %v444
      %v447 = vshrl.u32 %v389, 16
      %v449 = vrot.slane %v447, 7
      %v450 = vshll.u32 %v389, 16
      %v452 = vor.u32 %v449, %v450
      %v453 = vsel %vm399, %v441, %v452
      %v455 = vshrl.u32 %v390, 16
      %v457 = vrot.slane %v455, 7
      %v458 = vshll.u32 %v390, 16
      %v460 = vor.u32 %v457, %v458
      %v461 = vsel %vm399, %v449, %v460
      %v463 = vshrl.u32 %v391, 16
      %v465 = vrot.slane %v463, 7
      %v466 = vshll.u32 %v391, 16
      %v468 = vor.u32 %v465, %v466
      %v470 = vshrl.u32 %v392, 16
      %v472 = vrot.slane %v470, 7
      %v473 = vshll.u32 %v392, 16
      %v475 = vor.u32 %v472, %v473
      %v476 = vsel %vm399, %v465, %v475
      %v478 = vshrl.u32 %v393, 16
      %v480 = vrot.slane %v478, 7
      %v481 = vshll.u32 %v393, 16
      %v483 = vor.u32 %v480, %v481
      %v484 = vsel %vm399, %v472, %v483
      %v486 = vshrl.u32 %v394, 16
      %v488 = vrot.slane %v486, 7
      %v489 = vshll.u32 %v394, 16
      %v491 = vor.u32 %v488, %v489
      %v492 = vsel %vm399, %v480, %v491
      %v494 = vshrl.u32 %v395, 16
      %v496 = vrot.slane %v494, 7
      %v497 = vshll.u32 %v395, 16
      %v499 = vor.u32 %v496, %v497
      %v501 = vshrl.u32 %v396, 16
      %v503 = vrot.slane %v501, 7
      %v504 = vshll.u32 %v396, 16
      %v506 = vor.u32 %v503, %v504
      %v507 = vsel %vm399, %v496, %v506
      %v509 = vshrl.u32 %v397, 16
      %v511 = vrot.slane %v509, 7
      %v512 = vshll.u32 %v397, 16
      %v514 = vor.u32 %v511, %v512
      %v515 = vsel %vm399, %v503, %v514
      %v517 = vshrl.u32 %v398, 16
      %v519 = vrot.slane %v517, 7
      %v520 = vshll.u32 %v398, 16
      %v522 = vor.u32 %v519, %v520
      %v523 = vsel %vm399, %v511, %v522
      %vm540 = vcmask 1040384
      %vm541 = vmand %vm540, %vm399
      %v542 = vsel %vm541, 0, %v406
      %v543 = vsel %vm541, 0, %v437
      %v544 = vsel %vm541, 0, %v468
      %v545 = vsel %vm541, 0, %v499
      %v546 = vld [vmem:[%s1] sm:$0xff]
      %v547 = vld [vmem:[%s1 + $0x8] sm:$0xff]
      %v548 = vld [vmem:[%s1 + $0x10] sm:$0xff]
      %v549 = vld [vmem:[%s1 + $0x18] sm:$0xff]
      %v550 = vld [vmem:[%s1 + $0x20] sm:$0xff]
      %v551 = vld [vmem:[%s1 + $0x28] sm:$0xff]
      %v552 = vld [vmem:[%s1 + $0x30] sm:$0xff]
      %v553 = vld [vmem:[%s1 + $0x38] sm:$0xff]
      %v554 = vld [vmem:[%s1 + $0x40] sm:$0xff]
      %v555 = vld [vmem:[%s1 + $0x48] sm:$0xff]
      %v556 = vld [vmem:[%s1 + $0x50] sm:$0xff]
      %v557 = vld [vmem:[%s1 + $0x58] sm:$0xff]
      %v558 = vld [vmem:[%s1 + $0x60] sm:$0xff]
      %v559 = vld [vmem:[%s1 + $0x68] sm:$0xff]
      %v560 = vld [vmem:[%s1 + $0x70] sm:$0xff]
      %v561 = vld [vmem:[%s1 + $0x78] sm:$0xff]
      %v578 = vunpack.c.l.b16 %v546
      %v579 = vunpack.c.h.b16 %v546
      %v580 = vunpack.c.l.b16 %v547
      %v581 = vunpack.c.h.b16 %v547
      %v582 = vunpack.c.l.b16 %v548
      %v583 = vunpack.c.h.b16 %v548
      %v584 = vunpack.c.l.b16 %v549
      %v585 = vunpack.c.h.b16 %v549
      %v586 = vunpack.c.l.b16 %v550
      %v587 = vunpack.c.h.b16 %v550
      %v588 = vunpack.c.l.b16 %v551
      %v589 = vunpack.c.h.b16 %v551
      %v590 = vunpack.c.l.b16 %v552
      %v591 = vunpack.c.h.b16 %v552
      %v592 = vunpack.c.l.b16 %v553
      %v593 = vunpack.c.h.b16 %v553
      %v594 = vunpack.c.l.b16 %v554
      %v595 = vunpack.c.h.b16 %v554
      %v596 = vunpack.c.l.b16 %v555
      %v597 = vunpack.c.h.b16 %v555
      %v598 = vunpack.c.l.b16 %v556
      %v599 = vunpack.c.h.b16 %v556
      %v600 = vunpack.c.l.b16 %v557
      %v601 = vunpack.c.h.b16 %v557
      %v602 = vunpack.c.l.b16 %v558
      %v603 = vunpack.c.h.b16 %v558
      %v604 = vunpack.c.l.b16 %v559
      %v605 = vunpack.c.h.b16 %v559
      %v606 = vunpack.c.l.b16 %v560
      %v607 = vunpack.c.h.b16 %v560
      %v608 = vunpack.c.l.b16 %v561
      %v609 = vunpack.c.h.b16 %v561
      %v610 = vpack.c.b16 %v580, %v578
      %v611 = vpack.c.b16 %v581, %v579
      %v612 = vpack.c.b16 %v584, %v582
      %v613 = vpack.c.b16 %v585, %v583
      %v614 = vpack.c.b16 %v588, %v586
      %v615 = vpack.c.b16 %v589, %v587
      %v616 = vpack.c.b16 %v592, %v590
      %v617 = vpack.c.b16 %v593, %v591
      %v618 = vpack.c.b16 %v596, %v594
      %v619 = vpack.c.b16 %v597, %v595
      %v620 = vpack.c.b16 %v600, %v598
      %v621 = vpack.c.b16 %v601, %v599
      %v622 = vpack.c.b16 %v604, %v602
      %v623 = vpack.c.b16 %v605, %v603
      %v624 = vpack.c.b16 %v608, %v606
      %v625 = vpack.c.b16 %v609, %v607
      %642 = vmatprep.subr.bf16.mxu0 %v611
      %643 = vmatpush1.bf16.msra.mxu0 %v610
      %644 = vmatprep.subr.bf16.mxu0 %v613
      %645 = vmatpush1.bf16.msra.mxu0 %v612
      %646 = vmatprep.subr.bf16.mxu0 %v615
      %647 = vmatpush1.bf16.msra.mxu0 %v614
      %648 = vmatprep.subr.bf16.mxu0 %v617
      %649 = vmatpush1.bf16.msra.mxu0 %v616
      %650 = vmatprep.subr.bf16.mxu0 %v619
      %651 = vmatpush1.bf16.msra.mxu0 %v618
      %652 = vmatprep.subr.bf16.mxu0 %v621
      %653 = vmatpush1.bf16.msra.mxu0 %v620
      %654 = vmatprep.subr.bf16.mxu0 %v623
      %655 = vmatpush1.bf16.msra.mxu0 %v622
      %656 = vmatprep.subr.bf16.mxu0 %v625
      %657 = vmatpush1.bf16.msra.mxu0 %v624
      %658 = vmatprep.subr.bf16.mxu0 0
      %659 = vmatpush1.bf16.msra.mxu0 0
      %660 = vmatprep.subr.bf16.mxu0 0
      %661 = vmatpush1.bf16.msra.mxu0 0
      %662 = vmatprep.subr.bf16.mxu0 0
      %663 = vmatpush1.bf16.msra.mxu0 0
      %664 = vmatprep.subr.bf16.mxu0 0
      %665 = vmatpush1.bf16.msra.mxu0 0
      %666 = vmatprep.subr.bf16.mxu0 0
      %667 = vmatpush1.bf16.msra.mxu0 0
      %668 = vmatprep.subr.bf16.mxu0 0
      %669 = vmatpush1.bf16.msra.mxu0 0
      %670 = vmatprep.subr.bf16.mxu0 0
      %671 = vmatpush1.bf16.msra.mxu0 0
      %672 = vmatprep.subr.bf16.mxu0 0
      %673 = vmatpush1.bf16.msra.mxu0 0
      %674 = vmatprep.mubr.bf16.mxu0 0
      %675 = vmatmul.mubr.bf16.gmra.mrb[0].mxu0 %v542
      %v676 = vpop.f32.mrb[0].mxu0
      %v677 = vadd.f32 0.0, %v676
      %v678 = vpop.f32.mrb[0].mxu0
      %v679 = vadd.f32 0.0, %v678
      %v680 = vpop.f32.mrb[0].mxu0
      %v681 = vadd.f32 0.0, %v680
      %v682 = vpop.f32.mrb[0].mxu0
      %v683 = vadd.f32 0.0, %v682
      %684 = vmatprep.mubr.bf16.mxu0 0
      %685 = vmatmul.mubr.bf16.gmra.mrb[0].mxu0 %v414
      %v686 = vpop.f32.mrb[0].mxu0
      %v687 = vadd.f32 0.0, %v686
      %v688 = vpop.f32.mrb[0].mxu0
      %v689 = vadd.f32 0.0, %v688
      %v690 = vpop.f32.mrb[0].mxu0
      %v691 = vadd.f32 0.0, %v690
      %v692 = vpop.f32.mrb[0].mxu0
      %v693 = vadd.f32 0.0, %v692
      %694 = vmatprep.mubr.bf16.mxu0 0
      %695 = vmatmul.mubr.bf16.gmra.mrb[0].mxu0 %v422
      %v696 = vpop.f32.mrb[0].mxu0
      %v697 = vadd.f32 0.0, %v696
      %v698 = vpop.f32.mrb[0].mxu0
      %v699 = vadd.f32 0.0, %v698
      %v700 = vpop.f32.mrb[0].mxu0
      %v701 = vadd.f32 0.0, %v700
      %v702 = vpop.f32.mrb[0].mxu0
      %v703 = vadd.f32 0.0, %v702
      %704 = vmatprep.mubr.bf16.mxu0 0
      %705 = vmatmul.mubr.bf16.gmra.mrb[0].mxu0 %v430
      %v706 = vpop.f32.mrb[0].mxu0
      %v707 = vadd.f32 0.0, %v706
      %v708 = vpop.f32.mrb[0].mxu0
      %v709 = vadd.f32 0.0, %v708
      %v710 = vpop.f32.mrb[0].mxu0
      %v711 = vadd.f32 0.0, %v710
      %v712 = vpop.f32.mrb[0].mxu0
      %v713 = vadd.f32 0.0, %v712
      %714 = vmatprep.mubr.bf16.mxu0 0
      %715 = vmatmul.mubr.bf16.gmra.mrb[0].mxu0 %v543
      %v716 = vpop.f32.mrb[0].mxu0
      %v717 = vadd.f32 0.0, %v716
      %v718 = vpop.f32.mrb[0].mxu0
      %v719 = vadd.f32 0.0, %v718
      %v720 = vpop.f32.mrb[0].mxu0
      %v721 = vadd.f32 0.0, %v720
      %v722 = vpop.f32.mrb[0].mxu0
      %v723 = vadd.f32 0.0, %v722
      %724 = vmatprep.mubr.bf16.mxu0 0
      %725 = vmatmul.mubr.bf16.gmra.mrb[0].mxu0 %v445
      %v726 = vpop.f32.mrb[0].mxu0
      %v727 = vadd.f32 0.0, %v726
      %v728 = vpop.f32.mrb[0].mxu0
      %v729 = vadd.f32 0.0, %v728
      %v730 = vpop.f32.mrb[0].mxu0
      %v731 = vadd.f32 0.0, %v730
      %v732 = vpop.f32.mrb[0].mxu0
      %v733 = vadd.f32 0.0, %v732
      %734 = vmatprep.mubr.bf16.mxu0 0
      %735 = vmatmul.mubr.bf16.gmra.mrb[0].mxu0 %v453
      %v736 = vpop.f32.mrb[0].mxu0
      %v737 = vadd.f32 0.0, %v736
      %v738 = vpop.f32.mrb[0].mxu0
      %v739 = vadd.f32 0.0, %v738
      %v740 = vpop.f32.mrb[0].mxu0
      %v741 = vadd.f32 0.0, %v740
      %v742 = vpop.f32.mrb[0].mxu0
      %v743 = vadd.f32 0.0, %v742
      %744 = vmatprep.mubr.bf16.mxu0 0
      %745 = vmatmul.mubr.bf16.gmra.mrb[0].mxu0 %v461
      %v746 = vpop.f32.mrb[0].mxu0
      %v747 = vadd.f32 0.0, %v746
      %v748 = vpop.f32.mrb[0].mxu0
      %v749 = vadd.f32 0.0, %v748
      %v750 = vpop.f32.mrb[0].mxu0
      %v751 = vadd.f32 0.0, %v750
      %v752 = vpop.f32.mrb[0].mxu0
      %v753 = vadd.f32 0.0, %v752
      %754 = vmatprep.mubr.bf16.mxu0 0
      %755 = vmatmul.mubr.bf16.gmra.mrb[0].mxu0 %v544
      %v756 = vpop.f32.mrb[0].mxu0
      %v757 = vadd.f32 0.0, %v756
      %v758 = vpop.f32.mrb[0].mxu0
      %v759 = vadd.f32 0.0, %v758
      %v760 = vpop.f32.mrb[0].mxu0
      %v761 = vadd.f32 0.0, %v760
      %v762 = vpop.f32.mrb[0].mxu0
      %v763 = vadd.f32 0.0, %v762
      %764 = vmatprep.mubr.bf16.mxu0 0
      %765 = vmatmul.mubr.bf16.gmra.mrb[0].mxu0 %v476
      %v766 = vpop.f32.mrb[0].mxu0
      %v767 = vadd.f32 0.0, %v766
      %v768 = vpop.f32.mrb[0].mxu0
      %v769 = vadd.f32 0.0, %v768
      %v770 = vpop.f32.mrb[0].mxu0
      %v771 = vadd.f32 0.0, %v770
      %v772 = vpop.f32.mrb[0].mxu0
      %v773 = vadd.f32 0.0, %v772
      %774 = vmatprep.mubr.bf16.mxu0 0
      %775 = vmatmul.mubr.bf16.gmra.mrb[0].mxu0 %v484
      %v776 = vpop.f32.mrb[0].mxu0
      %v777 = vadd.f32 0.0, %v776
      %v778 = vpop.f32.mrb[0].mxu0
      %v779 = vadd.f32 0.0, %v778
      %v780 = vpop.f32.mrb[0].mxu0
      %v781 = vadd.f32 0.0, %v780
      %v782 = vpop.f32.mrb[0].mxu0
      %v783 = vadd.f32 0.0, %v782
      %784 = vmatprep.mubr.bf16.mxu0 0
      %785 = vmatmul.mubr.bf16.gmra.mrb[0].mxu0 %v492
      %v786 = vpop.f32.mrb[0].mxu0
      %v787 = vadd.f32 0.0, %v786
      %v788 = vpop.f32.mrb[0].mxu0
      %v789 = vadd.f32 0.0, %v788
      %v790 = vpop.f32.mrb[0].mxu0
      %v791 = vadd.f32 0.0, %v790
      %v792 = vpop.f32.mrb[0].mxu0
      %v793 = vadd.f32 0.0, %v792
      %794 = vmatprep.mubr.bf16.mxu0 0
      %795 = vmatmul.mubr.bf16.gmra.mrb[0].mxu0 %v545
      %v796 = vpop.f32.mrb[0].mxu0
      %v797 = vadd.f32 0.0, %v796
      %v798 = vpop.f32.mrb[0].mxu0
      %v799 = vadd.f32 0.0, %v798
      %v800 = vpop.f32.mrb[0].mxu0
      %v801 = vadd.f32 0.0, %v800
      %v802 = vpop.f32.mrb[0].mxu0
      %v803 = vadd.f32 0.0, %v802
      %804 = vmatprep.mubr.bf16.mxu0 0
      %805 = vmatmul.mubr.bf16.gmra.mrb[0].mxu0 %v507
      %v806 = vpop.f32.mrb[0].mxu0
      %v807 = vadd.f32 0.0, %v806
      %v808 = vpop.f32.mrb[0].mxu0
      %v809 = vadd.f32 0.0, %v808
      %v810 = vpop.f32.mrb[0].mxu0
      %v811 = vadd.f32 0.0, %v810
      %v812 = vpop.f32.mrb[0].mxu0
      %v813 = vadd.f32 0.0, %v812
      %814 = vmatprep.mubr.bf16.mxu0 0
      %815 = vmatmul.mubr.bf16.gmra.mrb[0].mxu0 %v515
      %v816 = vpop.f32.mrb[0].mxu0
      %v817 = vadd.f32 0.0, %v816
      %v818 = vpop.f32.mrb[0].mxu0
      %v819 = vadd.f32 0.0, %v818
      %v820 = vpop.f32.mrb[0].mxu0
      %v821 = vadd.f32 0.0, %v820
      %v822 = vpop.f32.mrb[0].mxu0
      %v823 = vadd.f32 0.0, %v822
      %824 = vmatprep.mubr.bf16.mxu0 0
      %825 = vmatmul.mubr.bf16.gmra.mrb[0].mxu0 %v523
      %v826 = vpop.f32.mrb[0].mxu0
      %v827 = vadd.f32 0.0, %v826
      %v828 = vpop.f32.mrb[0].mxu0
      %v829 = vadd.f32 0.0, %v828
      %v830 = vpop.f32.mrb[0].mxu0
      %v831 = vadd.f32 0.0, %v830
      %v832 = vpop.f32.mrb[0].mxu0
      %v833 = vadd.f32 0.0, %v832
      %834 = vdwg.mxu0
      %v867 = vunpack.c.l.b16 %v303
      %v868 = vunpack.c.h.b16 %v303
      %v869 = vunpack.c.l.b16 %v304
      %v870 = vunpack.c.h.b16 %v304
      %v871 = vunpack.c.l.b16 %v305
      %v872 = vunpack.c.h.b16 %v305
      %v873 = vunpack.c.l.b16 %v306
      %v874 = vunpack.c.h.b16 %v306
      %v875 = vunpack.c.l.b16 %v307
      %v876 = vunpack.c.h.b16 %v307
      %v877 = vunpack.c.l.b16 %v308
      %v878 = vunpack.c.h.b16 %v308
      %v879 = vunpack.c.l.b16 %v309
      %v880 = vunpack.c.h.b16 %v309
      %v881 = vunpack.c.l.b16 %v310
      %v882 = vunpack.c.h.b16 %v310
      %v883 = vunpack.c.l.b16 %v311
      %v884 = vunpack.c.h.b16 %v311
      %v885 = vunpack.c.l.b16 %v312
      %v886 = vunpack.c.h.b16 %v312
      %v887 = vunpack.c.l.b16 %v313
      %v888 = vunpack.c.h.b16 %v313
      %v889 = vunpack.c.l.b16 %v314
      %v890 = vunpack.c.h.b16 %v314
      %v891 = vunpack.c.l.b16 %v315
      %v892 = vunpack.c.h.b16 %v315
      %v893 = vunpack.c.l.b16 %v316
      %v894 = vunpack.c.h.b16 %v316
      %v895 = vunpack.c.l.b16 %v317
      %v896 = vunpack.c.h.b16 %v317
      %v897 = vunpack.c.l.b16 %v318
      %v898 = vunpack.c.h.b16 %v318
      %v899 = vpack.c.b16 %v869, %v867
      %v900 = vpack.c.b16 %v870, %v868
      %v901 = vpack.c.b16 %v873, %v871
      %v902 = vpack.c.b16 %v874, %v872
      %v903 = vpack.c.b16 %v877, %v875
      %v904 = vpack.c.b16 %v878, %v876
      %v905 = vpack.c.b16 %v881, %v879
      %v906 = vpack.c.b16 %v882, %v880
      %v907 = vpack.c.b16 %v885, %v883
      %v908 = vpack.c.b16 %v886, %v884
      %v909 = vpack.c.b16 %v889, %v887
      %v910 = vpack.c.b16 %v890, %v888
      %v911 = vpack.c.b16 %v893, %v891
      %v912 = vpack.c.b16 %v894, %v892
      %v913 = vpack.c.b16 %v897, %v895
      %v914 = vpack.c.b16 %v898, %v896
      %931 = vmatprep.subr.bf16.mxu0 %v900
      %932 = vmatpush1.bf16.msra.mxu0 %v899
      %933 = vmatprep.subr.bf16.mxu0 %v902
      %934 = vmatpush1.bf16.msra.mxu0 %v901
      %935 = vmatprep.subr.bf16.mxu0 %v904
      %936 = vmatpush1.bf16.msra.mxu0 %v903
      %937 = vmatprep.subr.bf16.mxu0 %v906
      %938 = vmatpush1.bf16.msra.mxu0 %v905
      %939 = vmatprep.subr.bf16.mxu0 %v908
      %940 = vmatpush1.bf16.msra.mxu0 %v907
      %941 = vmatprep.subr.bf16.mxu0 %v910
      %942 = vmatpush1.bf16.msra.mxu0 %v909
      %943 = vmatprep.subr.bf16.mxu0 %v912
      %944 = vmatpush1.bf16.msra.mxu0 %v911
      %945 = vmatprep.subr.bf16.mxu0 %v914
      %946 = vmatpush1.bf16.msra.mxu0 %v913
      %947 = vmatprep.subr.bf16.mxu0 0
      %948 = vmatpush1.bf16.msra.mxu0 0
      %949 = vmatprep.subr.bf16.mxu0 0
      %950 = vmatpush1.bf16.msra.mxu0 0
      %951 = vmatprep.subr.bf16.mxu0 0
      %952 = vmatpush1.bf16.msra.mxu0 0
      %953 = vmatprep.subr.bf16.mxu0 0
      %954 = vmatpush1.bf16.msra.mxu0 0
      %955 = vmatprep.subr.bf16.mxu0 0
      %956 = vmatpush1.bf16.msra.mxu0 0
      %957 = vmatprep.subr.bf16.mxu0 0
      %958 = vmatpush1.bf16.msra.mxu0 0
      %959 = vmatprep.subr.bf16.mxu0 0
      %960 = vmatpush1.bf16.msra.mxu0 0
      %961 = vmatprep.subr.bf16.mxu0 0
      %962 = vmatpush1.bf16.msra.mxu0 0
      %963 = vmatprep.mubr.bf16.mxu0 0
      %964 = vmatmul.mubr.bf16.gmra.mrb[0].mxu0 %v383
      %v965 = vpop.f32.mrb[0].mxu0
      %v966 = vadd.f32 %v677, %v965
      %v967 = vpop.f32.mrb[0].mxu0
      %v968 = vadd.f32 %v679, %v967
      %v969 = vpop.f32.mrb[0].mxu0
      %v970 = vadd.f32 %v681, %v969
      %v971 = vpop.f32.mrb[0].mxu0
      %v972 = vadd.f32 %v683, %v971
      %973 = vmatprep.mubr.bf16.mxu0 0
      %974 = vmatmul.mubr.bf16.gmra.mrb[0].mxu0 %v384
      %v975 = vpop.f32.mrb[0].mxu0
      %v976 = vadd.f32 %v687, %v975
      %v977 = vpop.f32.mrb[0].mxu0
      %v978 = vadd.f32 %v689, %v977
      %v979 = vpop.f32.mrb[0].mxu0
      %v980 = vadd.f32 %v691, %v979
      %v981 = vpop.f32.mrb[0].mxu0
      %v982 = vadd.f32 %v693, %v981
      %983 = vmatprep.mubr.bf16.mxu0 0
      %984 = vmatmul.mubr.bf16.gmra.mrb[0].mxu0 %v385
      %v985 = vpop.f32.mrb[0].mxu0
      %v986 = vadd.f32 %v697, %v985
      %v987 = vpop.f32.mrb[0].mxu0
      %v988 = vadd.f32 %v699, %v987
      %v989 = vpop.f32.mrb[0].mxu0
      %v990 = vadd.f32 %v701, %v989
      %v991 = vpop.f32.mrb[0].mxu0
      %v992 = vadd.f32 %v703, %v991
      %993 = vmatprep.mubr.bf16.mxu0 0
      %994 = vmatmul.mubr.bf16.gmra.mrb[0].mxu0 %v386
      %v995 = vpop.f32.mrb[0].mxu0
      %v996 = vadd.f32 %v707, %v995
      %v997 = vpop.f32.mrb[0].mxu0
      %v998 = vadd.f32 %v709, %v997
      %v999 = vpop.f32.mrb[0].mxu0
      %v1000 = vadd.f32 %v711, %v999
      %v1001 = vpop.f32.mrb[0].mxu0
      %v1002 = vadd.f32 %v713, %v1001
      %1003 = vmatprep.mubr.bf16.mxu0 0
      %1004 = vmatmul.mubr.bf16.gmra.mrb[0].mxu0 %v387
      %v1005 = vpop.f32.mrb[0].mxu0
      %v1006 = vadd.f32 %v717, %v1005
      %v1007 = vpop.f32.mrb[0].mxu0
      %v1008 = vadd.f32 %v719, %v1007
      %v1009 = vpop.f32.mrb[0].mxu0
      %v1010 = vadd.f32 %v721, %v1009
      %v1011 = vpop.f32.mrb[0].mxu0
      %v1012 = vadd.f32 %v723, %v1011
      %1013 = vmatprep.mubr.bf16.mxu0 0
      %1014 = vmatmul.mubr.bf16.gmra.mrb[0].mxu0 %v388
      %v1015 = vpop.f32.mrb[0].mxu0
      %v1016 = vadd.f32 %v727, %v1015
      %v1017 = vpop.f32.mrb[0].mxu0
      %v1018 = vadd.f32 %v729, %v1017
      %v1019 = vpop.f32.mrb[0].mxu0
      %v1020 = vadd.f32 %v731, %v1019
      %v1021 = vpop.f32.mrb[0].mxu0
      %v1022 = vadd.f32 %v733, %v1021
      %1023 = vmatprep.mubr.bf16.mxu0 0
      %1024 = vmatmul.mubr.bf16.gmra.mrb[0].mxu0 %v389
      %v1025 = vpop.f32.mrb[0].mxu0
      %v1026 = vadd.f32 %v737, %v1025
      %v1027 = vpop.f32.mrb[0].mxu0
      %v1028 = vadd.f32 %v739, %v1027
      %v1029 = vpop.f32.mrb[0].mxu0
      %v1030 = vadd.f32 %v741, %v1029
      %v1031 = vpop.f32.mrb[0].mxu0
      %v1032 = vadd.f32 %v743, %v1031
      %1033 = vmatprep.mubr.bf16.mxu0 0
      %1034 = vmatmul.mubr.bf16.gmra.mrb[0].mxu0 %v390
      %v1035 = vpop.f32.mrb[0].mxu0
      %v1036 = vadd.f32 %v747, %v1035
      %v1037 = vpop.f32.mrb[0].mxu0
      %v1038 = vadd.f32 %v749, %v1037
      %v1039 = vpop.f32.mrb[0].mxu0
      %v1040 = vadd.f32 %v751, %v1039
      %v1041 = vpop.f32.mrb[0].mxu0
      %v1042 = vadd.f32 %v753, %v1041
      %1043 = vmatprep.mubr.bf16.mxu0 0
      %1044 = vmatmul.mubr.bf16.gmra.mrb[0].mxu0 %v391
      %v1045 = vpop.f32.mrb[0].mxu0
      %v1046 = vadd.f32 %v757, %v1045
      %v1047 = vpop.f32.mrb[0].mxu0
      %v1048 = vadd.f32 %v759, %v1047
      %v1049 = vpop.f32.mrb[0].mxu0
      %v1050 = vadd.f32 %v761, %v1049
      %v1051 = vpop.f32.mrb[0].mxu0
      %v1052 = vadd.f32 %v763, %v1051
      %1053 = vmatprep.mubr.bf16.mxu0 0
      %1054 = vmatmul.mubr.bf16.gmra.mrb[0].mxu0 %v392
      %v1055 = vpop.f32.mrb[0].mxu0
      %v1056 = vadd.f32 %v767, %v1055
      %v1057 = vpop.f32.mrb[0].mxu0
      %v1058 = vadd.f32 %v769, %v1057
      %v1059 = vpop.f32.mrb[0].mxu0
      %v1060 = vadd.f32 %v771, %v1059
      %v1061 = vpop.f32.mrb[0].mxu0
      %v1062 = vadd.f32 %v773, %v1061
      %1063 = vmatprep.mubr.bf16.mxu0 0
      %1064 = vmatmul.mubr.bf16.gmra.mrb[0].mxu0 %v393
      %v1065 = vpop.f32.mrb[0].mxu0
      %v1066 = vadd.f32 %v777, %v1065
      %v1067 = vpop.f32.mrb[0].mxu0
      %v1068 = vadd.f32 %v779, %v1067
      %v1069 = vpop.f32.mrb[0].mxu0
      %v1070 = vadd.f32 %v781, %v1069
      %v1071 = vpop.f32.mrb[0].mxu0
      %v1072 = vadd.f32 %v783, %v1071
      %1073 = vmatprep.mubr.bf16.mxu0 0
      %1074 = vmatmul.mubr.bf16.gmra.mrb[0].mxu0 %v394
      %v1075 = vpop.f32.mrb[0].mxu0
      %v1076 = vadd.f32 %v787, %v1075
      %v1077 = vpop.f32.mrb[0].mxu0
      %v1078 = vadd.f32 %v789, %v1077
      %v1079 = vpop.f32.mrb[0].mxu0
      %v1080 = vadd.f32 %v791, %v1079
      %v1081 = vpop.f32.mrb[0].mxu0
      %v1082 = vadd.f32 %v793, %v1081
      %1083 = vmatprep.mubr.bf16.mxu0 0
      %1084 = vmatmul.mubr.bf16.gmra.mrb[0].mxu0 %v395
      %v1085 = vpop.f32.mrb[0].mxu0
      %v1086 = vadd.f32 %v797, %v1085
      %v1087 = vpop.f32.mrb[0].mxu0
      %v1088 = vadd.f32 %v799, %v1087
      %v1089 = vpop.f32.mrb[0].mxu0
      %v1090 = vadd.f32 %v801, %v1089
      %v1091 = vpop.f32.mrb[0].mxu0
      %v1092 = vadd.f32 %v803, %v1091
      %1093 = vmatprep.mubr.bf16.mxu0 0
      %1094 = vmatmul.mubr.bf16.gmra.mrb[0].mxu0 %v396
      %v1095 = vpop.f32.mrb[0].mxu0
      %v1096 = vadd.f32 %v807, %v1095
      %v1097 = vpop.f32.mrb[0].mxu0
      %v1098 = vadd.f32 %v809, %v1097
      %v1099 = vpop.f32.mrb[0].mxu0
      %v1100 = vadd.f32 %v811, %v1099
      %v1101 = vpop.f32.mrb[0].mxu0
      %v1102 = vadd.f32 %v813, %v1101
      %1103 = vmatprep.mubr.bf16.mxu0 0
      %1104 = vmatmul.mubr.bf16.gmra.mrb[0].mxu0 %v397
      %v1105 = vpop.f32.mrb[0].mxu0
      %v1106 = vadd.f32 %v817, %v1105
      %v1107 = vpop.f32.mrb[0].mxu0
      %v1108 = vadd.f32 %v819, %v1107
      %v1109 = vpop.f32.mrb[0].mxu0
      %v1110 = vadd.f32 %v821, %v1109
      %v1111 = vpop.f32.mrb[0].mxu0
      %v1112 = vadd.f32 %v823, %v1111
      %1113 = vmatprep.mubr.bf16.mxu0 0
      %1114 = vmatmul.mubr.bf16.gmra.mrb[0].mxu0 %v398
      %v1115 = vpop.f32.mrb[0].mxu0
      %v1116 = vadd.f32 %v827, %v1115
      %v1117 = vpop.f32.mrb[0].mxu0
      %v1118 = vadd.f32 %v829, %v1117
      %v1119 = vpop.f32.mrb[0].mxu0
      %v1120 = vadd.f32 %v831, %v1119
      %v1121 = vpop.f32.mrb[0].mxu0
      %v1122 = vadd.f32 %v833, %v1121
      %1123 = vdwg.mxu0
      %vm1124 = vsmask.f32 7424
      %v1125 = vrot.slane %v404, 1
      %v1126 = vor.u32 %v401, %v1125
      %v1127 = vrot.slane %v411, 1
      %v1128 = vsel %vm1124, %v1126, %v1127
      %v1129 = vor.u32 %v408, %v1127
      %v1130 = vrot.slane %v419, 1
      %v1131 = vsel %vm1124, %v1129, %v1130
      %v1132 = vor.u32 %v416, %v1130
      %v1133 = vrot.slane %v427, 1
      %v1134 = vsel %vm1124, %v1132, %v1133
      %v1135 = vor.u32 %v424, %v1133
      %v1136 = vrot.slane %v435, 1
      %v1137 = vor.u32 %v432, %v1136
      %v1138 = vrot.slane %v442, 1
      %v1139 = vsel %vm1124, %v1137, %v1138
      %v1140 = vor.u32 %v439, %v1138
      %v1141 = vrot.slane %v450, 1
      %v1142 = vsel %vm1124, %v1140, %v1141
      %v1143 = vor.u32 %v447, %v1141
      %v1144 = vrot.slane %v458, 1
      %v1145 = vsel %vm1124, %v1143, %v1144
      %v1146 = vor.u32 %v455, %v1144
      %v1147 = vrot.slane %v466, 1
      %v1148 = vor.u32 %v463, %v1147
      %v1149 = vrot.slane %v473, 1
      %v1150 = vsel %vm1124, %v1148, %v1149
      %v1151 = vor.u32 %v470, %v1149
      %v1152 = vrot.slane %v481, 1
      %v1153 = vsel %vm1124, %v1151, %v1152
      %v1154 = vor.u32 %v478, %v1152
      %v1155 = vrot.slane %v489, 1
      %v1156 = vsel %vm1124, %v1154, %v1155
      %v1157 = vor.u32 %v486, %v1155
      %v1158 = vrot.slane %v497, 1
      %v1159 = vor.u32 %v494, %v1158
      %v1160 = vrot.slane %v504, 1
      %v1161 = vsel %vm1124, %v1159, %v1160
      %v1162 = vor.u32 %v501, %v1160
      %v1163 = vrot.slane %v512, 1
      %v1164 = vsel %vm1124, %v1162, %v1163
      %v1165 = vor.u32 %v509, %v1163
      %v1166 = vrot.slane %v520, 1
      %v1167 = vsel %vm1124, %v1165, %v1166
      %v1168 = vor.u32 %v517, %v1166
      %vm1185 = vcmask 1047552
      %vm1186 = vmand %vm1185, %vm1124
      %v1187 = vsel %vm1186, %v1135, 0
      %v1188 = vsel %vm1186, %v1146, 0
      %v1189 = vsel %vm1186, %v1157, 0
      %v1190 = vsel %vm1186, %v1168, 0
      %s1191 = scalar_lea.vmem %s1, 256
      %v1192 = vld [vmem:[%s1191] sm:$0xff]
      %v1193 = vld [vmem:[%s1191 + $0x8] sm:$0xff]
      %v1194 = vld [vmem:[%s1191 + $0x10] sm:$0xff]
      %v1195 = vld [vmem:[%s1191 + $0x18] sm:$0xff]
      %v1196 = vld [vmem:[%s1191 + $0x20] sm:$0xff]
      %v1197 = vld [vmem:[%s1191 + $0x28] sm:$0xff]
      %v1198 = vld [vmem:[%s1191 + $0x30] sm:$0xff]
      %v1199 = vld [vmem:[%s1191 + $0x38] sm:$0xff]
      %v1200 = vld [vmem:[%s1191 + $0x40] sm:$0xff]
      %v1201 = vld [vmem:[%s1191 + $0x48] sm:$0xff]
      %v1202 = vld [vmem:[%s1191 + $0x50] sm:$0xff]
      %v1203 = vld [vmem:[%s1191 + $0x58] sm:$0xff]
      %v1204 = vld [vmem:[%s1191 + $0x60] sm:$0xff]
      %v1205 = vld [vmem:[%s1191 + $0x68] sm:$0xff]
      %v1206 = vld [vmem:[%s1191 + $0x70] sm:$0xff]
      %v1207 = vld [vmem:[%s1191 + $0x78] sm:$0xff]
      %v1224 = vunpack.c.l.b16 %v1192
      %v1225 = vunpack.c.h.b16 %v1192
      %v1226 = vunpack.c.l.b16 %v1193
      %v1227 = vunpack.c.h.b16 %v1193
      %v1228 = vunpack.c.l.b16 %v1194
      %v1229 = vunpack.c.h.b16 %v1194
      %v1230 = vunpack.c.l.b16 %v1195
      %v1231 = vunpack.c.h.b16 %v1195
      %v1232 = vunpack.c.l.b16 %v1196
      %v1233 = vunpack.c.h.b16 %v1196
      %v1234 = vunpack.c.l.b16 %v1197
      %v1235 = vunpack.c.h.b16 %v1197
      %v1236 = vunpack.c.l.b16 %v1198
      %v1237 = vunpack.c.h.b16 %v1198
      %v1238 = vunpack.c.l.b16 %v1199
      %v1239 = vunpack.c.h.b16 %v1199
      %v1240 = vunpack.c.l.b16 %v1200
      %v1241 = vunpack.c.h.b16 %v1200
      %v1242 = vunpack.c.l.b16 %v1201
      %v1243 = vunpack.c.h.b16 %v1201
      %v1244 = vunpack.c.l.b16 %v1202
      %v1245 = vunpack.c.h.b16 %v1202
      %v1246 = vunpack.c.l.b16 %v1203
      %v1247 = vunpack.c.h.b16 %v1203
      %v1248 = vunpack.c.l.b16 %v1204
      %v1249 = vunpack.c.h.b16 %v1204
      %v1250 = vunpack.c.l.b16 %v1205
      %v1251 = vunpack.c.h.b16 %v1205
      %v1252 = vunpack.c.l.b16 %v1206
      %v1253 = vunpack.c.h.b16 %v1206
      %v1254 = vunpack.c.l.b16 %v1207
      %v1255 = vunpack.c.h.b16 %v1207
      %v1256 = vpack.c.b16 %v1226, %v1224
      %v1257 = vpack.c.b16 %v1227, %v1225
      %v1258 = vpack.c.b16 %v1230, %v1228
      %v1259 = vpack.c.b16 %v1231, %v1229
      %v1260 = vpack.c.b16 %v1234, %v1232
      %v1261 = vpack.c.b16 %v1235, %v1233
      %v1262 = vpack.c.b16 %v1238, %v1236
      %v1263 = vpack.c.b16 %v1239, %v1237
      %v1264 = vpack.c.b16 %v1242, %v1240
      %v1265 = vpack.c.b16 %v1243, %v1241
      %v1266 = vpack.c.b16 %v1246, %v1244
      %v1267 = vpack.c.b16 %v1247, %v1245
      %v1268 = vpack.c.b16 %v1250, %v1248
      %v1269 = vpack.c.b16 %v1251, %v1249
      %v1270 = vpack.c.b16 %v1254, %v1252
      %v1271 = vpack.c.b16 %v1255, %v1253
      %1288 = vmatprep.subr.bf16.mxu0 %v1257
      %1289 = vmatpush1.bf16.msra.mxu0 %v1256
      %1290 = vmatprep.subr.bf16.mxu0 %v1259
      %1291 = vmatpush1.bf16.msra.mxu0 %v1258
      %1292 = vmatprep.subr.bf16.mxu0 %v1261
      %1293 = vmatpush1.bf16.msra.mxu0 %v1260
      %1294 = vmatprep.subr.bf16.mxu0 %v1263
      %1295 = vmatpush1.bf16.msra.mxu0 %v1262
      %1296 = vmatprep.subr.bf16.mxu0 %v1265
      %1297 = vmatpush1.bf16.msra.mxu0 %v1264
      %1298 = vmatprep.subr.bf16.mxu0 %v1267
      %1299 = vmatpush1.bf16.msra.mxu0 %v1266
      %1300 = vmatprep.subr.bf16.mxu0 %v1269
      %1301 = vmatpush1.bf16.msra.mxu0 %v1268
      %1302 = vmatprep.subr.bf16.mxu0 %v1271
      %1303 = vmatpush1.bf16.msra.mxu0 %v1270
      %1304 = vmatprep.subr.bf16.mxu0 0
      %1305 = vmatpush1.bf16.msra.mxu0 0
      %1306 = vmatprep.subr.bf16.mxu0 0
      %1307 = vmatpush1.bf16.msra.mxu0 0
      %1308 = vmatprep.subr.bf16.mxu0 0
      %1309 = vmatpush1.bf16.msra.mxu0 0
      %1310 = vmatprep.subr.bf16.mxu0 0
      %1311 = vmatpush1.bf16.msra.mxu0 0
      %1312 = vmatprep.subr.bf16.mxu0 0
      %1313 = vmatpush1.bf16.msra.mxu0 0
      %1314 = vmatprep.subr.bf16.mxu0 0
      %1315 = vmatpush1.bf16.msra.mxu0 0
      %1316 = vmatprep.subr.bf16.mxu0 0
      %1317 = vmatpush1.bf16.msra.mxu0 0
      %1318 = vmatprep.subr.bf16.mxu0 0
      %1319 = vmatpush1.bf16.msra.mxu0 0
      %1320 = vmatprep.mubr.bf16.mxu0 0
      %1321 = vmatmul.mubr.bf16.gmra.mrb[0].mxu0 %v1128
      %v1322 = vpop.f32.mrb[0].mxu0
      %v1323 = vadd.f32 0.0, %v1322
      %v1324 = vpop.f32.mrb[0].mxu0
      %v1325 = vadd.f32 0.0, %v1324
      %v1326 = vpop.f32.mrb[0].mxu0
      %v1327 = vadd.f32 0.0, %v1326
      %v1328 = vpop.f32.mrb[0].mxu0
      %v1329 = vadd.f32 0.0, %v1328
      %1330 = vmatprep.mubr.bf16.mxu0 0
      %1331 = vmatmul.mubr.bf16.gmra.mrb[0].mxu0 %v1131
      %v1332 = vpop.f32.mrb[0].mxu0
      %v1333 = vadd.f32 0.0, %v1332
      %v1334 = vpop.f32.mrb[0].mxu0
      %v1335 = vadd.f32 0.0, %v1334
      %v1336 = vpop.f32.mrb[0].mxu0
      %v1337 = vadd.f32 0.0, %v1336
      %v1338 = vpop.f32.mrb[0].mxu0
      %v1339 = vadd.f32 0.0, %v1338
      %1340 = vmatprep.mubr.bf16.mxu0 0
      %1341 = vmatmul.mubr.bf16.gmra.mrb[0].mxu0 %v1134
      %v1342 = vpop.f32.mrb[0].mxu0
      %v1343 = vadd.f32 0.0, %v1342
      %v1344 = vpop.f32.mrb[0].mxu0
      %v1345 = vadd.f32 0.0, %v1344
      %v1346 = vpop.f32.mrb[0].mxu0
      %v1347 = vadd.f32 0.0, %v1346
      %v1348 = vpop.f32.mrb[0].mxu0
      %v1349 = vadd.f32 0.0, %v1348
      %1350 = vmatprep.mubr.bf16.mxu0 0
      %1351 = vmatmul.mubr.bf16.gmra.mrb[0].mxu0 %v1187
      %v1352 = vpop.f32.mrb[0].mxu0
      %v1353 = vadd.f32 0.0, %v1352
      %v1354 = vpop.f32.mrb[0].mxu0
      %v1355 = vadd.f32 0.0, %v1354
      %v1356 = vpop.f32.mrb[0].mxu0
      %v1357 = vadd.f32 0.0, %v1356
      %v1358 = vpop.f32.mrb[0].mxu0
      %v1359 = vadd.f32 0.0, %v1358
      %1360 = vmatprep.mubr.bf16.mxu0 0
      %1361 = vmatmul.mubr.bf16.gmra.mrb[0].mxu0 %v1139
      %v1362 = vpop.f32.mrb[0].mxu0
      %v1363 = vadd.f32 0.0, %v1362
      %v1364 = vpop.f32.mrb[0].mxu0
      %v1365 = vadd.f32 0.0, %v1364
      %v1366 = vpop.f32.mrb[0].mxu0
      %v1367 = vadd.f32 0.0, %v1366
      %v1368 = vpop.f32.mrb[0].mxu0
      %v1369 = vadd.f32 0.0, %v1368
      %1370 = vmatprep.mubr.bf16.mxu0 0
      %1371 = vmatmul.mubr.bf16.gmra.mrb[0].mxu0 %v1142
      %v1372 = vpop.f32.mrb[0].mxu0
      %v1373 = vadd.f32 0.0, %v1372
      %v1374 = vpop.f32.mrb[0].mxu0
      %v1375 = vadd.f32 0.0, %v1374
      %v1376 = vpop.f32.mrb[0].mxu0
      %v1377 = vadd.f32 0.0, %v1376
      %v1378 = vpop.f32.mrb[0].mxu0
      %v1379 = vadd.f32 0.0, %v1378
      %1380 = vmatprep.mubr.bf16.mxu0 0
      %1381 = vmatmul.mubr.bf16.gmra.mrb[0].mxu0 %v1145
      %v1382 = vpop.f32.mrb[0].mxu0
      %v1383 = vadd.f32 0.0, %v1382
      %v1384 = vpop.f32.mrb[0].mxu0
      %v1385 = vadd.f32 0.0, %v1384
      %v1386 = vpop.f32.mrb[0].mxu0
      %v1387 = vadd.f32 0.0, %v1386
      %v1388 = vpop.f32.mrb[0].mxu0
      %v1389 = vadd.f32 0.0, %v1388
      %1390 = vmatprep.mubr.bf16.mxu0 0
      %1391 = vmatmul.mubr.bf16.gmra.mrb[0].mxu0 %v1188
      %v1392 = vpop.f32.mrb[0].mxu0
      %v1393 = vadd.f32 0.0, %v1392
      %v1394 = vpop.f32.mrb[0].mxu0
      %v1395 = vadd.f32 0.0, %v1394
      %v1396 = vpop.f32.mrb[0].mxu0
      %v1397 = vadd.f32 0.0, %v1396
      %v1398 = vpop.f32.mrb[0].mxu0
      %v1399 = vadd.f32 0.0, %v1398
      %1400 = vmatprep.mubr.bf16.mxu0 0
      %1401 = vmatmul.mubr.bf16.gmra.mrb[0].mxu0 %v1150
      %v1402 = vpop.f32.mrb[0].mxu0
      %v1403 = vadd.f32 0.0, %v1402
      %v1404 = vpop.f32.mrb[0].mxu0
      %v1405 = vadd.f32 0.0, %v1404
      %v1406 = vpop.f32.mrb[0].mxu0
      %v1407 = vadd.f32 0.0, %v1406
      %v1408 = vpop.f32.mrb[0].mxu0
      %v1409 = vadd.f32 0.0, %v1408
      %1410 = vmatprep.mubr.bf16.mxu0 0
      %1411 = vmatmul.mubr.bf16.gmra.mrb[0].mxu0 %v1153
      %v1412 = vpop.f32.mrb[0].mxu0
      %v1413 = vadd.f32 0.0, %v1412
      %v1414 = vpop.f32.mrb[0].mxu0
      %v1415 = vadd.f32 0.0, %v1414
      %v1416 = vpop.f32.mrb[0].mxu0
      %v1417 = vadd.f32 0.0, %v1416
      %v1418 = vpop.f32.mrb[0].mxu0
      %v1419 = vadd.f32 0.0, %v1418
      %1420 = vmatprep.mubr.bf16.mxu0 0
      %1421 = vmatmul.mubr.bf16.gmra.mrb[0].mxu0 %v1156
      %v1422 = vpop.f32.mrb[0].mxu0
      %v1423 = vadd.f32 0.0, %v1422
      %v1424 = vpop.f32.mrb[0].mxu0
      %v1425 = vadd.f32 0.0, %v1424
      %v1426 = vpop.f32.mrb[0].mxu0
      %v1427 = vadd.f32 0.0, %v1426
      %v1428 = vpop.f32.mrb[0].mxu0
      %v1429 = vadd.f32 0.0, %v1428
      %1430 = vmatprep.mubr.bf16.mxu0 0
      %1431 = vmatmul.mubr.bf16.gmra.mrb[0].mxu0 %v1189
      %v1432 = vpop.f32.mrb[0].mxu0
      %v1433 = vadd.f32 0.0, %v1432
      %v1434 = vpop.f32.mrb[0].mxu0
      %v1435 = vadd.f32 0.0, %v1434
      %v1436 = vpop.f32.mrb[0].mxu0
      %v1437 = vadd.f32 0.0, %v1436
      %v1438 = vpop.f32.mrb[0].mxu0
      %v1439 = vadd.f32 0.0, %v1438
      %1440 = vmatprep.mubr.bf16.mxu0 0
      %1441 = vmatmul.mubr.bf16.gmra.mrb[0].mxu0 %v1161
      %v1442 = vpop.f32.mrb[0].mxu0
      %v1443 = vadd.f32 0.0, %v1442
      %v1444 = vpop.f32.mrb[0].mxu0
      %v1445 = vadd.f32 0.0, %v1444
      %v1446 = vpop.f32.mrb[0].mxu0
      %v1447 = vadd.f32 0.0, %v1446
      %v1448 = vpop.f32.mrb[0].mxu0
      %v1449 = vadd.f32 0.0, %v1448
      %1450 = vmatprep.mubr.bf16.mxu0 0
      %1451 = vmatmul.mubr.bf16.gmra.mrb[0].mxu0 %v1164
      %v1452 = vpop.f32.mrb[0].mxu0
      %v1453 = vadd.f32 0.0, %v1452
      %v1454 = vpop.f32.mrb[0].mxu0
      %v1455 = vadd.f32 0.0, %v1454
      %v1456 = vpop.f32.mrb[0].mxu0
      %v1457 = vadd.f32 0.0, %v1456
      %v1458 = vpop.f32.mrb[0].mxu0
      %v1459 = vadd.f32 0.0, %v1458
      %1460 = vmatprep.mubr.bf16.mxu0 0
      %1461 = vmatmul.mubr.bf16.gmra.mrb[0].mxu0 %v1167
      %v1462 = vpop.f32.mrb[0].mxu0
      %v1463 = vadd.f32 0.0, %v1462
      %v1464 = vpop.f32.mrb[0].mxu0
      %v1465 = vadd.f32 0.0, %v1464
      %v1466 = vpop.f32.mrb[0].mxu0
      %v1467 = vadd.f32 0.0, %v1466
      %v1468 = vpop.f32.mrb[0].mxu0
      %v1469 = vadd.f32 0.0, %v1468
      %1470 = vmatprep.mubr.bf16.mxu0 0
      %1471 = vmatmul.mubr.bf16.gmra.mrb[0].mxu0 %v1190
      %v1472 = vpop.f32.mrb[0].mxu0
      %v1473 = vadd.f32 0.0, %v1472
      %v1474 = vpop.f32.mrb[0].mxu0
      %v1475 = vadd.f32 0.0, %v1474
      %v1476 = vpop.f32.mrb[0].mxu0
      %v1477 = vadd.f32 0.0, %v1476
      %v1478 = vpop.f32.mrb[0].mxu0
      %v1479 = vadd.f32 0.0, %v1478
      %1480 = vdwg.mxu0
      %v1481 = vadd.f32 %v966, %v1323
      %v1482 = vadd.f32 %v968, %v1325
      %v1483 = vadd.f32 %v970, %v1327
      %v1484 = vadd.f32 %v972, %v1329
      %v1485 = vadd.f32 %v976, %v1333
      %v1486 = vadd.f32 %v978, %v1335
      %v1487 = vadd.f32 %v980, %v1337
      %v1488 = vadd.f32 %v982, %v1339
      %v1489 = vadd.f32 %v986, %v1343
      %v1490 = vadd.f32 %v988, %v1345
      %v1491 = vadd.f32 %v990, %v1347
      %v1492 = vadd.f32 %v992, %v1349
      %v1493 = vadd.f32 %v996, %v1353
      %v1494 = vadd.f32 %v998, %v1355
      %v1495 = vadd.f32 %v1000, %v1357
      %v1496 = vadd.f32 %v1002, %v1359
      %v1497 = vadd.f32 %v1006, %v1363
      %v1498 = vadd.f32 %v1008, %v1365
      %v1499 = vadd.f32 %v1010, %v1367
      %v1500 = vadd.f32 %v1012, %v1369
      %v1501 = vadd.f32 %v1016, %v1373
      %v1502 = vadd.f32 %v1018, %v1375
      %v1503 = vadd.f32 %v1020, %v1377
      %v1504 = vadd.f32 %v1022, %v1379
      %v1505 = vadd.f32 %v1026, %v1383
      %v1506 = vadd.f32 %v1028, %v1385
      %v1507 = vadd.f32 %v1030, %v1387
      %v1508 = vadd.f32 %v1032, %v1389
      %v1509 = vadd.f32 %v1036, %v1393
      %v1510 = vadd.f32 %v1038, %v1395
      %v1511 = vadd.f32 %v1040, %v1397
      %v1512 = vadd.f32 %v1042, %v1399
      %v1513 = vadd.f32 %v1046, %v1403
      %v1514 = vadd.f32 %v1048, %v1405
      %v1515 = vadd.f32 %v1050, %v1407
      %v1516 = vadd.f32 %v1052, %v1409
      %v1517 = vadd.f32 %v1056, %v1413
      %v1518 = vadd.f32 %v1058, %v1415
      %v1519 = vadd.f32 %v1060, %v1417
      %v1520 = vadd.f32 %v1062, %v1419
      %v1521 = vadd.f32 %v1066, %v1423
      %v1522 = vadd.f32 %v1068, %v1425
      %v1523 = vadd.f32 %v1070, %v1427
      %v1524 = vadd.f32 %v1072, %v1429
      %v1525 = vadd.f32 %v1076, %v1433
      %v1526 = vadd.f32 %v1078, %v1435
      %v1527 = vadd.f32 %v1080, %v1437
      %v1528 = vadd.f32 %v1082, %v1439
      %v1529 = vadd.f32 %v1086, %v1443
      %v1530 = vadd.f32 %v1088, %v1445
      %v1531 = vadd.f32 %v1090, %v1447
      %v1532 = vadd.f32 %v1092, %v1449
      %v1533 = vadd.f32 %v1096, %v1453
      %v1534 = vadd.f32 %v1098, %v1455
      %v1535 = vadd.f32 %v1100, %v1457
      %v1536 = vadd.f32 %v1102, %v1459
      %v1537 = vadd.f32 %v1106, %v1463
      %v1538 = vadd.f32 %v1108, %v1465
      %v1539 = vadd.f32 %v1110, %v1467
      %v1540 = vadd.f32 %v1112, %v1469
      %v1541 = vadd.f32 %v1116, %v1473
      %v1542 = vadd.f32 %v1118, %v1475
      %v1543 = vadd.f32 %v1120, %v1477
      %v1544 = vadd.f32 %v1122, %v1479
      %v1546 = vlaneseq
      %v1547 = vshrl.u32 %v1546, 7
      %v1548 = vsub.s32 0, %v1547
      %v1549 = vrot.slane %v298, %v1548
      %v1550 = vlaneseq
      %v1551 = vshrl.u32 %v1550, 7
      %v1552 = vsub.s32 1, %v1551
      %v1553 = vrot.slane %v298, %v1552
      %v1556 = vadd.f32 %v1481, %v1549
      %v1557 = vadd.f32 %v1482, %v1553
      %v1558 = vadd.f32 %v1483, %v1549
      %v1559 = vadd.f32 %v1484, %v1553
      %v1560 = vadd.f32 %v1485, %v1549
      %v1561 = vadd.f32 %v1486, %v1553
      %v1562 = vadd.f32 %v1487, %v1549
      %v1563 = vadd.f32 %v1488, %v1553
      %v1564 = vadd.f32 %v1489, %v1549
      %v1565 = vadd.f32 %v1490, %v1553
      %v1566 = vadd.f32 %v1491, %v1549
      %v1567 = vadd.f32 %v1492, %v1553
      %v1568 = vadd.f32 %v1493, %v1549
      %v1569 = vadd.f32 %v1494, %v1553
      %v1570 = vadd.f32 %v1495, %v1549
      %v1571 = vadd.f32 %v1496, %v1553
      %v1572 = vadd.f32 %v1497, %v1549
      %v1573 = vadd.f32 %v1498, %v1553
      %v1574 = vadd.f32 %v1499, %v1549
      %v1575 = vadd.f32 %v1500, %v1553
      %v1576 = vadd.f32 %v1501, %v1549
      %v1577 = vadd.f32 %v1502, %v1553
      %v1578 = vadd.f32 %v1503, %v1549
      %v1579 = vadd.f32 %v1504, %v1553
      %v1580 = vadd.f32 %v1505, %v1549
      %v1581 = vadd.f32 %v1506, %v1553
      %v1582 = vadd.f32 %v1507, %v1549
      %v1583 = vadd.f32 %v1508, %v1553
      %v1584 = vadd.f32 %v1509, %v1549
      %v1585 = vadd.f32 %v1510, %v1553
      %v1586 = vadd.f32 %v1511, %v1549
      %v1587 = vadd.f32 %v1512, %v1553
      %v1588 = vadd.f32 %v1513, %v1549
      %v1589 = vadd.f32 %v1514, %v1553
      %v1590 = vadd.f32 %v1515, %v1549
      %v1591 = vadd.f32 %v1516, %v1553
      %v1592 = vadd.f32 %v1517, %v1549
      %v1593 = vadd.f32 %v1518, %v1553
      %v1594 = vadd.f32 %v1519, %v1549
      %v1595 = vadd.f32 %v1520, %v1553
      %v1596 = vadd.f32 %v1521, %v1549
      %v1597 = vadd.f32 %v1522, %v1553
      %v1598 = vadd.f32 %v1523, %v1549
      %v1599 = vadd.f32 %v1524, %v1553
      %v1600 = vadd.f32 %v1525, %v1549
      %v1601 = vadd.f32 %v1526, %v1553
      %v1602 = vadd.f32 %v1527, %v1549
      %v1603 = vadd.f32 %v1528, %v1553
      %v1604 = vadd.f32 %v1529, %v1549
      %v1605 = vadd.f32 %v1530, %v1553
      %v1606 = vadd.f32 %v1531, %v1549
      %v1607 = vadd.f32 %v1532, %v1553
      %v1608 = vadd.f32 %v1533, %v1549
      %v1609 = vadd.f32 %v1534, %v1553
      %v1610 = vadd.f32 %v1535, %v1549
      %v1611 = vadd.f32 %v1536, %v1553
      %v1612 = vadd.f32 %v1537, %v1549
      %v1613 = vadd.f32 %v1538, %v1553
      %v1614 = vadd.f32 %v1539, %v1549
      %v1615 = vadd.f32 %v1540, %v1553
      %v1616 = vadd.f32 %v1541, %v1549
      %v1617 = vadd.f32 %v1542, %v1553
      %v1618 = vadd.f32 %v1543, %v1549
      %v1619 = vadd.f32 %v1544, %v1553
      %v1620 = vmax.f32 %v1556, 0.0
      %v1621 = vmax.f32 %v1557, 0.0
      %v1622 = vmax.f32 %v1558, 0.0
      %v1623 = vmax.f32 %v1559, 0.0
      %v1624 = vmax.f32 %v1560, 0.0
      %v1625 = vmax.f32 %v1561, 0.0
      %v1626 = vmax.f32 %v1562, 0.0
      %v1627 = vmax.f32 %v1563, 0.0
      %v1628 = vmax.f32 %v1564, 0.0
      %v1629 = vmax.f32 %v1565, 0.0
      %v1630 = vmax.f32 %v1566, 0.0
      %v1631 = vmax.f32 %v1567, 0.0
      %v1632 = vmax.f32 %v1568, 0.0
      %v1633 = vmax.f32 %v1569, 0.0
      %v1634 = vmax.f32 %v1570, 0.0
      %v1635 = vmax.f32 %v1571, 0.0
      %v1636 = vmax.f32 %v1572, 0.0
      %v1637 = vmax.f32 %v1573, 0.0
      %v1638 = vmax.f32 %v1574, 0.0
      %v1639 = vmax.f32 %v1575, 0.0
      %v1640 = vmax.f32 %v1576, 0.0
      %v1641 = vmax.f32 %v1577, 0.0
      %v1642 = vmax.f32 %v1578, 0.0
      %v1643 = vmax.f32 %v1579, 0.0
      %v1644 = vmax.f32 %v1580, 0.0
      %v1645 = vmax.f32 %v1581, 0.0
      %v1646 = vmax.f32 %v1582, 0.0
      %v1647 = vmax.f32 %v1583, 0.0
      %v1648 = vmax.f32 %v1584, 0.0
      %v1649 = vmax.f32 %v1585, 0.0
      %v1650 = vmax.f32 %v1586, 0.0
      %v1651 = vmax.f32 %v1587, 0.0
      %v1652 = vmax.f32 %v1588, 0.0
      %v1653 = vmax.f32 %v1589, 0.0
      %v1654 = vmax.f32 %v1590, 0.0
      %v1655 = vmax.f32 %v1591, 0.0
      %v1656 = vmax.f32 %v1592, 0.0
      %v1657 = vmax.f32 %v1593, 0.0
      %v1658 = vmax.f32 %v1594, 0.0
      %v1659 = vmax.f32 %v1595, 0.0
      %v1660 = vmax.f32 %v1596, 0.0
      %v1661 = vmax.f32 %v1597, 0.0
      %v1662 = vmax.f32 %v1598, 0.0
      %v1663 = vmax.f32 %v1599, 0.0
      %v1664 = vmax.f32 %v1600, 0.0
      %v1665 = vmax.f32 %v1601, 0.0
      %v1666 = vmax.f32 %v1602, 0.0
      %v1667 = vmax.f32 %v1603, 0.0
      %v1668 = vmax.f32 %v1604, 0.0
      %v1669 = vmax.f32 %v1605, 0.0
      %v1670 = vmax.f32 %v1606, 0.0
      %v1671 = vmax.f32 %v1607, 0.0
      %v1672 = vmax.f32 %v1608, 0.0
      %v1673 = vmax.f32 %v1609, 0.0
      %v1674 = vmax.f32 %v1610, 0.0
      %v1675 = vmax.f32 %v1611, 0.0
      %v1676 = vmax.f32 %v1612, 0.0
      %v1677 = vmax.f32 %v1613, 0.0
      %v1678 = vmax.f32 %v1614, 0.0
      %v1679 = vmax.f32 %v1615, 0.0
      %v1680 = vmax.f32 %v1616, 0.0
      %v1681 = vmax.f32 %v1617, 0.0
      %v1682 = vmax.f32 %v1618, 0.0
      %v1683 = vmax.f32 %v1619, 0.0
      %v1684 = vpack.c.bf16 %v1622, %v1620
      %v1685 = vpack.c.bf16 %v1623, %v1621
      %v1686 = vpack.c.bf16 %v1626, %v1624
      %v1687 = vpack.c.bf16 %v1627, %v1625
      %v1688 = vpack.c.bf16 %v1630, %v1628
      %v1689 = vpack.c.bf16 %v1631, %v1629
      %v1690 = vpack.c.bf16 %v1634, %v1632
      %v1691 = vpack.c.bf16 %v1635, %v1633
      %v1692 = vpack.c.bf16 %v1638, %v1636
      %v1693 = vpack.c.bf16 %v1639, %v1637
      %v1694 = vpack.c.bf16 %v1642, %v1640
      %v1695 = vpack.c.bf16 %v1643, %v1641
      %v1696 = vpack.c.bf16 %v1646, %v1644
      %v1697 = vpack.c.bf16 %v1647, %v1645
      %v1698 = vpack.c.bf16 %v1650, %v1648
      %v1699 = vpack.c.bf16 %v1651, %v1649
      %v1700 = vpack.c.bf16 %v1654, %v1652
      %v1701 = vpack.c.bf16 %v1655, %v1653
      %v1702 = vpack.c.bf16 %v1658, %v1656
      %v1703 = vpack.c.bf16 %v1659, %v1657
      %v1704 = vpack.c.bf16 %v1662, %v1660
      %v1705 = vpack.c.bf16 %v1663, %v1661
      %v1706 = vpack.c.bf16 %v1666, %v1664
      %v1707 = vpack.c.bf16 %v1667, %v1665
      %v1708 = vpack.c.bf16 %v1670, %v1668
      %v1709 = vpack.c.bf16 %v1671, %v1669
      %v1710 = vpack.c.bf16 %v1674, %v1672
      %v1711 = vpack.c.bf16 %v1675, %v1673
      %v1712 = vpack.c.bf16 %v1678, %v1676
      %v1713 = vpack.c.bf16 %v1679, %v1677
      %v1714 = vpack.c.bf16 %v1682, %v1680
      %v1715 = vpack.c.bf16 %v1683, %v1681
      %s1716 = scalar_lea.vmem %s2, 128
      %v1717 = vld [vmem:[%s1716] sm:$0xf]
      %v1718 = vld [vmem:[%s1716 + $0x4] sm:$0xf]
      %v1719 = vld [vmem:[%s1716 + $0x8] sm:$0xf]
      %v1720 = vld [vmem:[%s1716 + $0xc] sm:$0xf]
      %v1721 = vld [vmem:[%s1716 + $0x10] sm:$0xf]
      %v1722 = vld [vmem:[%s1716 + $0x14] sm:$0xf]
      %v1723 = vld [vmem:[%s1716 + $0x18] sm:$0xf]
      %v1724 = vld [vmem:[%s1716 + $0x1c] sm:$0xf]
      %v1725 = vld [vmem:[%s1716 + $0x20] sm:$0xf]
      %v1726 = vld [vmem:[%s1716 + $0x24] sm:$0xf]
      %v1727 = vld [vmem:[%s1716 + $0x28] sm:$0xf]
      %v1728 = vld [vmem:[%s1716 + $0x2c] sm:$0xf]
      %v1729 = vld [vmem:[%s1716 + $0x30] sm:$0xf]
      %v1730 = vld [vmem:[%s1716 + $0x34] sm:$0xf]
      %v1731 = vld [vmem:[%s1716 + $0x38] sm:$0xf]
      %v1732 = vld [vmem:[%s1716 + $0x3c] sm:$0xf]
      %v1733 = vld [vmem:[%s1716 + $0x40] sm:$0xf]
      %v1734 = vld [vmem:[%s1716 + $0x44] sm:$0xf]
      %v1735 = vld [vmem:[%s1716 + $0x48] sm:$0xf]
      %v1736 = vld [vmem:[%s1716 + $0x4c] sm:$0xf]
      %v1737 = vld [vmem:[%s1716 + $0x50] sm:$0xf]
      %v1738 = vld [vmem:[%s1716 + $0x54] sm:$0xf]
      %v1739 = vld [vmem:[%s1716 + $0x58] sm:$0xf]
      %v1740 = vld [vmem:[%s1716 + $0x5c] sm:$0xf]
      %v1741 = vld [vmem:[%s1716 + $0x60] sm:$0xf]
      %v1742 = vld [vmem:[%s1716 + $0x64] sm:$0xf]
      %v1743 = vld [vmem:[%s1716 + $0x68] sm:$0xf]
      %v1744 = vld [vmem:[%s1716 + $0x6c] sm:$0xf]
      %v1745 = vld [vmem:[%s1716 + $0x70] sm:$0xf]
      %v1746 = vld [vmem:[%s1716 + $0x74] sm:$0xf]
      %v1747 = vld [vmem:[%s1716 + $0x78] sm:$0xf]
      %v1748 = vld [vmem:[%s1716 + $0x7c] sm:$0xf]
      %v1750 = vshrl.u32 %v1684, 16
      %v1752 = vrot.slane %v1750, 7
      %v1753 = vshll.u32 %v1684, 16
      %v1755 = vor.u32 %v1752, %v1753
      %v1757 = vshrl.u32 %v1685, 16
      %v1759 = vrot.slane %v1757, 7
      %v1760 = vshll.u32 %v1685, 16
      %v1762 = vor.u32 %v1759, %v1760
      %v1764 = vshrl.u32 %v1686, 16
      %v1766 = vrot.slane %v1764, 7
      %v1767 = vshll.u32 %v1686, 16
      %v1769 = vor.u32 %v1766, %v1767
      %v1770 = vsel %vm399, %v1752, %v1769
      %v1772 = vshrl.u32 %v1687, 16
      %v1774 = vrot.slane %v1772, 7
      %v1775 = vshll.u32 %v1687, 16
      %v1777 = vor.u32 %v1774, %v1775
      %v1778 = vsel %vm399, %v1759, %v1777
      %v1780 = vshrl.u32 %v1688, 16
      %v1782 = vrot.slane %v1780, 7
      %v1783 = vshll.u32 %v1688, 16
      %v1785 = vor.u32 %v1782, %v1783
      %v1786 = vsel %vm399, %v1766, %v1785
      %v1788 = vshrl.u32 %v1689, 16
      %v1790 = vrot.slane %v1788, 7
      %v1791 = vshll.u32 %v1689, 16
      %v1793 = vor.u32 %v1790, %v1791
      %v1794 = vsel %vm399, %v1774, %v1793
      %v1796 = vshrl.u32 %v1690, 16
      %v1798 = vrot.slane %v1796, 7
      %v1799 = vshll.u32 %v1690, 16
      %v1801 = vor.u32 %v1798, %v1799
      %v1802 = vsel %vm399, %v1782, %v1801
      %v1804 = vshrl.u32 %v1691, 16
      %v1806 = vrot.slane %v1804, 7
      %v1807 = vshll.u32 %v1691, 16
      %v1809 = vor.u32 %v1806, %v1807
      %v1810 = vsel %vm399, %v1790, %v1809
      %v1812 = vshrl.u32 %v1692, 16
      %v1814 = vrot.slane %v1812, 7
      %v1815 = vshll.u32 %v1692, 16
      %v1817 = vor.u32 %v1814, %v1815
      %v1819 = vshrl.u32 %v1693, 16
      %v1821 = vrot.slane %v1819, 7
      %v1822 = vshll.u32 %v1693, 16
      %v1824 = vor.u32 %v1821, %v1822
      %v1826 = vshrl.u32 %v1694, 16
      %v1828 = vrot.slane %v1826, 7
      %v1829 = vshll.u32 %v1694, 16
      %v1831 = vor.u32 %v1828, %v1829
      %v1832 = vsel %vm399, %v1814, %v1831
      %v1834 = vshrl.u32 %v1695, 16
      %v1836 = vrot.slane %v1834, 7
      %v1837 = vshll.u32 %v1695, 16
      %v1839 = vor.u32 %v1836, %v1837
      %v1840 = vsel %vm399, %v1821, %v1839
      %v1842 = vshrl.u32 %v1696, 16
      %v1844 = vrot.slane %v1842, 7
      %v1845 = vshll.u32 %v1696, 16
      %v1847 = vor.u32 %v1844, %v1845
      %v1848 = vsel %vm399, %v1828, %v1847
      %v1850 = vshrl.u32 %v1697, 16
      %v1852 = vrot.slane %v1850, 7
      %v1853 = vshll.u32 %v1697, 16
      %v1855 = vor.u32 %v1852, %v1853
      %v1856 = vsel %vm399, %v1836, %v1855
      %v1858 = vshrl.u32 %v1698, 16
      %v1860 = vrot.slane %v1858, 7
      %v1861 = vshll.u32 %v1698, 16
      %v1863 = vor.u32 %v1860, %v1861
      %v1864 = vsel %vm399, %v1844, %v1863
      %v1866 = vshrl.u32 %v1699, 16
      %v1868 = vrot.slane %v1866, 7
      %v1869 = vshll.u32 %v1699, 16
      %v1871 = vor.u32 %v1868, %v1869
      %v1872 = vsel %vm399, %v1852, %v1871
      %v1874 = vshrl.u32 %v1700, 16
      %v1876 = vrot.slane %v1874, 7
      %v1877 = vshll.u32 %v1700, 16
      %v1879 = vor.u32 %v1876, %v1877
      %v1881 = vshrl.u32 %v1701, 16
      %v1883 = vrot.slane %v1881, 7
      %v1884 = vshll.u32 %v1701, 16
      %v1886 = vor.u32 %v1883, %v1884
      %v1888 = vshrl.u32 %v1702, 16
      %v1890 = vrot.slane %v1888, 7
      %v1891 = vshll.u32 %v1702, 16
      %v1893 = vor.u32 %v1890, %v1891
      %v1894 = vsel %vm399, %v1876, %v1893
      %v1896 = vshrl.u32 %v1703, 16
      %v1898 = vrot.slane %v1896, 7
      %v1899 = vshll.u32 %v1703, 16
      %v1901 = vor.u32 %v1898, %v1899
      %v1902 = vsel %vm399, %v1883, %v1901
      %v1904 = vshrl.u32 %v1704, 16
      %v1906 = vrot.slane %v1904, 7
      %v1907 = vshll.u32 %v1704, 16
      %v1909 = vor.u32 %v1906, %v1907
      %v1910 = vsel %vm399, %v1890, %v1909
      %v1912 = vshrl.u32 %v1705, 16
      %v1914 = vrot.slane %v1912, 7
      %v1915 = vshll.u32 %v1705, 16
      %v1917 = vor.u32 %v1914, %v1915
      %v1918 = vsel %vm399, %v1898, %v1917
      %v1920 = vshrl.u32 %v1706, 16
      %v1922 = vrot.slane %v1920, 7
      %v1923 = vshll.u32 %v1706, 16
      %v1925 = vor.u32 %v1922, %v1923
      %v1926 = vsel %vm399, %v1906, %v1925
      %v1928 = vshrl.u32 %v1707, 16
      %v1930 = vrot.slane %v1928, 7
      %v1931 = vshll.u32 %v1707, 16
      %v1933 = vor.u32 %v1930, %v1931
      %v1934 = vsel %vm399, %v1914, %v1933
      %v1936 = vshrl.u32 %v1708, 16
      %v1938 = vrot.slane %v1936, 7
      %v1939 = vshll.u32 %v1708, 16
      %v1941 = vor.u32 %v1938, %v1939
      %v1943 = vshrl.u32 %v1709, 16
      %v1945 = vrot.slane %v1943, 7
      %v1946 = vshll.u32 %v1709, 16
      %v1948 = vor.u32 %v1945, %v1946
      %v1950 = vshrl.u32 %v1710, 16
      %v1952 = vrot.slane %v1950, 7
      %v1953 = vshll.u32 %v1710, 16
      %v1955 = vor.u32 %v1952, %v1953
      %v1956 = vsel %vm399, %v1938, %v1955
      %v1958 = vshrl.u32 %v1711, 16
      %v1960 = vrot.slane %v1958, 7
      %v1961 = vshll.u32 %v1711, 16
      %v1963 = vor.u32 %v1960, %v1961
      %v1964 = vsel %vm399, %v1945, %v1963
      %v1966 = vshrl.u32 %v1712, 16
      %v1968 = vrot.slane %v1966, 7
      %v1969 = vshll.u32 %v1712, 16
      %v1971 = vor.u32 %v1968, %v1969
      %v1972 = vsel %vm399, %v1952, %v1971
      %v1974 = vshrl.u32 %v1713, 16
      %v1976 = vrot.slane %v1974, 7
      %v1977 = vshll.u32 %v1713, 16
      %v1979 = vor.u32 %v1976, %v1977
      %v1980 = vsel %vm399, %v1960, %v1979
      %v1982 = vshrl.u32 %v1714, 16
      %v1984 = vrot.slane %v1982, 7
      %v1985 = vshll.u32 %v1714, 16
      %v1987 = vor.u32 %v1984, %v1985
      %v1988 = vsel %vm399, %v1968, %v1987
      %v1990 = vshrl.u32 %v1715, 16
      %v1992 = vrot.slane %v1990, 7
      %v1993 = vshll.u32 %v1715, 16
      %v1995 = vor.u32 %v1992, %v1993
      %v1996 = vsel %vm399, %v1976, %v1995
      %v2029 = vsel %vm541, 0, %v1755
      %v2030 = vsel %vm541, 0, %v1762
      %v2031 = vsel %vm541, 0, %v1817
      %v2032 = vsel %vm541, 0, %v1824
      %v2033 = vsel %vm541, 0, %v1879
      %v2034 = vsel %vm541, 0, %v1886
      %v2035 = vsel %vm541, 0, %v1941
      %v2036 = vsel %vm541, 0, %v1948
      %v2037 = vld [vmem:[%s2] sm:$0xf]
      %v2038 = vld [vmem:[%s2 + $0x4] sm:$0xf]
      %v2039 = vld [vmem:[%s2 + $0x8] sm:$0xf]
      %v2040 = vld [vmem:[%s2 + $0xc] sm:$0xf]
      %v2041 = vld [vmem:[%s2 + $0x10] sm:$0xf]
      %v2042 = vld [vmem:[%s2 + $0x14] sm:$0xf]
      %v2043 = vld [vmem:[%s2 + $0x18] sm:$0xf]
      %v2044 = vld [vmem:[%s2 + $0x1c] sm:$0xf]
      %v2045 = vld [vmem:[%s2 + $0x20] sm:$0xf]
      %v2046 = vld [vmem:[%s2 + $0x24] sm:$0xf]
      %v2047 = vld [vmem:[%s2 + $0x28] sm:$0xf]
      %v2048 = vld [vmem:[%s2 + $0x2c] sm:$0xf]
      %v2049 = vld [vmem:[%s2 + $0x30] sm:$0xf]
      %v2050 = vld [vmem:[%s2 + $0x34] sm:$0xf]
      %v2051 = vld [vmem:[%s2 + $0x38] sm:$0xf]
      %v2052 = vld [vmem:[%s2 + $0x3c] sm:$0xf]
      %v2053 = vld [vmem:[%s2 + $0x40] sm:$0xf]
      %v2054 = vld [vmem:[%s2 + $0x44] sm:$0xf]
      %v2055 = vld [vmem:[%s2 + $0x48] sm:$0xf]
      %v2056 = vld [vmem:[%s2 + $0x4c] sm:$0xf]
      %v2057 = vld [vmem:[%s2 + $0x50] sm:$0xf]
      %v2058 = vld [vmem:[%s2 + $0x54] sm:$0xf]
      %v2059 = vld [vmem:[%s2 + $0x58] sm:$0xf]
      %v2060 = vld [vmem:[%s2 + $0x5c] sm:$0xf]
      %v2061 = vld [vmem:[%s2 + $0x60] sm:$0xf]
      %v2062 = vld [vmem:[%s2 + $0x64] sm:$0xf]
      %v2063 = vld [vmem:[%s2 + $0x68] sm:$0xf]
      %v2064 = vld [vmem:[%s2 + $0x6c] sm:$0xf]
      %v2065 = vld [vmem:[%s2 + $0x70] sm:$0xf]
      %v2066 = vld [vmem:[%s2 + $0x74] sm:$0xf]
      %v2067 = vld [vmem:[%s2 + $0x78] sm:$0xf]
      %v2068 = vld [vmem:[%s2 + $0x7c] sm:$0xf]
      %v2101 = vunpack.c.l.b16 %v2037
      %v2102 = vunpack.c.l.b16 %v2038
      %v2103 = vunpack.c.l.b16 %v2039
      %v2104 = vunpack.c.l.b16 %v2040
      %v2105 = vunpack.c.l.b16 %v2041
      %v2106 = vunpack.c.l.b16 %v2042
      %v2107 = vunpack.c.l.b16 %v2043
      %v2108 = vunpack.c.l.b16 %v2044
      %v2109 = vunpack.c.l.b16 %v2045
      %v2110 = vunpack.c.l.b16 %v2046
      %v2111 = vunpack.c.l.b16 %v2047
      %v2112 = vunpack.c.l.b16 %v2048
      %v2113 = vunpack.c.l.b16 %v2049
      %v2114 = vunpack.c.l.b16 %v2050
      %v2115 = vunpack.c.l.b16 %v2051
      %v2116 = vunpack.c.l.b16 %v2052
      %v2117 = vunpack.c.l.b16 %v2053
      %v2118 = vunpack.c.l.b16 %v2054
      %v2119 = vunpack.c.l.b16 %v2055
      %v2120 = vunpack.c.l.b16 %v2056
      %v2121 = vunpack.c.l.b16 %v2057
      %v2122 = vunpack.c.l.b16 %v2058
      %v2123 = vunpack.c.l.b16 %v2059
      %v2124 = vunpack.c.l.b16 %v2060
      %v2125 = vunpack.c.l.b16 %v2061
      %v2126 = vunpack.c.l.b16 %v2062
      %v2127 = vunpack.c.l.b16 %v2063
      %v2128 = vunpack.c.l.b16 %v2064
      %v2129 = vunpack.c.l.b16 %v2065
      %v2130 = vunpack.c.l.b16 %v2066
      %v2131 = vunpack.c.l.b16 %v2067
      %v2132 = vunpack.c.l.b16 %v2068
      %v2133 = vpack.c.b16 %v2102, %v2101
      %v2134 = vpack.c.b16 %v2104, %v2103
      %v2135 = vpack.c.b16 %v2106, %v2105
      %v2136 = vpack.c.b16 %v2108, %v2107
      %v2137 = vpack.c.b16 %v2110, %v2109
      %v2138 = vpack.c.b16 %v2112, %v2111
      %v2139 = vpack.c.b16 %v2114, %v2113
      %v2140 = vpack.c.b16 %v2116, %v2115
      %v2141 = vpack.c.b16 %v2118, %v2117
      %v2142 = vpack.c.b16 %v2120, %v2119
      %v2143 = vpack.c.b16 %v2122, %v2121
      %v2144 = vpack.c.b16 %v2124, %v2123
      %v2145 = vpack.c.b16 %v2126, %v2125
      %v2146 = vpack.c.b16 %v2128, %v2127
      %v2147 = vpack.c.b16 %v2130, %v2129
      %v2148 = vpack.c.b16 %v2132, %v2131
      %2165 = vmatprep.subr.bf16.mxu0 0
      %2166 = vmatpush1.bf16.msra.mxu0 %v2133
      %2167 = vmatprep.subr.bf16.mxu0 0
      %2168 = vmatpush1.bf16.msra.mxu0 %v2134
      %2169 = vmatprep.subr.bf16.mxu0 0
      %2170 = vmatpush1.bf16.msra.mxu0 %v2135
      %2171 = vmatprep.subr.bf16.mxu0 0
      %2172 = vmatpush1.bf16.msra.mxu0 %v2136
      %2173 = vmatprep.subr.bf16.mxu0 0
      %2174 = vmatpush1.bf16.msra.mxu0 %v2137
      %2175 = vmatprep.subr.bf16.mxu0 0
      %2176 = vmatpush1.bf16.msra.mxu0 %v2138
      %2177 = vmatprep.subr.bf16.mxu0 0
      %2178 = vmatpush1.bf16.msra.mxu0 %v2139
      %2179 = vmatprep.subr.bf16.mxu0 0
      %2180 = vmatpush1.bf16.msra.mxu0 %v2140
      %2181 = vmatprep.subr.bf16.mxu0 0
      %2182 = vmatpush1.bf16.msra.mxu0 %v2141
      %2183 = vmatprep.subr.bf16.mxu0 0
      %2184 = vmatpush1.bf16.msra.mxu0 %v2142
      %2185 = vmatprep.subr.bf16.mxu0 0
      %2186 = vmatpush1.bf16.msra.mxu0 %v2143
      %2187 = vmatprep.subr.bf16.mxu0 0
      %2188 = vmatpush1.bf16.msra.mxu0 %v2144
      %2189 = vmatprep.subr.bf16.mxu0 0
      %2190 = vmatpush1.bf16.msra.mxu0 %v2145
      %2191 = vmatprep.subr.bf16.mxu0 0
      %2192 = vmatpush1.bf16.msra.mxu0 %v2146
      %2193 = vmatprep.subr.bf16.mxu0 0
      %2194 = vmatpush1.bf16.msra.mxu0 %v2147
      %2195 = vmatprep.subr.bf16.mxu0 0
      %2196 = vmatpush1.bf16.msra.mxu0 %v2148
      %2197 = vmatprep.mubr.bf16.mxu0 %v2030
      %2198 = vmatmul.mubr.bf16.gmra.mrb[0].mxu0 %v2029
      %v2199 = vpop.f32.mrb[0].mxu0
      %v2200 = vadd.f32 0.0, %v2199
      %v2201 = vpop.f32.mrb[0].mxu0
      %v2202 = vpop.f32.mrb[0].mxu0
      %v2203 = vadd.f32 0.0, %v2202
      %v2204 = vpop.f32.mrb[0].mxu0
      %2205 = vmatprep.mubr.bf16.mxu0 %v1778
      %2206 = vmatmul.mubr.bf16.gmra.mrb[0].mxu0 %v1770
      %v2207 = vpop.f32.mrb[0].mxu0
      %v2208 = vadd.f32 0.0, %v2207
      %v2209 = vpop.f32.mrb[0].mxu0
      %v2210 = vpop.f32.mrb[0].mxu0
      %v2211 = vadd.f32 0.0, %v2210
      %v2212 = vpop.f32.mrb[0].mxu0
      %2213 = vmatprep.mubr.bf16.mxu0 %v1794
      %2214 = vmatmul.mubr.bf16.gmra.mrb[0].mxu0 %v1786
      %v2215 = vpop.f32.mrb[0].mxu0
      %v2216 = vadd.f32 0.0, %v2215
      %v2217 = vpop.f32.mrb[0].mxu0
      %v2218 = vpop.f32.mrb[0].mxu0
      %v2219 = vadd.f32 0.0, %v2218
      %v2220 = vpop.f32.mrb[0].mxu0
      %2221 = vmatprep.mubr.bf16.mxu0 %v1810
      %2222 = vmatmul.mubr.bf16.gmra.mrb[0].mxu0 %v1802
      %v2223 = vpop.f32.mrb[0].mxu0
      %v2224 = vadd.f32 0.0, %v2223
      %v2225 = vpop.f32.mrb[0].mxu0
      %v2226 = vpop.f32.mrb[0].mxu0
      %v2227 = vadd.f32 0.0, %v2226
      %v2228 = vpop.f32.mrb[0].mxu0
      %2229 = vmatprep.mubr.bf16.mxu0 %v2032
      %2230 = vmatmul.mubr.bf16.gmra.mrb[0].mxu0 %v2031
      %v2231 = vpop.f32.mrb[0].mxu0
      %v2232 = vadd.f32 0.0, %v2231
      %v2233 = vpop.f32.mrb[0].mxu0
      %v2234 = vpop.f32.mrb[0].mxu0
      %v2235 = vadd.f32 0.0, %v2234
      %v2236 = vpop.f32.mrb[0].mxu0
      %2237 = vmatprep.mubr.bf16.mxu0 %v1840
      %2238 = vmatmul.mubr.bf16.gmra.mrb[0].mxu0 %v1832
      %v2239 = vpop.f32.mrb[0].mxu0
      %v2240 = vadd.f32 0.0, %v2239
      %v2241 = vpop.f32.mrb[0].mxu0
      %v2242 = vpop.f32.mrb[0].mxu0
      %v2243 = vadd.f32 0.0, %v2242
      %v2244 = vpop.f32.mrb[0].mxu0
      %2245 = vmatprep.mubr.bf16.mxu0 %v1856
      %2246 = vmatmul.mubr.bf16.gmra.mrb[0].mxu0 %v1848
      %v2247 = vpop.f32.mrb[0].mxu0
      %v2248 = vadd.f32 0.0, %v2247
      %v2249 = vpop.f32.mrb[0].mxu0
      %v2250 = vpop.f32.mrb[0].mxu0
      %v2251 = vadd.f32 0.0, %v2250
      %v2252 = vpop.f32.mrb[0].mxu0
      %2253 = vmatprep.mubr.bf16.mxu0 %v1872
      %2254 = vmatmul.mubr.bf16.gmra.mrb[0].mxu0 %v1864
      %v2255 = vpop.f32.mrb[0].mxu0
      %v2256 = vadd.f32 0.0, %v2255
      %v2257 = vpop.f32.mrb[0].mxu0
      %v2258 = vpop.f32.mrb[0].mxu0
      %v2259 = vadd.f32 0.0, %v2258
      %v2260 = vpop.f32.mrb[0].mxu0
      %2261 = vmatprep.mubr.bf16.mxu0 %v2034
      %2262 = vmatmul.mubr.bf16.gmra.mrb[0].mxu0 %v2033
      %v2263 = vpop.f32.mrb[0].mxu0
      %v2264 = vadd.f32 0.0, %v2263
      %v2265 = vpop.f32.mrb[0].mxu0
      %v2266 = vpop.f32.mrb[0].mxu0
      %v2267 = vadd.f32 0.0, %v2266
      %v2268 = vpop.f32.mrb[0].mxu0
      %2269 = vmatprep.mubr.bf16.mxu0 %v1902
      %2270 = vmatmul.mubr.bf16.gmra.mrb[0].mxu0 %v1894
      %v2271 = vpop.f32.mrb[0].mxu0
      %v2272 = vadd.f32 0.0, %v2271
      %v2273 = vpop.f32.mrb[0].mxu0
      %v2274 = vpop.f32.mrb[0].mxu0
      %v2275 = vadd.f32 0.0, %v2274
      %v2276 = vpop.f32.mrb[0].mxu0
      %2277 = vmatprep.mubr.bf16.mxu0 %v1918
      %2278 = vmatmul.mubr.bf16.gmra.mrb[0].mxu0 %v1910
      %v2279 = vpop.f32.mrb[0].mxu0
      %v2280 = vadd.f32 0.0, %v2279
      %v2281 = vpop.f32.mrb[0].mxu0
      %v2282 = vpop.f32.mrb[0].mxu0
      %v2283 = vadd.f32 0.0, %v2282
      %v2284 = vpop.f32.mrb[0].mxu0
      %2285 = vmatprep.mubr.bf16.mxu0 %v1934
      %2286 = vmatmul.mubr.bf16.gmra.mrb[0].mxu0 %v1926
      %v2287 = vpop.f32.mrb[0].mxu0
      %v2288 = vadd.f32 0.0, %v2287
      %v2289 = vpop.f32.mrb[0].mxu0
      %v2290 = vpop.f32.mrb[0].mxu0
      %v2291 = vadd.f32 0.0, %v2290
      %v2292 = vpop.f32.mrb[0].mxu0
      %2293 = vmatprep.mubr.bf16.mxu0 %v2036
      %2294 = vmatmul.mubr.bf16.gmra.mrb[0].mxu0 %v2035
      %v2295 = vpop.f32.mrb[0].mxu0
      %v2296 = vadd.f32 0.0, %v2295
      %v2297 = vpop.f32.mrb[0].mxu0
      %v2298 = vpop.f32.mrb[0].mxu0
      %v2299 = vadd.f32 0.0, %v2298
      %v2300 = vpop.f32.mrb[0].mxu0
      %2301 = vmatprep.mubr.bf16.mxu0 %v1964
      %2302 = vmatmul.mubr.bf16.gmra.mrb[0].mxu0 %v1956
      %v2303 = vpop.f32.mrb[0].mxu0
      %v2304 = vadd.f32 0.0, %v2303
      %v2305 = vpop.f32.mrb[0].mxu0
      %v2306 = vpop.f32.mrb[0].mxu0
      %v2307 = vadd.f32 0.0, %v2306
      %v2308 = vpop.f32.mrb[0].mxu0
      %2309 = vmatprep.mubr.bf16.mxu0 %v1980
      %2310 = vmatmul.mubr.bf16.gmra.mrb[0].mxu0 %v1972
      %v2311 = vpop.f32.mrb[0].mxu0
      %v2312 = vadd.f32 0.0, %v2311
      %v2313 = vpop.f32.mrb[0].mxu0
      %v2314 = vpop.f32.mrb[0].mxu0
      %v2315 = vadd.f32 0.0, %v2314
      %v2316 = vpop.f32.mrb[0].mxu0
      %2317 = vmatprep.mubr.bf16.mxu0 %v1996
      %2318 = vmatmul.mubr.bf16.gmra.mrb[0].mxu0 %v1988
      %v2319 = vpop.f32.mrb[0].mxu0
      %v2320 = vadd.f32 0.0, %v2319
      %v2321 = vpop.f32.mrb[0].mxu0
      %v2322 = vpop.f32.mrb[0].mxu0
      %v2323 = vadd.f32 0.0, %v2322
      %v2324 = vpop.f32.mrb[0].mxu0
      %2325 = vdwg.mxu0
      %v2358 = vunpack.c.l.b16 %v1717
      %v2359 = vunpack.c.l.b16 %v1718
      %v2360 = vunpack.c.l.b16 %v1719
      %v2361 = vunpack.c.l.b16 %v1720
      %v2362 = vunpack.c.l.b16 %v1721
      %v2363 = vunpack.c.l.b16 %v1722
      %v2364 = vunpack.c.l.b16 %v1723
      %v2365 = vunpack.c.l.b16 %v1724
      %v2366 = vunpack.c.l.b16 %v1725
      %v2367 = vunpack.c.l.b16 %v1726
      %v2368 = vunpack.c.l.b16 %v1727
      %v2369 = vunpack.c.l.b16 %v1728
      %v2370 = vunpack.c.l.b16 %v1729
      %v2371 = vunpack.c.l.b16 %v1730
      %v2372 = vunpack.c.l.b16 %v1731
      %v2373 = vunpack.c.l.b16 %v1732
      %v2374 = vunpack.c.l.b16 %v1733
      %v2375 = vunpack.c.l.b16 %v1734
      %v2376 = vunpack.c.l.b16 %v1735
      %v2377 = vunpack.c.l.b16 %v1736
      %v2378 = vunpack.c.l.b16 %v1737
      %v2379 = vunpack.c.l.b16 %v1738
      %v2380 = vunpack.c.l.b16 %v1739
      %v2381 = vunpack.c.l.b16 %v1740
      %v2382 = vunpack.c.l.b16 %v1741
      %v2383 = vunpack.c.l.b16 %v1742
      %v2384 = vunpack.c.l.b16 %v1743
      %v2385 = vunpack.c.l.b16 %v1744
      %v2386 = vunpack.c.l.b16 %v1745
      %v2387 = vunpack.c.l.b16 %v1746
      %v2388 = vunpack.c.l.b16 %v1747
      %v2389 = vunpack.c.l.b16 %v1748
      %v2390 = vpack.c.b16 %v2359, %v2358
      %v2391 = vpack.c.b16 %v2361, %v2360
      %v2392 = vpack.c.b16 %v2363, %v2362
      %v2393 = vpack.c.b16 %v2365, %v2364
      %v2394 = vpack.c.b16 %v2367, %v2366
      %v2395 = vpack.c.b16 %v2369, %v2368
      %v2396 = vpack.c.b16 %v2371, %v2370
      %v2397 = vpack.c.b16 %v2373, %v2372
      %v2398 = vpack.c.b16 %v2375, %v2374
      %v2399 = vpack.c.b16 %v2377, %v2376
      %v2400 = vpack.c.b16 %v2379, %v2378
      %v2401 = vpack.c.b16 %v2381, %v2380
      %v2402 = vpack.c.b16 %v2383, %v2382
      %v2403 = vpack.c.b16 %v2385, %v2384
      %v2404 = vpack.c.b16 %v2387, %v2386
      %v2405 = vpack.c.b16 %v2389, %v2388
      %2422 = vmatprep.subr.bf16.mxu0 0
      %2423 = vmatpush1.bf16.msra.mxu0 %v2390
      %2424 = vmatprep.subr.bf16.mxu0 0
      %2425 = vmatpush1.bf16.msra.mxu0 %v2391
      %2426 = vmatprep.subr.bf16.mxu0 0
      %2427 = vmatpush1.bf16.msra.mxu0 %v2392
      %2428 = vmatprep.subr.bf16.mxu0 0
      %2429 = vmatpush1.bf16.msra.mxu0 %v2393
      %2430 = vmatprep.subr.bf16.mxu0 0
      %2431 = vmatpush1.bf16.msra.mxu0 %v2394
      %2432 = vmatprep.subr.bf16.mxu0 0
      %2433 = vmatpush1.bf16.msra.mxu0 %v2395
      %2434 = vmatprep.subr.bf16.mxu0 0
      %2435 = vmatpush1.bf16.msra.mxu0 %v2396
      %2436 = vmatprep.subr.bf16.mxu0 0
      %2437 = vmatpush1.bf16.msra.mxu0 %v2397
      %2438 = vmatprep.subr.bf16.mxu0 0
      %2439 = vmatpush1.bf16.msra.mxu0 %v2398
      %2440 = vmatprep.subr.bf16.mxu0 0
      %2441 = vmatpush1.bf16.msra.mxu0 %v2399
      %2442 = vmatprep.subr.bf16.mxu0 0
      %2443 = vmatpush1.bf16.msra.mxu0 %v2400
      %2444 = vmatprep.subr.bf16.mxu0 0
      %2445 = vmatpush1.bf16.msra.mxu0 %v2401
      %2446 = vmatprep.subr.bf16.mxu0 0
      %2447 = vmatpush1.bf16.msra.mxu0 %v2402
      %2448 = vmatprep.subr.bf16.mxu0 0
      %2449 = vmatpush1.bf16.msra.mxu0 %v2403
      %2450 = vmatprep.subr.bf16.mxu0 0
      %2451 = vmatpush1.bf16.msra.mxu0 %v2404
      %2452 = vmatprep.subr.bf16.mxu0 0
      %2453 = vmatpush1.bf16.msra.mxu0 %v2405
      %2454 = vmatprep.mubr.bf16.mxu0 %v1685
      %2455 = vmatmul.mubr.bf16.gmra.mrb[0].mxu0 %v1684
      %v2456 = vpop.f32.mrb[0].mxu0
      %v2457 = vadd.f32 %v2200, %v2456
      %v2458 = vpop.f32.mrb[0].mxu0
      %v2459 = vpop.f32.mrb[0].mxu0
      %v2460 = vadd.f32 %v2203, %v2459
      %v2461 = vpop.f32.mrb[0].mxu0
      %2462 = vmatprep.mubr.bf16.mxu0 %v1687
      %2463 = vmatmul.mubr.bf16.gmra.mrb[0].mxu0 %v1686
      %v2464 = vpop.f32.mrb[0].mxu0
      %v2465 = vadd.f32 %v2208, %v2464
      %v2466 = vpop.f32.mrb[0].mxu0
      %v2467 = vpop.f32.mrb[0].mxu0
      %v2468 = vadd.f32 %v2211, %v2467
      %v2469 = vpop.f32.mrb[0].mxu0
      %2470 = vmatprep.mubr.bf16.mxu0 %v1689
      %2471 = vmatmul.mubr.bf16.gmra.mrb[0].mxu0 %v1688
      %v2472 = vpop.f32.mrb[0].mxu0
      %v2473 = vadd.f32 %v2216, %v2472
      %v2474 = vpop.f32.mrb[0].mxu0
      %v2475 = vpop.f32.mrb[0].mxu0
      %v2476 = vadd.f32 %v2219, %v2475
      %v2477 = vpop.f32.mrb[0].mxu0
      %2478 = vmatprep.mubr.bf16.mxu0 %v1691
      %2479 = vmatmul.mubr.bf16.gmra.mrb[0].mxu0 %v1690
      %v2480 = vpop.f32.mrb[0].mxu0
      %v2481 = vadd.f32 %v2224, %v2480
      %v2482 = vpop.f32.mrb[0].mxu0
      %v2483 = vpop.f32.mrb[0].mxu0
      %v2484 = vadd.f32 %v2227, %v2483
      %v2485 = vpop.f32.mrb[0].mxu0
      %2486 = vmatprep.mubr.bf16.mxu0 %v1693
      %2487 = vmatmul.mubr.bf16.gmra.mrb[0].mxu0 %v1692
      %v2488 = vpop.f32.mrb[0].mxu0
      %v2489 = vadd.f32 %v2232, %v2488
      %v2490 = vpop.f32.mrb[0].mxu0
      %v2491 = vpop.f32.mrb[0].mxu0
      %v2492 = vadd.f32 %v2235, %v2491
      %v2493 = vpop.f32.mrb[0].mxu0
      %2494 = vmatprep.mubr.bf16.mxu0 %v1695
      %2495 = vmatmul.mubr.bf16.gmra.mrb[0].mxu0 %v1694
      %v2496 = vpop.f32.mrb[0].mxu0
      %v2497 = vadd.f32 %v2240, %v2496
      %v2498 = vpop.f32.mrb[0].mxu0
      %v2499 = vpop.f32.mrb[0].mxu0
      %v2500 = vadd.f32 %v2243, %v2499
      %v2501 = vpop.f32.mrb[0].mxu0
      %2502 = vmatprep.mubr.bf16.mxu0 %v1697
      %2503 = vmatmul.mubr.bf16.gmra.mrb[0].mxu0 %v1696
      %v2504 = vpop.f32.mrb[0].mxu0
      %v2505 = vadd.f32 %v2248, %v2504
      %v2506 = vpop.f32.mrb[0].mxu0
      %v2507 = vpop.f32.mrb[0].mxu0
      %v2508 = vadd.f32 %v2251, %v2507
      %v2509 = vpop.f32.mrb[0].mxu0
      %2510 = vmatprep.mubr.bf16.mxu0 %v1699
      %2511 = vmatmul.mubr.bf16.gmra.mrb[0].mxu0 %v1698
      %v2512 = vpop.f32.mrb[0].mxu0
      %v2513 = vadd.f32 %v2256, %v2512
      %v2514 = vpop.f32.mrb[0].mxu0
      %v2515 = vpop.f32.mrb[0].mxu0
      %v2516 = vadd.f32 %v2259, %v2515
      %v2517 = vpop.f32.mrb[0].mxu0
      %2518 = vmatprep.mubr.bf16.mxu0 %v1701
      %2519 = vmatmul.mubr.bf16.gmra.mrb[0].mxu0 %v1700
      %v2520 = vpop.f32.mrb[0].mxu0
      %v2521 = vadd.f32 %v2264, %v2520
      %v2522 = vpop.f32.mrb[0].mxu0
      %v2523 = vpop.f32.mrb[0].mxu0
      %v2524 = vadd.f32 %v2267, %v2523
      %v2525 = vpop.f32.mrb[0].mxu0
      %2526 = vmatprep.mubr.bf16.mxu0 %v1703
      %2527 = vmatmul.mubr.bf16.gmra.mrb[0].mxu0 %v1702
      %v2528 = vpop.f32.mrb[0].mxu0
      %v2529 = vadd.f32 %v2272, %v2528
      %v2530 = vpop.f32.mrb[0].mxu0
      %v2531 = vpop.f32.mrb[0].mxu0
      %v2532 = vadd.f32 %v2275, %v2531
      %v2533 = vpop.f32.mrb[0].mxu0
      %2534 = vmatprep.mubr.bf16.mxu0 %v1705
      %2535 = vmatmul.mubr.bf16.gmra.mrb[0].mxu0 %v1704
      %v2536 = vpop.f32.mrb[0].mxu0
      %v2537 = vadd.f32 %v2280, %v2536
      %v2538 = vpop.f32.mrb[0].mxu0
      %v2539 = vpop.f32.mrb[0].mxu0
      %v2540 = vadd.f32 %v2283, %v2539
      %v2541 = vpop.f32.mrb[0].mxu0
      %2542 = vmatprep.mubr.bf16.mxu0 %v1707
      %2543 = vmatmul.mubr.bf16.gmra.mrb[0].mxu0 %v1706
      %v2544 = vpop.f32.mrb[0].mxu0
      %v2545 = vadd.f32 %v2288, %v2544
      %v2546 = vpop.f32.mrb[0].mxu0
      %v2547 = vpop.f32.mrb[0].mxu0
      %v2548 = vadd.f32 %v2291, %v2547
      %v2549 = vpop.f32.mrb[0].mxu0
      %2550 = vmatprep.mubr.bf16.mxu0 %v1709
      %2551 = vmatmul.mubr.bf16.gmra.mrb[0].mxu0 %v1708
      %v2552 = vpop.f32.mrb[0].mxu0
      %v2553 = vadd.f32 %v2296, %v2552
      %v2554 = vpop.f32.mrb[0].mxu0
      %v2555 = vpop.f32.mrb[0].mxu0
      %v2556 = vadd.f32 %v2299, %v2555
      %v2557 = vpop.f32.mrb[0].mxu0
      %2558 = vmatprep.mubr.bf16.mxu0 %v1711
      %2559 = vmatmul.mubr.bf16.gmra.mrb[0].mxu0 %v1710
      %v2560 = vpop.f32.mrb[0].mxu0
      %v2561 = vadd.f32 %v2304, %v2560
      %v2562 = vpop.f32.mrb[0].mxu0
      %v2563 = vpop.f32.mrb[0].mxu0
      %v2564 = vadd.f32 %v2307, %v2563
      %v2565 = vpop.f32.mrb[0].mxu0
      %2566 = vmatprep.mubr.bf16.mxu0 %v1713
      %2567 = vmatmul.mubr.bf16.gmra.mrb[0].mxu0 %v1712
      %v2568 = vpop.f32.mrb[0].mxu0
      %v2569 = vadd.f32 %v2312, %v2568
      %v2570 = vpop.f32.mrb[0].mxu0
      %v2571 = vpop.f32.mrb[0].mxu0
      %v2572 = vadd.f32 %v2315, %v2571
      %v2573 = vpop.f32.mrb[0].mxu0
      %2574 = vmatprep.mubr.bf16.mxu0 %v1715
      %2575 = vmatmul.mubr.bf16.gmra.mrb[0].mxu0 %v1714
      %v2576 = vpop.f32.mrb[0].mxu0
      %v2577 = vadd.f32 %v2320, %v2576
      %v2578 = vpop.f32.mrb[0].mxu0
      %v2579 = vpop.f32.mrb[0].mxu0
      %v2580 = vadd.f32 %v2323, %v2579
      %v2581 = vpop.f32.mrb[0].mxu0
      %2582 = vdwg.mxu0
      %v2583 = vrot.slane %v1753, 1
      %v2584 = vor.u32 %v1750, %v2583
      %v2585 = vrot.slane %v1767, 1
      %v2586 = vsel %vm1124, %v2584, %v2585
      %v2587 = vrot.slane %v1760, 1
      %v2588 = vor.u32 %v1757, %v2587
      %v2589 = vrot.slane %v1775, 1
      %v2590 = vsel %vm1124, %v2588, %v2589
      %v2591 = vor.u32 %v1764, %v2585
      %v2592 = vrot.slane %v1783, 1
      %v2593 = vsel %vm1124, %v2591, %v2592
      %v2594 = vor.u32 %v1772, %v2589
      %v2595 = vrot.slane %v1791, 1
      %v2596 = vsel %vm1124, %v2594, %v2595
      %v2597 = vor.u32 %v1780, %v2592
      %v2598 = vrot.slane %v1799, 1
      %v2599 = vsel %vm1124, %v2597, %v2598
      %v2600 = vor.u32 %v1788, %v2595
      %v2601 = vrot.slane %v1807, 1
      %v2602 = vsel %vm1124, %v2600, %v2601
      %v2603 = vor.u32 %v1796, %v2598
      %v2604 = vor.u32 %v1804, %v2601
      %v2605 = vrot.slane %v1815, 1
      %v2606 = vor.u32 %v1812, %v2605
      %v2607 = vrot.slane %v1829, 1
      %v2608 = vsel %vm1124, %v2606, %v2607
      %v2609 = vrot.slane %v1822, 1
      %v2610 = vor.u32 %v1819, %v2609
      %v2611 = vrot.slane %v1837, 1
      %v2612 = vsel %vm1124, %v2610, %v2611
      %v2613 = vor.u32 %v1826, %v2607
      %v2614 = vrot.slane %v1845, 1
      %v2615 = vsel %vm1124, %v2613, %v2614
      %v2616 = vor.u32 %v1834, %v2611
      %v2617 = vrot.slane %v1853, 1
      %v2618 = vsel %vm1124, %v2616, %v2617
      %v2619 = vor.u32 %v1842, %v2614
      %v2620 = vrot.slane %v1861, 1
      %v2621 = vsel %vm1124, %v2619, %v2620
      %v2622 = vor.u32 %v1850, %v2617
      %v2623 = vrot.slane %v1869, 1
      %v2624 = vsel %vm1124, %v2622, %v2623
      %v2625 = vor.u32 %v1858, %v2620
      %v2626 = vor.u32 %v1866, %v2623
      %v2627 = vrot.slane %v1877, 1
      %v2628 = vor.u32 %v1874, %v2627
      %v2629 = vrot.slane %v1891, 1
      %v2630 = vsel %vm1124, %v2628, %v2629
      %v2631 = vrot.slane %v1884, 1
      %v2632 = vor.u32 %v1881, %v2631
      %v2633 = vrot.slane %v1899, 1
      %v2634 = vsel %vm1124, %v2632, %v2633
      %v2635 = vor.u32 %v1888, %v2629
      %v2636 = vrot.slane %v1907, 1
      %v2637 = vsel %vm1124, %v2635, %v2636
      %v2638 = vor.u32 %v1896, %v2633
      %v2639 = vrot.slane %v1915, 1
      %v2640 = vsel %vm1124, %v2638, %v2639
      %v2641 = vor.u32 %v1904, %v2636
      %v2642 = vrot.slane %v1923, 1
      %v2643 = vsel %vm1124, %v2641, %v2642
      %v2644 = vor.u32 %v1912, %v2639
      %v2645 = vrot.slane %v1931, 1
      %v2646 = vsel %vm1124, %v2644, %v2645
      %v2647 = vor.u32 %v1920, %v2642
      %v2648 = vor.u32 %v1928, %v2645
      %v2649 = vrot.slane %v1939, 1
      %v2650 = vor.u32 %v1936, %v2649
      %v2651 = vrot.slane %v1953, 1
      %v2652 = vsel %vm1124, %v2650, %v2651
      %v2653 = vrot.slane %v1946, 1
      %v2654 = vor.u32 %v1943, %v2653
      %v2655 = vrot.slane %v1961, 1
      %v2656 = vsel %vm1124, %v2654, %v2655
      %v2657 = vor.u32 %v1950, %v2651
      %v2658 = vrot.slane %v1969, 1
      %v2659 = vsel %vm1124, %v2657, %v2658
      %v2660 = vor.u32 %v1958, %v2655
      %v2661 = vrot.slane %v1977, 1
      %v2662 = vsel %vm1124, %v2660, %v2661
      %v2663 = vor.u32 %v1966, %v2658
      %v2664 = vrot.slane %v1985, 1
      %v2665 = vsel %vm1124, %v2663, %v2664
      %v2666 = vor.u32 %v1974, %v2661
      %v2667 = vrot.slane %v1993, 1
      %v2668 = vsel %vm1124, %v2666, %v2667
      %v2669 = vor.u32 %v1982, %v2664
      %v2670 = vor.u32 %v1990, %v2667
      %v2703 = vsel %vm1186, %v2603, 0
      %v2704 = vsel %vm1186, %v2604, 0
      %v2705 = vsel %vm1186, %v2625, 0
      %v2706 = vsel %vm1186, %v2626, 0
      %v2707 = vsel %vm1186, %v2647, 0
      %v2708 = vsel %vm1186, %v2648, 0
      %v2709 = vsel %vm1186, %v2669, 0
      %v2710 = vsel %vm1186, %v2670, 0
      %s2711 = scalar_lea.vmem %s2, 256
      %v2712 = vld [vmem:[%s2711] sm:$0xf]
      %v2713 = vld [vmem:[%s2711 + $0x4] sm:$0xf]
      %v2714 = vld [vmem:[%s2711 + $0x8] sm:$0xf]
      %v2715 = vld [vmem:[%s2711 + $0xc] sm:$0xf]
      %v2716 = vld [vmem:[%s2711 + $0x10] sm:$0xf]
      %v2717 = vld [vmem:[%s2711 + $0x14] sm:$0xf]
      %v2718 = vld [vmem:[%s2711 + $0x18] sm:$0xf]
      %v2719 = vld [vmem:[%s2711 + $0x1c] sm:$0xf]
      %v2720 = vld [vmem:[%s2711 + $0x20] sm:$0xf]
      %v2721 = vld [vmem:[%s2711 + $0x24] sm:$0xf]
      %v2722 = vld [vmem:[%s2711 + $0x28] sm:$0xf]
      %v2723 = vld [vmem:[%s2711 + $0x2c] sm:$0xf]
      %v2724 = vld [vmem:[%s2711 + $0x30] sm:$0xf]
      %v2725 = vld [vmem:[%s2711 + $0x34] sm:$0xf]
      %v2726 = vld [vmem:[%s2711 + $0x38] sm:$0xf]
      %v2727 = vld [vmem:[%s2711 + $0x3c] sm:$0xf]
      %v2728 = vld [vmem:[%s2711 + $0x40] sm:$0xf]
      %v2729 = vld [vmem:[%s2711 + $0x44] sm:$0xf]
      %v2730 = vld [vmem:[%s2711 + $0x48] sm:$0xf]
      %v2731 = vld [vmem:[%s2711 + $0x4c] sm:$0xf]
      %v2732 = vld [vmem:[%s2711 + $0x50] sm:$0xf]
      %v2733 = vld [vmem:[%s2711 + $0x54] sm:$0xf]
      %v2734 = vld [vmem:[%s2711 + $0x58] sm:$0xf]
      %v2735 = vld [vmem:[%s2711 + $0x5c] sm:$0xf]
      %v2736 = vld [vmem:[%s2711 + $0x60] sm:$0xf]
      %v2737 = vld [vmem:[%s2711 + $0x64] sm:$0xf]
      %v2738 = vld [vmem:[%s2711 + $0x68] sm:$0xf]
      %v2739 = vld [vmem:[%s2711 + $0x6c] sm:$0xf]
      %v2740 = vld [vmem:[%s2711 + $0x70] sm:$0xf]
      %v2741 = vld [vmem:[%s2711 + $0x74] sm:$0xf]
      %v2742 = vld [vmem:[%s2711 + $0x78] sm:$0xf]
      %v2743 = vld [vmem:[%s2711 + $0x7c] sm:$0xf]
      %v2776 = vunpack.c.l.b16 %v2712
      %v2777 = vunpack.c.l.b16 %v2713
      %v2778 = vunpack.c.l.b16 %v2714
      %v2779 = vunpack.c.l.b16 %v2715
      %v2780 = vunpack.c.l.b16 %v2716
      %v2781 = vunpack.c.l.b16 %v2717
      %v2782 = vunpack.c.l.b16 %v2718
      %v2783 = vunpack.c.l.b16 %v2719
      %v2784 = vunpack.c.l.b16 %v2720
      %v2785 = vunpack.c.l.b16 %v2721
      %v2786 = vunpack.c.l.b16 %v2722
      %v2787 = vunpack.c.l.b16 %v2723
      %v2788 = vunpack.c.l.b16 %v2724
      %v2789 = vunpack.c.l.b16 %v2725
      %v2790 = vunpack.c.l.b16 %v2726
      %v2791 = vunpack.c.l.b16 %v2727
      %v2792 = vunpack.c.l.b16 %v2728
      %v2793 = vunpack.c.l.b16 %v2729
      %v2794 = vunpack.c.l.b16 %v2730
      %v2795 = vunpack.c.l.b16 %v2731
      %v2796 = vunpack.c.l.b16 %v2732
      %v2797 = vunpack.c.l.b16 %v2733
      %v2798 = vunpack.c.l.b16 %v2734
      %v2799 = vunpack.c.l.b16 %v2735
      %v2800 = vunpack.c.l.b16 %v2736
      %v2801 = vunpack.c.l.b16 %v2737
      %v2802 = vunpack.c.l.b16 %v2738
      %v2803 = vunpack.c.l.b16 %v2739
      %v2804 = vunpack.c.l.b16 %v2740
      %v2805 = vunpack.c.l.b16 %v2741
      %v2806 = vunpack.c.l.b16 %v2742
      %v2807 = vunpack.c.l.b16 %v2743
      %v2808 = vpack.c.b16 %v2777, %v2776
      %v2809 = vpack.c.b16 %v2779, %v2778
      %v2810 = vpack.c.b16 %v2781, %v2780
      %v2811 = vpack.c.b16 %v2783, %v2782
      %v2812 = vpack.c.b16 %v2785, %v2784
      %v2813 = vpack.c.b16 %v2787, %v2786
      %v2814 = vpack.c.b16 %v2789, %v2788
      %v2815 = vpack.c.b16 %v2791, %v2790
      %v2816 = vpack.c.b16 %v2793, %v2792
      %v2817 = vpack.c.b16 %v2795, %v2794
      %v2818 = vpack.c.b16 %v2797, %v2796
      %v2819 = vpack.c.b16 %v2799, %v2798
      %v2820 = vpack.c.b16 %v2801, %v2800
      %v2821 = vpack.c.b16 %v2803, %v2802
      %v2822 = vpack.c.b16 %v2805, %v2804
      %v2823 = vpack.c.b16 %v2807, %v2806
      %2840 = vmatprep.subr.bf16.mxu0 0
      %2841 = vmatpush1.bf16.msra.mxu0 %v2808
      %2842 = vmatprep.subr.bf16.mxu0 0
      %2843 = vmatpush1.bf16.msra.mxu0 %v2809
      %2844 = vmatprep.subr.bf16.mxu0 0
      %2845 = vmatpush1.bf16.msra.mxu0 %v2810
      %2846 = vmatprep.subr.bf16.mxu0 0
      %2847 = vmatpush1.bf16.msra.mxu0 %v2811
      %2848 = vmatprep.subr.bf16.mxu0 0
      %2849 = vmatpush1.bf16.msra.mxu0 %v2812
      %2850 = vmatprep.subr.bf16.mxu0 0
      %2851 = vmatpush1.bf16.msra.mxu0 %v2813
      %2852 = vmatprep.subr.bf16.mxu0 0
      %2853 = vmatpush1.bf16.msra.mxu0 %v2814
      %2854 = vmatprep.subr.bf16.mxu0 0
      %2855 = vmatpush1.bf16.msra.mxu0 %v2815
      %2856 = vmatprep.subr.bf16.mxu0 0
      %2857 = vmatpush1.bf16.msra.mxu0 %v2816
      %2858 = vmatprep.subr.bf16.mxu0 0
      %2859 = vmatpush1.bf16.msra.mxu0 %v2817
      %2860 = vmatprep.subr.bf16.mxu0 0
      %2861 = vmatpush1.bf16.msra.mxu0 %v2818
      %2862 = vmatprep.subr.bf16.mxu0 0
      %2863 = vmatpush1.bf16.msra.mxu0 %v2819
      %2864 = vmatprep.subr.bf16.mxu0 0
      %2865 = vmatpush1.bf16.msra.mxu0 %v2820
      %2866 = vmatprep.subr.bf16.mxu0 0
      %2867 = vmatpush1.bf16.msra.mxu0 %v2821
      %2868 = vmatprep.subr.bf16.mxu0 0
      %2869 = vmatpush1.bf16.msra.mxu0 %v2822
      %2870 = vmatprep.subr.bf16.mxu0 0
      %2871 = vmatpush1.bf16.msra.mxu0 %v2823
      %2872 = vmatprep.mubr.bf16.mxu0 %v2590
      %2873 = vmatmul.mubr.bf16.gmra.mrb[0].mxu0 %v2586
      %v2874 = vpop.f32.mrb[0].mxu0
      %v2875 = vadd.f32 0.0, %v2874
      %v2876 = vpop.f32.mrb[0].mxu0
      %v2877 = vpop.f32.mrb[0].mxu0
      %v2878 = vadd.f32 0.0, %v2877
      %v2879 = vpop.f32.mrb[0].mxu0
      %2880 = vmatprep.mubr.bf16.mxu0 %v2596
      %2881 = vmatmul.mubr.bf16.gmra.mrb[0].mxu0 %v2593
      %v2882 = vpop.f32.mrb[0].mxu0
      %v2883 = vadd.f32 0.0, %v2882
      %v2884 = vpop.f32.mrb[0].mxu0
      %v2885 = vpop.f32.mrb[0].mxu0
      %v2886 = vadd.f32 0.0, %v2885
      %v2887 = vpop.f32.mrb[0].mxu0
      %2888 = vmatprep.mubr.bf16.mxu0 %v2602
      %2889 = vmatmul.mubr.bf16.gmra.mrb[0].mxu0 %v2599
      %v2890 = vpop.f32.mrb[0].mxu0
      %v2891 = vadd.f32 0.0, %v2890
      %v2892 = vpop.f32.mrb[0].mxu0
      %v2893 = vpop.f32.mrb[0].mxu0
      %v2894 = vadd.f32 0.0, %v2893
      %v2895 = vpop.f32.mrb[0].mxu0
      %2896 = vmatprep.mubr.bf16.mxu0 %v2704
      %2897 = vmatmul.mubr.bf16.gmra.mrb[0].mxu0 %v2703
      %v2898 = vpop.f32.mrb[0].mxu0
      %v2899 = vadd.f32 0.0, %v2898
      %v2900 = vpop.f32.mrb[0].mxu0
      %v2901 = vpop.f32.mrb[0].mxu0
      %v2902 = vadd.f32 0.0, %v2901
      %v2903 = vpop.f32.mrb[0].mxu0
      %2904 = vmatprep.mubr.bf16.mxu0 %v2612
      %2905 = vmatmul.mubr.bf16.gmra.mrb[0].mxu0 %v2608
      %v2906 = vpop.f32.mrb[0].mxu0
      %v2907 = vadd.f32 0.0, %v2906
      %v2908 = vpop.f32.mrb[0].mxu0
      %v2909 = vpop.f32.mrb[0].mxu0
      %v2910 = vadd.f32 0.0, %v2909
      %v2911 = vpop.f32.mrb[0].mxu0
      %2912 = vmatprep.mubr.bf16.mxu0 %v2618
      %2913 = vmatmul.mubr.bf16.gmra.mrb[0].mxu0 %v2615
      %v2914 = vpop.f32.mrb[0].mxu0
      %v2915 = vadd.f32 0.0, %v2914
      %v2916 = vpop.f32.mrb[0].mxu0
      %v2917 = vpop.f32.mrb[0].mxu0
      %v2918 = vadd.f32 0.0, %v2917
      %v2919 = vpop.f32.mrb[0].mxu0
      %2920 = vmatprep.mubr.bf16.mxu0 %v2624
      %2921 = vmatmul.mubr.bf16.gmra.mrb[0].mxu0 %v2621
      %v2922 = vpop.f32.mrb[0].mxu0
      %v2923 = vadd.f32 0.0, %v2922
      %v2924 = vpop.f32.mrb[0].mxu0
      %v2925 = vpop.f32.mrb[0].mxu0
      %v2926 = vadd.f32 0.0, %v2925
      %v2927 = vpop.f32.mrb[0].mxu0
      %2928 = vmatprep.mubr.bf16.mxu0 %v2706
      %2929 = vmatmul.mubr.bf16.gmra.mrb[0].mxu0 %v2705
      %v2930 = vpop.f32.mrb[0].mxu0
      %v2931 = vadd.f32 0.0, %v2930
      %v2932 = vpop.f32.mrb[0].mxu0
      %v2933 = vpop.f32.mrb[0].mxu0
      %v2934 = vadd.f32 0.0, %v2933
      %v2935 = vpop.f32.mrb[0].mxu0
      %2936 = vmatprep.mubr.bf16.mxu0 %v2634
      %2937 = vmatmul.mubr.bf16.gmra.mrb[0].mxu0 %v2630
      %v2938 = vpop.f32.mrb[0].mxu0
      %v2939 = vadd.f32 0.0, %v2938
      %v2940 = vpop.f32.mrb[0].mxu0
      %v2941 = vpop.f32.mrb[0].mxu0
      %v2942 = vadd.f32 0.0, %v2941
      %v2943 = vpop.f32.mrb[0].mxu0
      %2944 = vmatprep.mubr.bf16.mxu0 %v2640
      %2945 = vmatmul.mubr.bf16.gmra.mrb[0].mxu0 %v2637
      %v2946 = vpop.f32.mrb[0].mxu0
      %v2947 = vadd.f32 0.0, %v2946
      %v2948 = vpop.f32.mrb[0].mxu0
      %v2949 = vpop.f32.mrb[0].mxu0
      %v2950 = vadd.f32 0.0, %v2949
      %v2951 = vpop.f32.mrb[0].mxu0
      %2952 = vmatprep.mubr.bf16.mxu0 %v2646
      %2953 = vmatmul.mubr.bf16.gmra.mrb[0].mxu0 %v2643
      %v2954 = vpop.f32.mrb[0].mxu0
      %v2955 = vadd.f32 0.0, %v2954
      %v2956 = vpop.f32.mrb[0].mxu0
      %v2957 = vpop.f32.mrb[0].mxu0
      %v2958 = vadd.f32 0.0, %v2957
      %v2959 = vpop.f32.mrb[0].mxu0
      %2960 = vmatprep.mubr.bf16.mxu0 %v2708
      %2961 = vmatmul.mubr.bf16.gmra.mrb[0].mxu0 %v2707
      %v2962 = vpop.f32.mrb[0].mxu0
      %v2963 = vadd.f32 0.0, %v2962
      %v2964 = vpop.f32.mrb[0].mxu0
      %v2965 = vpop.f32.mrb[0].mxu0
      %v2966 = vadd.f32 0.0, %v2965
      %v2967 = vpop.f32.mrb[0].mxu0
      %2968 = vmatprep.mubr.bf16.mxu0 %v2656
      %2969 = vmatmul.mubr.bf16.gmra.mrb[0].mxu0 %v2652
      %v2970 = vpop.f32.mrb[0].mxu0
      %v2971 = vadd.f32 0.0, %v2970
      %v2972 = vpop.f32.mrb[0].mxu0
      %v2973 = vpop.f32.mrb[0].mxu0
      %v2974 = vadd.f32 0.0, %v2973
      %v2975 = vpop.f32.mrb[0].mxu0
      %2976 = vmatprep.mubr.bf16.mxu0 %v2662
      %2977 = vmatmul.mubr.bf16.gmra.mrb[0].mxu0 %v2659
      %v2978 = vpop.f32.mrb[0].mxu0
      %v2979 = vadd.f32 0.0, %v2978
      %v2980 = vpop.f32.mrb[0].mxu0
      %v2981 = vpop.f32.mrb[0].mxu0
      %v2982 = vadd.f32 0.0, %v2981
      %v2983 = vpop.f32.mrb[0].mxu0
      %2984 = vmatprep.mubr.bf16.mxu0 %v2668
      %2985 = vmatmul.mubr.bf16.gmra.mrb[0].mxu0 %v2665
      %v2986 = vpop.f32.mrb[0].mxu0
      %v2987 = vadd.f32 0.0, %v2986
      %v2988 = vpop.f32.mrb[0].mxu0
      %v2989 = vpop.f32.mrb[0].mxu0
      %v2990 = vadd.f32 0.0, %v2989
      %v2991 = vpop.f32.mrb[0].mxu0
      %2992 = vmatprep.mubr.bf16.mxu0 %v2710
      %2993 = vmatmul.mubr.bf16.gmra.mrb[0].mxu0 %v2709
      %v2994 = vpop.f32.mrb[0].mxu0
      %v2995 = vadd.f32 0.0, %v2994
      %v2996 = vpop.f32.mrb[0].mxu0
      %v2997 = vpop.f32.mrb[0].mxu0
      %v2998 = vadd.f32 0.0, %v2997
      %v2999 = vpop.f32.mrb[0].mxu0
      %3000 = vdwg.mxu0
      %v3001 = vadd.f32 %v2457, %v2875
      %v3002 = vadd.f32 %v2460, %v2878
      %v3003 = vadd.f32 %v2465, %v2883
      %v3004 = vadd.f32 %v2468, %v2886
      %v3005 = vadd.f32 %v2473, %v2891
      %v3006 = vadd.f32 %v2476, %v2894
      %v3007 = vadd.f32 %v2481, %v2899
      %v3008 = vadd.f32 %v2484, %v2902
      %v3009 = vadd.f32 %v2489, %v2907
      %v3010 = vadd.f32 %v2492, %v2910
      %v3011 = vadd.f32 %v2497, %v2915
      %v3012 = vadd.f32 %v2500, %v2918
      %v3013 = vadd.f32 %v2505, %v2923
      %v3014 = vadd.f32 %v2508, %v2926
      %v3015 = vadd.f32 %v2513, %v2931
      %v3016 = vadd.f32 %v2516, %v2934
      %v3017 = vadd.f32 %v2521, %v2939
      %v3018 = vadd.f32 %v2524, %v2942
      %v3019 = vadd.f32 %v2529, %v2947
      %v3020 = vadd.f32 %v2532, %v2950
      %v3021 = vadd.f32 %v2537, %v2955
      %v3022 = vadd.f32 %v2540, %v2958
      %v3023 = vadd.f32 %v2545, %v2963
      %v3024 = vadd.f32 %v2548, %v2966
      %v3025 = vadd.f32 %v2553, %v2971
      %v3026 = vadd.f32 %v2556, %v2974
      %v3027 = vadd.f32 %v2561, %v2979
      %v3028 = vadd.f32 %v2564, %v2982
      %v3029 = vadd.f32 %v2569, %v2987
      %v3030 = vadd.f32 %v2572, %v2990
      %v3031 = vadd.f32 %v2577, %v2995
      %v3032 = vadd.f32 %v2580, %v2998
      %v3034 = vlaneseq
      %v3035 = vshrl.u32 %v3034, 7
      %v3036 = vsub.s32 0, %v3035
      %v3037 = vrot.slane %v299, %v3036
      %v3039 = vadd.f32 %v3001, %v3037
      %v3040 = vadd.f32 %v3002, %v3037
      %v3041 = vadd.f32 %v3003, %v3037
      %v3042 = vadd.f32 %v3004, %v3037
      %v3043 = vadd.f32 %v3005, %v3037
      %v3044 = vadd.f32 %v3006, %v3037
      %v3045 = vadd.f32 %v3007, %v3037
      %v3046 = vadd.f32 %v3008, %v3037
      %v3047 = vadd.f32 %v3009, %v3037
      %v3048 = vadd.f32 %v3010, %v3037
      %v3049 = vadd.f32 %v3011, %v3037
      %v3050 = vadd.f32 %v3012, %v3037
      %v3051 = vadd.f32 %v3013, %v3037
      %v3052 = vadd.f32 %v3014, %v3037
      %v3053 = vadd.f32 %v3015, %v3037
      %v3054 = vadd.f32 %v3016, %v3037
      %v3055 = vadd.f32 %v3017, %v3037
      %v3056 = vadd.f32 %v3018, %v3037
      %v3057 = vadd.f32 %v3019, %v3037
      %v3058 = vadd.f32 %v3020, %v3037
      %v3059 = vadd.f32 %v3021, %v3037
      %v3060 = vadd.f32 %v3022, %v3037
      %v3061 = vadd.f32 %v3023, %v3037
      %v3062 = vadd.f32 %v3024, %v3037
      %v3063 = vadd.f32 %v3025, %v3037
      %v3064 = vadd.f32 %v3026, %v3037
      %v3065 = vadd.f32 %v3027, %v3037
      %v3066 = vadd.f32 %v3028, %v3037
      %v3067 = vadd.f32 %v3029, %v3037
      %v3068 = vadd.f32 %v3030, %v3037
      %v3069 = vadd.f32 %v3031, %v3037
      %v3070 = vadd.f32 %v3032, %v3037
      %v3071 = vadd.f32 %v3039, %v266
      %v3072 = vadd.f32 %v3040, %v267
      %v3073 = vadd.f32 %v3041, %v268
      %v3074 = vadd.f32 %v3042, %v269
      %v3075 = vadd.f32 %v3043, %v270
      %v3076 = vadd.f32 %v3044, %v271
      %v3077 = vadd.f32 %v3045, %v272
      %v3078 = vadd.f32 %v3046, %v273
      %v3079 = vadd.f32 %v3047, %v274
      %v3080 = vadd.f32 %v3048, %v275
      %v3081 = vadd.f32 %v3049, %v276
      %v3082 = vadd.f32 %v3050, %v277
      %v3083 = vadd.f32 %v3051, %v278
      %v3084 = vadd.f32 %v3052, %v279
      %v3085 = vadd.f32 %v3053, %v280
      %v3086 = vadd.f32 %v3054, %v281
      %v3087 = vadd.f32 %v3055, %v282
      %v3088 = vadd.f32 %v3056, %v283
      %v3089 = vadd.f32 %v3057, %v284
      %v3090 = vadd.f32 %v3058, %v285
      %v3091 = vadd.f32 %v3059, %v286
      %v3092 = vadd.f32 %v3060, %v287
      %v3093 = vadd.f32 %v3061, %v288
      %v3094 = vadd.f32 %v3062, %v289
      %v3095 = vadd.f32 %v3063, %v290
      %v3096 = vadd.f32 %v3064, %v291
      %v3097 = vadd.f32 %v3065, %v292
      %v3098 = vadd.f32 %v3066, %v293
      %v3099 = vadd.f32 %v3067, %v294
      %v3100 = vadd.f32 %v3068, %v295
      %v3101 = vadd.f32 %v3069, %v296
      %v3102 = vadd.f32 %v3070, %v297
      %v3103 = vld [vmem:[%s3] sm:$0xff]
      %v3104 = vld [vmem:[%s3 + $0x8] sm:$0xff]
      %v3105 = vld [vmem:[%s3 + $0x10] sm:$0xff]
      %v3106 = vld [vmem:[%s3 + $0x18] sm:$0xff]
      %v3107 = vld [vmem:[%s3 + $0x20] sm:$0xff]
      %v3108 = vld [vmem:[%s3 + $0x28] sm:$0xff]
      %v3109 = vld [vmem:[%s3 + $0x30] sm:$0xff]
      %v3110 = vld [vmem:[%s3 + $0x38] sm:$0xff]
      %v3111 = vld [vmem:[%s3 + $0x40] sm:$0xff]
      %v3112 = vld [vmem:[%s3 + $0x48] sm:$0xff]
      %v3113 = vld [vmem:[%s3 + $0x50] sm:$0xff]
      %v3114 = vld [vmem:[%s3 + $0x58] sm:$0xff]
      %v3115 = vld [vmem:[%s3 + $0x60] sm:$0xff]
      %v3116 = vld [vmem:[%s3 + $0x68] sm:$0xff]
      %v3117 = vld [vmem:[%s3 + $0x70] sm:$0xff]
      %v3118 = vld [vmem:[%s3 + $0x78] sm:$0xff]
      %3119 = vmatprep.subr.mxu0 0.0
      %3120 = vmatpush1.msra.mxu0 %v3103
      %3121 = vmatprep.subr.mxu0 0.0
      %3122 = vmatpush1.msra.mxu0 %v3104
      %3123 = vmatprep.subr.mxu0 0.0
      %3124 = vmatpush1.msra.mxu0 %v3105
      %3125 = vmatprep.subr.mxu0 0.0
      %3126 = vmatpush1.msra.mxu0 %v3106
      %3127 = vmatprep.subr.mxu0 0.0
      %3128 = vmatpush1.msra.mxu0 %v3107
      %3129 = vmatprep.subr.mxu0 0.0
      %3130 = vmatpush1.msra.mxu0 %v3108
      %3131 = vmatprep.subr.mxu0 0.0
      %3132 = vmatpush1.msra.mxu0 %v3109
      %3133 = vmatprep.subr.mxu0 0.0
      %3134 = vmatpush1.msra.mxu0 %v3110
      %3135 = vmatprep.subr.mxu0 0.0
      %3136 = vmatpush1.msra.mxu0 %v3111
      %3137 = vmatprep.subr.mxu0 0.0
      %3138 = vmatpush1.msra.mxu0 %v3112
      %3139 = vmatprep.subr.mxu0 0.0
      %3140 = vmatpush1.msra.mxu0 %v3113
      %3141 = vmatprep.subr.mxu0 0.0
      %3142 = vmatpush1.msra.mxu0 %v3114
      %3143 = vmatprep.subr.mxu0 0.0
      %3144 = vmatpush1.msra.mxu0 %v3115
      %3145 = vmatprep.subr.mxu0 0.0
      %3146 = vmatpush1.msra.mxu0 %v3116
      %3147 = vmatprep.subr.mxu0 0.0
      %3148 = vmatpush1.msra.mxu0 %v3117
      %3149 = vmatprep.subr.mxu0 0.0
      %3150 = vmatpush1.msra.mxu0 %v3118
      %3151 = vmatprep.subr.mxu0 0.0
      %3152 = vmatpush1.msra.mxu0 0.0
      %3153 = vmatprep.subr.mxu0 0.0
      %3154 = vmatpush1.msra.mxu0 0.0
      %3155 = vmatprep.subr.mxu0 0.0
      %3156 = vmatpush1.msra.mxu0 0.0
      %3157 = vmatprep.subr.mxu0 0.0
      %3158 = vmatpush1.msra.mxu0 0.0
      %3159 = vmatprep.subr.mxu0 0.0
      %3160 = vmatpush1.msra.mxu0 0.0
      %3161 = vmatprep.subr.mxu0 0.0
      %3162 = vmatpush1.msra.mxu0 0.0
      %3163 = vmatprep.subr.mxu0 0.0
      %3164 = vmatpush1.msra.mxu0 0.0
      %3165 = vmatprep.subr.mxu0 0.0
      %3166 = vmatpush1.msra.mxu0 0.0
      %3167 = vmatprep.subr.mxu0 0.0
      %3168 = vmatpush1.msra.mxu0 0.0
      %3169 = vmatprep.subr.mxu0 0.0
      %3170 = vmatpush1.msra.mxu0 0.0
      %3171 = vmatprep.subr.mxu0 0.0
      %3172 = vmatpush1.msra.mxu0 0.0
      %3173 = vmatprep.subr.mxu0 0.0
      %3174 = vmatpush1.msra.mxu0 0.0
      %3175 = vmatprep.subr.mxu0 0.0
      %3176 = vmatpush1.msra.mxu0 0.0
      %3177 = vmatprep.subr.mxu0 0.0
      %3178 = vmatpush1.msra.mxu0 0.0
      %3179 = vmatprep.subr.mxu0 0.0
      %3180 = vmatpush1.msra.mxu0 0.0
      %3181 = vmatprep.subr.mxu0 0.0
      %3182 = vmatpush1.msra.mxu0 0.0
      %3183 = vmatprep.mubr.f32.mxu0 0.0
      %3184 = vmatmul.mubr.f32.gmra.mrb[0].mxu0 %v3071
      %v3185 = vpop.f32.mrb[0].mxu0
      %v3186 = vadd.f32 0.0, %v3185
      %v3187 = vpop.f32.mrb[0].mxu0
      %3188 = vmatprep.mubr.f32.mxu0 0.0
      %3189 = vmatmul.mubr.f32.gmra.mrb[0].mxu0 %v3072
      %v3190 = vpop.f32.mrb[0].mxu0
      %v3191 = vadd.f32 0.0, %v3190
      %v3192 = vpop.f32.mrb[0].mxu0
      %3193 = vmatprep.mubr.f32.mxu0 0.0
      %3194 = vmatmul.mubr.f32.gmra.mrb[0].mxu0 %v3073
      %v3195 = vpop.f32.mrb[0].mxu0
      %v3196 = vadd.f32 0.0, %v3195
      %v3197 = vpop.f32.mrb[0].mxu0
      %3198 = vmatprep.mubr.f32.mxu0 0.0
      %3199 = vmatmul.mubr.f32.gmra.mrb[0].mxu0 %v3074
      %v3200 = vpop.f32.mrb[0].mxu0
      %v3201 = vadd.f32 0.0, %v3200
      %v3202 = vpop.f32.mrb[0].mxu0
      %3203 = vmatprep.mubr.f32.mxu0 0.0
      %3204 = vmatmul.mubr.f32.gmra.mrb[0].mxu0 %v3075
      %v3205 = vpop.f32.mrb[0].mxu0
      %v3206 = vadd.f32 0.0, %v3205
      %v3207 = vpop.f32.mrb[0].mxu0
      %3208 = vmatprep.mubr.f32.mxu0 0.0
      %3209 = vmatmul.mubr.f32.gmra.mrb[0].mxu0 %v3076
      %v3210 = vpop.f32.mrb[0].mxu0
      %v3211 = vadd.f32 0.0, %v3210
      %v3212 = vpop.f32.mrb[0].mxu0
      %3213 = vmatprep.mubr.f32.mxu0 0.0
      %3214 = vmatmul.mubr.f32.gmra.mrb[0].mxu0 %v3077
      %v3215 = vpop.f32.mrb[0].mxu0
      %v3216 = vadd.f32 0.0, %v3215
      %v3217 = vpop.f32.mrb[0].mxu0
      %3218 = vmatprep.mubr.f32.mxu0 0.0
      %3219 = vmatmul.mubr.f32.gmra.mrb[0].mxu0 %v3078
      %v3220 = vpop.f32.mrb[0].mxu0
      %v3221 = vadd.f32 0.0, %v3220
      %v3222 = vpop.f32.mrb[0].mxu0
      %3223 = vmatprep.mubr.f32.mxu0 0.0
      %3224 = vmatmul.mubr.f32.gmra.mrb[0].mxu0 %v3079
      %v3225 = vpop.f32.mrb[0].mxu0
      %v3226 = vadd.f32 0.0, %v3225
      %v3227 = vpop.f32.mrb[0].mxu0
      %3228 = vmatprep.mubr.f32.mxu0 0.0
      %3229 = vmatmul.mubr.f32.gmra.mrb[0].mxu0 %v3080
      %v3230 = vpop.f32.mrb[0].mxu0
      %v3231 = vadd.f32 0.0, %v3230
      %v3232 = vpop.f32.mrb[0].mxu0
      %3233 = vmatprep.mubr.f32.mxu0 0.0
      %3234 = vmatmul.mubr.f32.gmra.mrb[0].mxu0 %v3081
      %v3235 = vpop.f32.mrb[0].mxu0
      %v3236 = vadd.f32 0.0, %v3235
      %v3237 = vpop.f32.mrb[0].mxu0
      %3238 = vmatprep.mubr.f32.mxu0 0.0
      %3239 = vmatmul.mubr.f32.gmra.mrb[0].mxu0 %v3082
      %v3240 = vpop.f32.mrb[0].mxu0
      %v3241 = vadd.f32 0.0, %v3240
      %v3242 = vpop.f32.mrb[0].mxu0
      %3243 = vmatprep.mubr.f32.mxu0 0.0
      %3244 = vmatmul.mubr.f32.gmra.mrb[0].mxu0 %v3083
      %v3245 = vpop.f32.mrb[0].mxu0
      %v3246 = vadd.f32 0.0, %v3245
      %v3247 = vpop.f32.mrb[0].mxu0
      %3248 = vmatprep.mubr.f32.mxu0 0.0
      %3249 = vmatmul.mubr.f32.gmra.mrb[0].mxu0 %v3084
      %v3250 = vpop.f32.mrb[0].mxu0
      %v3251 = vadd.f32 0.0, %v3250
      %v3252 = vpop.f32.mrb[0].mxu0
      %3253 = vmatprep.mubr.f32.mxu0 0.0
      %3254 = vmatmul.mubr.f32.gmra.mrb[0].mxu0 %v3085
      %v3255 = vpop.f32.mrb[0].mxu0
      %v3256 = vadd.f32 0.0, %v3255
      %v3257 = vpop.f32.mrb[0].mxu0
      %3258 = vmatprep.mubr.f32.mxu0 0.0
      %3259 = vmatmul.mubr.f32.gmra.mrb[0].mxu0 %v3086
      %v3260 = vpop.f32.mrb[0].mxu0
      %v3261 = vadd.f32 0.0, %v3260
      %v3262 = vpop.f32.mrb[0].mxu0
      %3263 = vmatprep.mubr.f32.mxu0 0.0
      %3264 = vmatmul.mubr.f32.gmra.mrb[0].mxu0 %v3087
      %v3265 = vpop.f32.mrb[0].mxu0
      %v3266 = vadd.f32 0.0, %v3265
      %v3267 = vpop.f32.mrb[0].mxu0
      %3268 = vmatprep.mubr.f32.mxu0 0.0
      %3269 = vmatmul.mubr.f32.gmra.mrb[0].mxu0 %v3088
      %v3270 = vpop.f32.mrb[0].mxu0
      %v3271 = vadd.f32 0.0, %v3270
      %v3272 = vpop.f32.mrb[0].mxu0
      %3273 = vmatprep.mubr.f32.mxu0 0.0
      %3274 = vmatmul.mubr.f32.gmra.mrb[0].mxu0 %v3089
      %v3275 = vpop.f32.mrb[0].mxu0
      %v3276 = vadd.f32 0.0, %v3275
      %v3277 = vpop.f32.mrb[0].mxu0
      %3278 = vmatprep.mubr.f32.mxu0 0.0
      %3279 = vmatmul.mubr.f32.gmra.mrb[0].mxu0 %v3090
      %v3280 = vpop.f32.mrb[0].mxu0
      %v3281 = vadd.f32 0.0, %v3280
      %v3282 = vpop.f32.mrb[0].mxu0
      %3283 = vmatprep.mubr.f32.mxu0 0.0
      %3284 = vmatmul.mubr.f32.gmra.mrb[0].mxu0 %v3091
      %v3285 = vpop.f32.mrb[0].mxu0
      %v3286 = vadd.f32 0.0, %v3285
      %v3287 = vpop.f32.mrb[0].mxu0
      %3288 = vmatprep.mubr.f32.mxu0 0.0
      %3289 = vmatmul.mubr.f32.gmra.mrb[0].mxu0 %v3092
      %v3290 = vpop.f32.mrb[0].mxu0
      %v3291 = vadd.f32 0.0, %v3290
      %v3292 = vpop.f32.mrb[0].mxu0
      %3293 = vmatprep.mubr.f32.mxu0 0.0
      %3294 = vmatmul.mubr.f32.gmra.mrb[0].mxu0 %v3093
      %v3295 = vpop.f32.mrb[0].mxu0
      %v3296 = vadd.f32 0.0, %v3295
      %v3297 = vpop.f32.mrb[0].mxu0
      %3298 = vmatprep.mubr.f32.mxu0 0.0
      %3299 = vmatmul.mubr.f32.gmra.mrb[0].mxu0 %v3094
      %v3300 = vpop.f32.mrb[0].mxu0
      %v3301 = vadd.f32 0.0, %v3300
      %v3302 = vpop.f32.mrb[0].mxu0
      %3303 = vmatprep.mubr.f32.mxu0 0.0
      %3304 = vmatmul.mubr.f32.gmra.mrb[0].mxu0 %v3095
      %v3305 = vpop.f32.mrb[0].mxu0
      %v3306 = vadd.f32 0.0, %v3305
      %v3307 = vpop.f32.mrb[0].mxu0
      %3308 = vmatprep.mubr.f32.mxu0 0.0
      %3309 = vmatmul.mubr.f32.gmra.mrb[0].mxu0 %v3096
      %v3310 = vpop.f32.mrb[0].mxu0
      %v3311 = vadd.f32 0.0, %v3310
      %v3312 = vpop.f32.mrb[0].mxu0
      %3313 = vmatprep.mubr.f32.mxu0 0.0
      %3314 = vmatmul.mubr.f32.gmra.mrb[0].mxu0 %v3097
      %v3315 = vpop.f32.mrb[0].mxu0
      %v3316 = vadd.f32 0.0, %v3315
      %v3317 = vpop.f32.mrb[0].mxu0
      %3318 = vmatprep.mubr.f32.mxu0 0.0
      %3319 = vmatmul.mubr.f32.gmra.mrb[0].mxu0 %v3098
      %v3320 = vpop.f32.mrb[0].mxu0
      %v3321 = vadd.f32 0.0, %v3320
      %v3322 = vpop.f32.mrb[0].mxu0
      %3323 = vmatprep.mubr.f32.mxu0 0.0
      %3324 = vmatmul.mubr.f32.gmra.mrb[0].mxu0 %v3099
      %v3325 = vpop.f32.mrb[0].mxu0
      %v3326 = vadd.f32 0.0, %v3325
      %v3327 = vpop.f32.mrb[0].mxu0
      %3328 = vmatprep.mubr.f32.mxu0 0.0
      %3329 = vmatmul.mubr.f32.gmra.mrb[0].mxu0 %v3100
      %v3330 = vpop.f32.mrb[0].mxu0
      %v3331 = vadd.f32 0.0, %v3330
      %v3332 = vpop.f32.mrb[0].mxu0
      %3333 = vmatprep.mubr.f32.mxu0 0.0
      %3334 = vmatmul.mubr.f32.gmra.mrb[0].mxu0 %v3101
      %v3335 = vpop.f32.mrb[0].mxu0
      %v3336 = vadd.f32 0.0, %v3335
      %v3337 = vpop.f32.mrb[0].mxu0
      %3338 = vmatprep.mubr.f32.mxu0 0.0
      %3339 = vmatmul.mubr.f32.gmra.mrb[0].mxu0 %v3102
      %v3340 = vpop.f32.mrb[0].mxu0
      %v3341 = vadd.f32 0.0, %v3340
      %v3342 = vpop.f32.mrb[0].mxu0
      %3343 = vdwg.mxu0
      %v3344 = vsub.f32 %v3071, %v3186
      %v3345 = vsub.f32 %v3072, %v3191
      %v3346 = vsub.f32 %v3073, %v3196
      %v3347 = vsub.f32 %v3074, %v3201
      %v3348 = vsub.f32 %v3075, %v3206
      %v3349 = vsub.f32 %v3076, %v3211
      %v3350 = vsub.f32 %v3077, %v3216
      %v3351 = vsub.f32 %v3078, %v3221
      %v3352 = vsub.f32 %v3079, %v3226
      %v3353 = vsub.f32 %v3080, %v3231
      %v3354 = vsub.f32 %v3081, %v3236
      %v3355 = vsub.f32 %v3082, %v3241
      %v3356 = vsub.f32 %v3083, %v3246
      %v3357 = vsub.f32 %v3084, %v3251
      %v3358 = vsub.f32 %v3085, %v3256
      %v3359 = vsub.f32 %v3086, %v3261
      %v3360 = vsub.f32 %v3087, %v3266
      %v3361 = vsub.f32 %v3088, %v3271
      %v3362 = vsub.f32 %v3089, %v3276
      %v3363 = vsub.f32 %v3090, %v3281
      %v3364 = vsub.f32 %v3091, %v3286
      %v3365 = vsub.f32 %v3092, %v3291
      %v3366 = vsub.f32 %v3093, %v3296
      %v3367 = vsub.f32 %v3094, %v3301
      %v3368 = vsub.f32 %v3095, %v3306
      %v3369 = vsub.f32 %v3096, %v3311
      %v3370 = vsub.f32 %v3097, %v3316
      %v3371 = vsub.f32 %v3098, %v3321
      %v3372 = vsub.f32 %v3099, %v3326
      %v3373 = vsub.f32 %v3100, %v3331
      %v3374 = vsub.f32 %v3101, %v3336
      %v3375 = vsub.f32 %v3102, %v3341
      %v3376 = vmul.f32 %v3344, %v3344
      %v3377 = vmul.f32 %v3345, %v3345
      %v3378 = vmul.f32 %v3346, %v3346
      %v3379 = vmul.f32 %v3347, %v3347
      %v3380 = vmul.f32 %v3348, %v3348
      %v3381 = vmul.f32 %v3349, %v3349
      %v3382 = vmul.f32 %v3350, %v3350
      %v3383 = vmul.f32 %v3351, %v3351
      %v3384 = vmul.f32 %v3352, %v3352
      %v3385 = vmul.f32 %v3353, %v3353
      %v3386 = vmul.f32 %v3354, %v3354
      %v3387 = vmul.f32 %v3355, %v3355
      %v3388 = vmul.f32 %v3356, %v3356
      %v3389 = vmul.f32 %v3357, %v3357
      %v3390 = vmul.f32 %v3358, %v3358
      %v3391 = vmul.f32 %v3359, %v3359
      %v3392 = vmul.f32 %v3360, %v3360
      %v3393 = vmul.f32 %v3361, %v3361
      %v3394 = vmul.f32 %v3362, %v3362
      %v3395 = vmul.f32 %v3363, %v3363
      %v3396 = vmul.f32 %v3364, %v3364
      %v3397 = vmul.f32 %v3365, %v3365
      %v3398 = vmul.f32 %v3366, %v3366
      %v3399 = vmul.f32 %v3367, %v3367
      %v3400 = vmul.f32 %v3368, %v3368
      %v3401 = vmul.f32 %v3369, %v3369
      %v3402 = vmul.f32 %v3370, %v3370
      %v3403 = vmul.f32 %v3371, %v3371
      %v3404 = vmul.f32 %v3372, %v3372
      %v3405 = vmul.f32 %v3373, %v3373
      %v3406 = vmul.f32 %v3374, %v3374
      %v3407 = vmul.f32 %v3375, %v3375
      %3408 = vmatprep.subr.mxu0 0.0
      %3409 = vmatpush1.msra.mxu0 %v3103
      %3410 = vmatprep.subr.mxu0 0.0
      %3411 = vmatpush1.msra.mxu0 %v3104
      %3412 = vmatprep.subr.mxu0 0.0
      %3413 = vmatpush1.msra.mxu0 %v3105
      %3414 = vmatprep.subr.mxu0 0.0
      %3415 = vmatpush1.msra.mxu0 %v3106
      %3416 = vmatprep.subr.mxu0 0.0
      %3417 = vmatpush1.msra.mxu0 %v3107
      %3418 = vmatprep.subr.mxu0 0.0
      %3419 = vmatpush1.msra.mxu0 %v3108
      %3420 = vmatprep.subr.mxu0 0.0
      %3421 = vmatpush1.msra.mxu0 %v3109
      %3422 = vmatprep.subr.mxu0 0.0
      %3423 = vmatpush1.msra.mxu0 %v3110
      %3424 = vmatprep.subr.mxu0 0.0
      %3425 = vmatpush1.msra.mxu0 %v3111
      %3426 = vmatprep.subr.mxu0 0.0
      %3427 = vmatpush1.msra.mxu0 %v3112
      %3428 = vmatprep.subr.mxu0 0.0
      %3429 = vmatpush1.msra.mxu0 %v3113
      %3430 = vmatprep.subr.mxu0 0.0
      %3431 = vmatpush1.msra.mxu0 %v3114
      %3432 = vmatprep.subr.mxu0 0.0
      %3433 = vmatpush1.msra.mxu0 %v3115
      %3434 = vmatprep.subr.mxu0 0.0
      %3435 = vmatpush1.msra.mxu0 %v3116
      %3436 = vmatprep.subr.mxu0 0.0
      %3437 = vmatpush1.msra.mxu0 %v3117
      %3438 = vmatprep.subr.mxu0 0.0
      %3439 = vmatpush1.msra.mxu0 %v3118
      %3440 = vmatprep.subr.mxu0 0.0
      %3441 = vmatpush1.msra.mxu0 0.0
      %3442 = vmatprep.subr.mxu0 0.0
      %3443 = vmatpush1.msra.mxu0 0.0
      %3444 = vmatprep.subr.mxu0 0.0
      %3445 = vmatpush1.msra.mxu0 0.0
      %3446 = vmatprep.subr.mxu0 0.0
      %3447 = vmatpush1.msra.mxu0 0.0
      %3448 = vmatprep.subr.mxu0 0.0
      %3449 = vmatpush1.msra.mxu0 0.0
      %3450 = vmatprep.subr.mxu0 0.0
      %3451 = vmatpush1.msra.mxu0 0.0
      %3452 = vmatprep.subr.mxu0 0.0
      %3453 = vmatpush1.msra.mxu0 0.0
      %3454 = vmatprep.subr.mxu0 0.0
      %3455 = vmatpush1.msra.mxu0 0.0
      %3456 = vmatprep.subr.mxu0 0.0
      %3457 = vmatpush1.msra.mxu0 0.0
      %3458 = vmatprep.subr.mxu0 0.0
      %3459 = vmatpush1.msra.mxu0 0.0
      %3460 = vmatprep.subr.mxu0 0.0
      %3461 = vmatpush1.msra.mxu0 0.0
      %3462 = vmatprep.subr.mxu0 0.0
      %3463 = vmatpush1.msra.mxu0 0.0
      %3464 = vmatprep.subr.mxu0 0.0
      %3465 = vmatpush1.msra.mxu0 0.0
      %3466 = vmatprep.subr.mxu0 0.0
      %3467 = vmatpush1.msra.mxu0 0.0
      %3468 = vmatprep.subr.mxu0 0.0
      %3469 = vmatpush1.msra.mxu0 0.0
      %3470 = vmatprep.subr.mxu0 0.0
      %3471 = vmatpush1.msra.mxu0 0.0
      %3472 = vmatprep.mubr.f32.mxu0 0.0
      %3473 = vmatmul.mubr.f32.gmra.mrb[0].mxu0 %v3376
      %v3474 = vpop.f32.mrb[0].mxu0
      %v3475 = vadd.f32 1e-05, %v3474
      %v3476 = vpop.f32.mrb[0].mxu0
      %3477 = vmatprep.mubr.f32.mxu0 0.0
      %3478 = vmatmul.mubr.f32.gmra.mrb[0].mxu0 %v3377
      %v3479 = vpop.f32.mrb[0].mxu0
      %v3480 = vadd.f32 1e-05, %v3479
      %v3481 = vpop.f32.mrb[0].mxu0
      %3482 = vmatprep.mubr.f32.mxu0 0.0
      %3483 = vmatmul.mubr.f32.gmra.mrb[0].mxu0 %v3378
      %v3484 = vpop.f32.mrb[0].mxu0
      %v3485 = vadd.f32 1e-05, %v3484
      %v3486 = vpop.f32.mrb[0].mxu0
      %3487 = vmatprep.mubr.f32.mxu0 0.0
      %3488 = vmatmul.mubr.f32.gmra.mrb[0].mxu0 %v3379
      %v3489 = vpop.f32.mrb[0].mxu0
      %v3490 = vadd.f32 1e-05, %v3489
      %v3491 = vpop.f32.mrb[0].mxu0
      %3492 = vmatprep.mubr.f32.mxu0 0.0
      %3493 = vmatmul.mubr.f32.gmra.mrb[0].mxu0 %v3380
      %v3494 = vpop.f32.mrb[0].mxu0
      %v3495 = vadd.f32 1e-05, %v3494
      %v3496 = vpop.f32.mrb[0].mxu0
      %3497 = vmatprep.mubr.f32.mxu0 0.0
      %3498 = vmatmul.mubr.f32.gmra.mrb[0].mxu0 %v3381
      %v3499 = vpop.f32.mrb[0].mxu0
      %v3500 = vadd.f32 1e-05, %v3499
      %v3501 = vpop.f32.mrb[0].mxu0
      %3502 = vmatprep.mubr.f32.mxu0 0.0
      %3503 = vmatmul.mubr.f32.gmra.mrb[0].mxu0 %v3382
      %v3504 = vpop.f32.mrb[0].mxu0
      %v3505 = vadd.f32 1e-05, %v3504
      %v3506 = vpop.f32.mrb[0].mxu0
      %3507 = vmatprep.mubr.f32.mxu0 0.0
      %3508 = vmatmul.mubr.f32.gmra.mrb[0].mxu0 %v3383
      %v3509 = vpop.f32.mrb[0].mxu0
      %v3510 = vadd.f32 1e-05, %v3509
      %v3511 = vpop.f32.mrb[0].mxu0
      %3512 = vmatprep.mubr.f32.mxu0 0.0
      %3513 = vmatmul.mubr.f32.gmra.mrb[0].mxu0 %v3384
      %v3514 = vpop.f32.mrb[0].mxu0
      %v3515 = vadd.f32 1e-05, %v3514
      %v3516 = vpop.f32.mrb[0].mxu0
      %3517 = vmatprep.mubr.f32.mxu0 0.0
      %3518 = vmatmul.mubr.f32.gmra.mrb[0].mxu0 %v3385
      %v3519 = vpop.f32.mrb[0].mxu0
      %v3520 = vadd.f32 1e-05, %v3519
      %v3521 = vpop.f32.mrb[0].mxu0
      %3522 = vmatprep.mubr.f32.mxu0 0.0
      %3523 = vmatmul.mubr.f32.gmra.mrb[0].mxu0 %v3386
      %v3524 = vpop.f32.mrb[0].mxu0
      %v3525 = vadd.f32 1e-05, %v3524
      %v3526 = vpop.f32.mrb[0].mxu0
      %3527 = vmatprep.mubr.f32.mxu0 0.0
      %3528 = vmatmul.mubr.f32.gmra.mrb[0].mxu0 %v3387
      %v3529 = vpop.f32.mrb[0].mxu0
      %v3530 = vadd.f32 1e-05, %v3529
      %v3531 = vpop.f32.mrb[0].mxu0
      %3532 = vmatprep.mubr.f32.mxu0 0.0
      %3533 = vmatmul.mubr.f32.gmra.mrb[0].mxu0 %v3388
      %v3534 = vpop.f32.mrb[0].mxu0
      %v3535 = vadd.f32 1e-05, %v3534
      %v3536 = vpop.f32.mrb[0].mxu0
      %3537 = vmatprep.mubr.f32.mxu0 0.0
      %3538 = vmatmul.mubr.f32.gmra.mrb[0].mxu0 %v3389
      %v3539 = vpop.f32.mrb[0].mxu0
      %v3540 = vadd.f32 1e-05, %v3539
      %v3541 = vpop.f32.mrb[0].mxu0
      %3542 = vmatprep.mubr.f32.mxu0 0.0
      %3543 = vmatmul.mubr.f32.gmra.mrb[0].mxu0 %v3390
      %v3544 = vpop.f32.mrb[0].mxu0
      %v3545 = vadd.f32 1e-05, %v3544
      %v3546 = vpop.f32.mrb[0].mxu0
      %3547 = vmatprep.mubr.f32.mxu0 0.0
      %3548 = vmatmul.mubr.f32.gmra.mrb[0].mxu0 %v3391
      %v3549 = vpop.f32.mrb[0].mxu0
      %v3550 = vadd.f32 1e-05, %v3549
      %v3551 = vpop.f32.mrb[0].mxu0
      %3552 = vmatprep.mubr.f32.mxu0 0.0
      %3553 = vmatmul.mubr.f32.gmra.mrb[0].mxu0 %v3392
      %v3554 = vpop.f32.mrb[0].mxu0
      %v3555 = vadd.f32 1e-05, %v3554
      %v3556 = vpop.f32.mrb[0].mxu0
      %3557 = vmatprep.mubr.f32.mxu0 0.0
      %3558 = vmatmul.mubr.f32.gmra.mrb[0].mxu0 %v3393
      %v3559 = vpop.f32.mrb[0].mxu0
      %v3560 = vadd.f32 1e-05, %v3559
      %v3561 = vpop.f32.mrb[0].mxu0
      %3562 = vmatprep.mubr.f32.mxu0 0.0
      %3563 = vmatmul.mubr.f32.gmra.mrb[0].mxu0 %v3394
      %v3564 = vpop.f32.mrb[0].mxu0
      %v3565 = vadd.f32 1e-05, %v3564
      %v3566 = vpop.f32.mrb[0].mxu0
      %3567 = vmatprep.mubr.f32.mxu0 0.0
      %3568 = vmatmul.mubr.f32.gmra.mrb[0].mxu0 %v3395
      %v3569 = vpop.f32.mrb[0].mxu0
      %v3570 = vadd.f32 1e-05, %v3569
      %v3571 = vpop.f32.mrb[0].mxu0
      %3572 = vmatprep.mubr.f32.mxu0 0.0
      %3573 = vmatmul.mubr.f32.gmra.mrb[0].mxu0 %v3396
      %v3574 = vpop.f32.mrb[0].mxu0
      %v3575 = vadd.f32 1e-05, %v3574
      %v3576 = vpop.f32.mrb[0].mxu0
      %3577 = vmatprep.mubr.f32.mxu0 0.0
      %3578 = vmatmul.mubr.f32.gmra.mrb[0].mxu0 %v3397
      %v3579 = vpop.f32.mrb[0].mxu0
      %v3580 = vadd.f32 1e-05, %v3579
      %v3581 = vpop.f32.mrb[0].mxu0
      %3582 = vmatprep.mubr.f32.mxu0 0.0
      %3583 = vmatmul.mubr.f32.gmra.mrb[0].mxu0 %v3398
      %v3584 = vpop.f32.mrb[0].mxu0
      %v3585 = vadd.f32 1e-05, %v3584
      %v3586 = vpop.f32.mrb[0].mxu0
      %3587 = vmatprep.mubr.f32.mxu0 0.0
      %3588 = vmatmul.mubr.f32.gmra.mrb[0].mxu0 %v3399
      %v3589 = vpop.f32.mrb[0].mxu0
      %v3590 = vadd.f32 1e-05, %v3589
      %v3591 = vpop.f32.mrb[0].mxu0
      %3592 = vmatprep.mubr.f32.mxu0 0.0
      %3593 = vmatmul.mubr.f32.gmra.mrb[0].mxu0 %v3400
      %v3594 = vpop.f32.mrb[0].mxu0
      %v3595 = vadd.f32 1e-05, %v3594
      %v3596 = vpop.f32.mrb[0].mxu0
      %3597 = vmatprep.mubr.f32.mxu0 0.0
      %3598 = vmatmul.mubr.f32.gmra.mrb[0].mxu0 %v3401
      %v3599 = vpop.f32.mrb[0].mxu0
      %v3600 = vadd.f32 1e-05, %v3599
      %v3601 = vpop.f32.mrb[0].mxu0
      %3602 = vmatprep.mubr.f32.mxu0 0.0
      %3603 = vmatmul.mubr.f32.gmra.mrb[0].mxu0 %v3402
      %v3604 = vpop.f32.mrb[0].mxu0
      %v3605 = vadd.f32 1e-05, %v3604
      %v3606 = vpop.f32.mrb[0].mxu0
      %3607 = vmatprep.mubr.f32.mxu0 0.0
      %3608 = vmatmul.mubr.f32.gmra.mrb[0].mxu0 %v3403
      %v3609 = vpop.f32.mrb[0].mxu0
      %v3610 = vadd.f32 1e-05, %v3609
      %v3611 = vpop.f32.mrb[0].mxu0
      %3612 = vmatprep.mubr.f32.mxu0 0.0
      %3613 = vmatmul.mubr.f32.gmra.mrb[0].mxu0 %v3404
      %v3614 = vpop.f32.mrb[0].mxu0
      %v3615 = vadd.f32 1e-05, %v3614
      %v3616 = vpop.f32.mrb[0].mxu0
      %3617 = vmatprep.mubr.f32.mxu0 0.0
      %3618 = vmatmul.mubr.f32.gmra.mrb[0].mxu0 %v3405
      %v3619 = vpop.f32.mrb[0].mxu0
      %v3620 = vadd.f32 1e-05, %v3619
      %v3621 = vpop.f32.mrb[0].mxu0
      %3622 = vmatprep.mubr.f32.mxu0 0.0
      %3623 = vmatmul.mubr.f32.gmra.mrb[0].mxu0 %v3406
      %v3624 = vpop.f32.mrb[0].mxu0
      %v3625 = vadd.f32 1e-05, %v3624
      %v3626 = vpop.f32.mrb[0].mxu0
      %3627 = vmatprep.mubr.f32.mxu0 0.0
      %3628 = vmatmul.mubr.f32.gmra.mrb[0].mxu0 %v3407
      %v3629 = vpop.f32.mrb[0].mxu0
      %v3630 = vadd.f32 1e-05, %v3629
      %v3631 = vpop.f32.mrb[0].mxu0
      %3632 = vdwg.mxu0
      %v3633 = vrsqrt.pop %v3475
      %v3634 = vrsqrt.pop %v3480
      %v3635 = vrsqrt.pop %v3485
      %v3636 = vrsqrt.pop %v3490
      %v3637 = vrsqrt.pop %v3495
      %v3638 = vrsqrt.pop %v3500
      %v3639 = vrsqrt.pop %v3505
      %v3640 = vrsqrt.pop %v3510
      %v3641 = vrsqrt.pop %v3515
      %v3642 = vrsqrt.pop %v3520
      %v3643 = vrsqrt.pop %v3525
      %v3644 = vrsqrt.pop %v3530
      %v3645 = vrsqrt.pop %v3535
      %v3646 = vrsqrt.pop %v3540
      %v3647 = vrsqrt.pop %v3545
      %v3648 = vrsqrt.pop %v3550
      %v3649 = vrsqrt.pop %v3555
      %v3650 = vrsqrt.pop %v3560
      %v3651 = vrsqrt.pop %v3565
      %v3652 = vrsqrt.pop %v3570
      %v3653 = vrsqrt.pop %v3575
      %v3654 = vrsqrt.pop %v3580
      %v3655 = vrsqrt.pop %v3585
      %v3656 = vrsqrt.pop %v3590
      %v3657 = vrsqrt.pop %v3595
      %v3658 = vrsqrt.pop %v3600
      %v3659 = vrsqrt.pop %v3605
      %v3660 = vrsqrt.pop %v3610
      %v3661 = vrsqrt.pop %v3615
      %v3662 = vrsqrt.pop %v3620
      %v3663 = vrsqrt.pop %v3625
      %v3664 = vrsqrt.pop %v3630
      %v3665 = vmul.f32 %v3344, %v3633
      %v3666 = vmul.f32 %v3345, %v3634
      %v3667 = vmul.f32 %v3346, %v3635
      %v3668 = vmul.f32 %v3347, %v3636
      %v3669 = vmul.f32 %v3348, %v3637
      %v3670 = vmul.f32 %v3349, %v3638
      %v3671 = vmul.f32 %v3350, %v3639
      %v3672 = vmul.f32 %v3351, %v3640
      %v3673 = vmul.f32 %v3352, %v3641
      %v3674 = vmul.f32 %v3353, %v3642
      %v3675 = vmul.f32 %v3354, %v3643
      %v3676 = vmul.f32 %v3355, %v3644
      %v3677 = vmul.f32 %v3356, %v3645
      %v3678 = vmul.f32 %v3357, %v3646
      %v3679 = vmul.f32 %v3358, %v3647
      %v3680 = vmul.f32 %v3359, %v3648
      %v3681 = vmul.f32 %v3360, %v3649
      %v3682 = vmul.f32 %v3361, %v3650
      %v3683 = vmul.f32 %v3362, %v3651
      %v3684 = vmul.f32 %v3363, %v3652
      %v3685 = vmul.f32 %v3364, %v3653
      %v3686 = vmul.f32 %v3365, %v3654
      %v3687 = vmul.f32 %v3366, %v3655
      %v3688 = vmul.f32 %v3367, %v3656
      %v3689 = vmul.f32 %v3368, %v3657
      %v3690 = vmul.f32 %v3369, %v3658
      %v3691 = vmul.f32 %v3370, %v3659
      %v3692 = vmul.f32 %v3371, %v3660
      %v3693 = vmul.f32 %v3372, %v3661
      %v3694 = vmul.f32 %v3373, %v3662
      %v3695 = vmul.f32 %v3374, %v3663
      %v3696 = vmul.f32 %v3375, %v3664
      %v3698 = vlaneseq
      %v3699 = vshrl.u32 %v3698, 7
      %v3700 = vsub.s32 0, %v3699
      %v3701 = vrot.slane %v300, %v3700
      %v3703 = vmul.f32 %v3665, %v3701
      %v3704 = vmul.f32 %v3666, %v3701
      %v3705 = vmul.f32 %v3667, %v3701
      %v3706 = vmul.f32 %v3668, %v3701
      %v3707 = vmul.f32 %v3669, %v3701
      %v3708 = vmul.f32 %v3670, %v3701
      %v3709 = vmul.f32 %v3671, %v3701
      %v3710 = vmul.f32 %v3672, %v3701
      %v3711 = vmul.f32 %v3673, %v3701
      %v3712 = vmul.f32 %v3674, %v3701
      %v3713 = vmul.f32 %v3675, %v3701
      %v3714 = vmul.f32 %v3676, %v3701
      %v3715 = vmul.f32 %v3677, %v3701
      %v3716 = vmul.f32 %v3678, %v3701
      %v3717 = vmul.f32 %v3679, %v3701
      %v3718 = vmul.f32 %v3680, %v3701
      %v3719 = vmul.f32 %v3681, %v3701
      %v3720 = vmul.f32 %v3682, %v3701
      %v3721 = vmul.f32 %v3683, %v3701
      %v3722 = vmul.f32 %v3684, %v3701
      %v3723 = vmul.f32 %v3685, %v3701
      %v3724 = vmul.f32 %v3686, %v3701
      %v3725 = vmul.f32 %v3687, %v3701
      %v3726 = vmul.f32 %v3688, %v3701
      %v3727 = vmul.f32 %v3689, %v3701
      %v3728 = vmul.f32 %v3690, %v3701
      %v3729 = vmul.f32 %v3691, %v3701
      %v3730 = vmul.f32 %v3692, %v3701
      %v3731 = vmul.f32 %v3693, %v3701
      %v3732 = vmul.f32 %v3694, %v3701
      %v3733 = vmul.f32 %v3695, %v3701
      %v3734 = vmul.f32 %v3696, %v3701
      %v3736 = vlaneseq
      %v3737 = vshrl.u32 %v3736, 7
      %v3738 = vsub.s32 0, %v3737
      %v3739 = vrot.slane %v301, %v3738
      %v3741 = vadd.f32 %v3703, %v3739
      %v3742 = vadd.f32 %v3704, %v3739
      %v3743 = vadd.f32 %v3705, %v3739
      %v3744 = vadd.f32 %v3706, %v3739
      %v3745 = vadd.f32 %v3707, %v3739
      %v3746 = vadd.f32 %v3708, %v3739
      %v3747 = vadd.f32 %v3709, %v3739
      %v3748 = vadd.f32 %v3710, %v3739
      %v3749 = vadd.f32 %v3711, %v3739
      %v3750 = vadd.f32 %v3712, %v3739
      %v3751 = vadd.f32 %v3713, %v3739
      %v3752 = vadd.f32 %v3714, %v3739
      %v3753 = vadd.f32 %v3715, %v3739
      %v3754 = vadd.f32 %v3716, %v3739
      %v3755 = vadd.f32 %v3717, %v3739
      %v3756 = vadd.f32 %v3718, %v3739
      %v3757 = vadd.f32 %v3719, %v3739
      %v3758 = vadd.f32 %v3720, %v3739
      %v3759 = vadd.f32 %v3721, %v3739
      %v3760 = vadd.f32 %v3722, %v3739
      %v3761 = vadd.f32 %v3723, %v3739
      %v3762 = vadd.f32 %v3724, %v3739
      %v3763 = vadd.f32 %v3725, %v3739
      %v3764 = vadd.f32 %v3726, %v3739
      %v3765 = vadd.f32 %v3727, %v3739
      %v3766 = vadd.f32 %v3728, %v3739
      %v3767 = vadd.f32 %v3729, %v3739
      %v3768 = vadd.f32 %v3730, %v3739
      %v3769 = vadd.f32 %v3731, %v3739
      %v3770 = vadd.f32 %v3732, %v3739
      %v3771 = vadd.f32 %v3733, %v3739
      %v3772 = vadd.f32 %v3734, %v3739
      %v3773 = vpack.c.bf16 %v3742, %v3741
      %v3774 = vpack.c.bf16 %v3744, %v3743
      %v3775 = vpack.c.bf16 %v3746, %v3745
      %v3776 = vpack.c.bf16 %v3748, %v3747
      %v3777 = vpack.c.bf16 %v3750, %v3749
      %v3778 = vpack.c.bf16 %v3752, %v3751
      %v3779 = vpack.c.bf16 %v3754, %v3753
      %v3780 = vpack.c.bf16 %v3756, %v3755
      %v3781 = vpack.c.bf16 %v3758, %v3757
      %v3782 = vpack.c.bf16 %v3760, %v3759
      %v3783 = vpack.c.bf16 %v3762, %v3761
      %v3784 = vpack.c.bf16 %v3764, %v3763
      %v3785 = vpack.c.bf16 %v3766, %v3765
      %v3786 = vpack.c.bf16 %v3768, %v3767
      %v3787 = vpack.c.bf16 %v3770, %v3769
      %v3788 = vpack.c.bf16 %v3772, %v3771
      %v3805 = vunpack.c.l.b16 %v3773
      %v3806 = vunpack.c.h.b16 %v3773
      %v3807 = vunpack.c.l.b16 %v3774
      %v3808 = vunpack.c.h.b16 %v3774
      %v3809 = vunpack.c.l.b16 %v3775
      %v3810 = vunpack.c.h.b16 %v3775
      %v3811 = vunpack.c.l.b16 %v3776
      %v3812 = vunpack.c.h.b16 %v3776
      %v3813 = vunpack.c.l.b16 %v3777
      %v3814 = vunpack.c.h.b16 %v3777
      %v3815 = vunpack.c.l.b16 %v3778
      %v3816 = vunpack.c.h.b16 %v3778
      %v3817 = vunpack.c.l.b16 %v3779
      %v3818 = vunpack.c.h.b16 %v3779
      %v3819 = vunpack.c.l.b16 %v3780
      %v3820 = vunpack.c.h.b16 %v3780
      %v3821 = vunpack.c.l.b16 %v3781
      %v3822 = vunpack.c.h.b16 %v3781
      %v3823 = vunpack.c.l.b16 %v3782
      %v3824 = vunpack.c.h.b16 %v3782
      %v3825 = vunpack.c.l.b16 %v3783
      %v3826 = vunpack.c.h.b16 %v3783
      %v3827 = vunpack.c.l.b16 %v3784
      %v3828 = vunpack.c.h.b16 %v3784
      %v3829 = vunpack.c.l.b16 %v3785
      %v3830 = vunpack.c.h.b16 %v3785
      %v3831 = vunpack.c.l.b16 %v3786
      %v3832 = vunpack.c.h.b16 %v3786
      %v3833 = vunpack.c.l.b16 %v3787
      %v3834 = vunpack.c.h.b16 %v3787
      %v3835 = vunpack.c.l.b16 %v3788
      %v3836 = vunpack.c.h.b16 %v3788
      %v3837 = vpack.c.b16 %v3805, %v3805
      %v3838 = vpack.c.b16 %v3806, %v3806
      %v3839 = vpack.c.b16 %v3807, %v3807
      %v3840 = vpack.c.b16 %v3808, %v3808
      %v3841 = vpack.c.b16 %v3809, %v3809
      %v3842 = vpack.c.b16 %v3810, %v3810
      %v3843 = vpack.c.b16 %v3811, %v3811
      %v3844 = vpack.c.b16 %v3812, %v3812
      %v3845 = vpack.c.b16 %v3813, %v3813
      %v3846 = vpack.c.b16 %v3814, %v3814
      %v3847 = vpack.c.b16 %v3815, %v3815
      %v3848 = vpack.c.b16 %v3816, %v3816
      %v3849 = vpack.c.b16 %v3817, %v3817
      %v3850 = vpack.c.b16 %v3818, %v3818
      %v3851 = vpack.c.b16 %v3819, %v3819
      %v3852 = vpack.c.b16 %v3820, %v3820
      %v3853 = vpack.c.b16 %v3821, %v3821
      %v3854 = vpack.c.b16 %v3822, %v3822
      %v3855 = vpack.c.b16 %v3823, %v3823
      %v3856 = vpack.c.b16 %v3824, %v3824
      %v3857 = vpack.c.b16 %v3825, %v3825
      %v3858 = vpack.c.b16 %v3826, %v3826
      %v3859 = vpack.c.b16 %v3827, %v3827
      %v3860 = vpack.c.b16 %v3828, %v3828
      %v3861 = vpack.c.b16 %v3829, %v3829
      %v3862 = vpack.c.b16 %v3830, %v3830
      %v3863 = vpack.c.b16 %v3831, %v3831
      %v3864 = vpack.c.b16 %v3832, %v3832
      %v3865 = vpack.c.b16 %v3833, %v3833
      %v3866 = vpack.c.b16 %v3834, %v3834
      %v3867 = vpack.c.b16 %v3835, %v3835
      %v3868 = vpack.c.b16 %v3836, %v3836
      %3901 = vst [vmem:[%s231] sm:$0xf] %v3837
      %3902 = vst [vmem:[%s231 + $0x4] sm:$0xf] %v3838
      %3903 = vst [vmem:[%s231 + $0x8] sm:$0xf] %v3839
      %3904 = vst [vmem:[%s231 + $0xc] sm:$0xf] %v3840
      %3905 = vst [vmem:[%s231 + $0x10] sm:$0xf] %v3841
      %3906 = vst [vmem:[%s231 + $0x14] sm:$0xf] %v3842
      %3907 = vst [vmem:[%s231 + $0x18] sm:$0xf] %v3843
      %3908 = vst [vmem:[%s231 + $0x1c] sm:$0xf] %v3844
      %3909 = vst [vmem:[%s231 + $0x20] sm:$0xf] %v3845
      %3910 = vst [vmem:[%s231 + $0x24] sm:$0xf] %v3846
      %3911 = vst [vmem:[%s231 + $0x28] sm:$0xf] %v3847
      %3912 = vst [vmem:[%s231 + $0x2c] sm:$0xf] %v3848
      %3913 = vst [vmem:[%s231 + $0x30] sm:$0xf] %v3849
      %3914 = vst [vmem:[%s231 + $0x34] sm:$0xf] %v3850
      %3915 = vst [vmem:[%s231 + $0x38] sm:$0xf] %v3851
      %3916 = vst [vmem:[%s231 + $0x3c] sm:$0xf] %v3852
      %3917 = vst [vmem:[%s231 + $0x40] sm:$0xf] %v3853
      %3918 = vst [vmem:[%s231 + $0x44] sm:$0xf] %v3854
      %3919 = vst [vmem:[%s231 + $0x48] sm:$0xf] %v3855
      %3920 = vst [vmem:[%s231 + $0x4c] sm:$0xf] %v3856
      %3921 = vst [vmem:[%s231 + $0x50] sm:$0xf] %v3857
      %3922 = vst [vmem:[%s231 + $0x54] sm:$0xf] %v3858
      %3923 = vst [vmem:[%s231 + $0x58] sm:$0xf] %v3859
      %3924 = vst [vmem:[%s231 + $0x5c] sm:$0xf] %v3860
      %3925 = vst [vmem:[%s231 + $0x60] sm:$0xf] %v3861
      %3926 = vst [vmem:[%s231 + $0x64] sm:$0xf] %v3862
      %3927 = vst [vmem:[%s231 + $0x68] sm:$0xf] %v3863
      %3928 = vst [vmem:[%s231 + $0x6c] sm:$0xf] %v3864
      %3929 = vst [vmem:[%s231 + $0x70] sm:$0xf] %v3865
      %3930 = vst [vmem:[%s231 + $0x74] sm:$0xf] %v3866
      %3931 = vst [vmem:[%s231 + $0x78] sm:$0xf] %v3867
      %3932 = vst [vmem:[%s231 + $0x7c] sm:$0xf] %v3868
      %s3933 = smul.u32 4, %s16
      %p3934 = scmp.lt.s32.totalorder %s3933, 15
      %s3935 = scalar_select %p3934, %s3933, 15
      %s3936 = smul.addr %s3935, 8
      %s3937 = smul.addr %s3936, 4
      %s3938 = scalar_lea.vmem %s5, %s3937
      // Predicated region
      $region41: #{convnet_forward.1} parent=39 // pred_check
        %p3939 = pneg %p144
      $region42: #{convnet_forward.1} parent=39 // pred_check_branch
        %3941 = sbr.rel (%p3939) target = $region44
      $region43: #{convnet_forward.1} parent=39 // pred_region
        %s3942 = smul.u32 4, %s16
      $region44: #{convnet_forward.1} parent=39 // pred_fallthru
        _
    $region40: #{convnet_forward.1} parent=5 // pred_fallthru
      _
    %p3943 = scmp.le.s32.totalorder 2, %s11
    // Predicated region
    $region45: #{convnet_forward.1} parent=5 // pred_check
      %p3944 = pneg %p3943
    $region46: #{convnet_forward.1} parent=5 // pred_check_branch
      %3946 = sbr.rel (%p3944) target = $region48
    $region47: #{convnet_forward.1} parent=5 // pred_region
      %s3947 = ssub.s32 %s11, 2
      // Predicated region
      $region49: #{convnet_forward.1} parent=47 // pred_check
        %p3948 = pneg %p150
      $region50: #{convnet_forward.1} parent=47 // pred_check_branch
        %3950 = sbr.rel (%p3948) target = $region52
      $region51: #{convnet_forward.1} parent=47 // pred_region
        %s3951 = smul.u32 4, %s17
        %p3952 = scmp.lt.s32.totalorder %s3951, 15
        %s3953 = scalar_select %p3952, %s3951, 15
        %s3954 = smul.addr %s3953, 8
        %s3955 = smul.addr %s3954, 4
        %s3956 = scalar_lea.vmem %s5, %s3955
      $region52: #{convnet_forward.1} parent=47 // pred_fallthru
        _
    $region48: #{convnet_forward.1} parent=5 // pred_fallthru
      _
  $region6: #{convnet_forward.1} parent=0 // loop_footer
    %s15 = sadd.s32 1, %s11
  $region7: #{convnet_forward.1} parent=0 // loop_footer_branch
    %10 = sbr.rel target = $region3
  $region8: #{convnet_forward.1} parent=0 // loop_exit
    _

</llo_original>
